<compile_context>
chip_gen: v7x
topology: tpu7x:2x2x1
jax: 0.10.0
libtpu: 0.0.40
codegen_flags: <defaults>
</compile_context>

<pallas_src>
import functools

import jax
import jax.numpy as jnp
from jax.experimental import pallas as pl
from jax.experimental.pallas import tpu as pltpu

# ---- small synthetic model config (stands in for roberta-large) ----
VOCAB    = 64
MAX_SEQ  = 16
D_MODEL  = 32
N_HEADS  = 4
D_HEAD   = D_MODEL // N_HEADS
D_FFN    = 64
N_LAYERS = 2
LN_EPS   = 1e-5
MASK_SUM = True            # mirrors the `mask_sum` global flag in the PyTorch module

# ---- lane-dense padded dims (every slab is a multiple of the 128-lane vreg) ----
DP   = 128                 # padded model dim   (32 -> 128)
DHP  = 32                  # padded head dim    (8  -> 32), N_HEADS * DHP == 128
HDP  = N_HEADS * DHP       # 128
FP   = 128                 # padded FFN dim     (64 -> 128)
SCALE = 1.0 / float(D_HEAD) ** 0.5


# ------------------------- fused encoder kernel (one grid step = one batch row) -------------------------

def encoder_kernel(h0_ref, mask_ref, eg_ref, eb_ref,
                   wqkv_ref, bqkv_ref, wo_ref, bo_ref,
                   ln1g_ref, ln1b_ref, w1_ref, b1_ref, w2_ref, b2_ref,
                   ln2g_ref, ln2b_ref, out_ref):
    f32, bf16 = jnp.float32, jnp.bfloat16

    # only the first D_MODEL of the DP padded lanes are real (padded lanes are kept at 0)
    lane_valid = (jax.lax.broadcasted_iota(jnp.int32, (1, DP), 1) < D_MODEL).astype(f32)

    def layernorm(x, g, b):
        xm = x * lane_valid
        mu = jnp.sum(xm, axis=-1, keepdims=True) * (1.0 / D_MODEL)
        diff = (x - mu) * lane_valid
        var = jnp.sum(diff * diff, axis=-1, keepdims=True) * (1.0 / D_MODEL)
        # padded lanes: gamma = beta = 0  ->  output stays 0 there
        return diff * jax.lax.rsqrt(var + LN_EPS) * g + b

    key_mask = mask_ref[0]                                      # (1, S) key-side mask
    h = layernorm(h0_ref[...], eg_ref[...], eb_ref[...])        # (S, DP)

    for l in range(N_LAYERS):
        # ---- fused QKV projection: one (S, DP) x (DP, 3*HDP) bf16 MXU matmul ----
        qkv = jnp.dot(h.astype(bf16), wqkv_ref[l],
                      preferred_element_type=f32) + bqkv_ref[l]  # (S, 3*HDP) f32

        # ---- multi-head self-attention, all heads resident in vregs ----
        heads = []
        for hh in range(N_HEADS):
            q = qkv[:, hh * DHP:(hh + 1) * DHP]                          # (S, DHP)
            k = qkv[:, HDP + hh * DHP:HDP + (hh + 1) * DHP]
            v = qkv[:, 2 * HDP + hh * DHP:2 * HDP + (hh + 1) * DHP]
            s = jnp.einsum("sd,td->st", q.astype(bf16), k.astype(bf16),
                           preferred_element_type=f32) * SCALE           # (S, S) f32
            s = jnp.where(key_mask > 0.0, s, -1e30)
            p = jnp.exp(s - jnp.max(s, axis=-1, keepdims=True))
            p = p * pl.reciprocal(jnp.sum(p, axis=-1, keepdims=True), approx=True)
            heads.append(jnp.dot(p.astype(bf16), v.astype(bf16),
                                 preferred_element_type=f32))            # (S, DHP)
        attn = jnp.concatenate(heads, axis=-1)                           # (S, HDP=128)

        # ---- output projection + residual + post-LN ----
        attn = jnp.dot(attn.astype(bf16), wo_ref[l],
                       preferred_element_type=f32) + bo_ref[l]
        h1 = layernorm(h + attn, ln1g_ref[l], ln1b_ref[l])

        # ---- FFN + residual + post-LN ----
        # TODO(synk): RoBERTa uses exact-erf GELU; tanh approximation kept (Mosaic-safe, tiny delta).
        ff = jnp.dot(h1.astype(bf16), w1_ref[l], preferred_element_type=f32) + b1_ref[l]
        ff = jax.nn.gelu(ff, approximate=True)
        ff = jnp.dot(ff.astype(bf16), w2_ref[l], preferred_element_type=f32) + b2_ref[l]
        h = layernorm(h1 + ff, ln2g_ref[l], ln2b_ref[l])

    # ---- masked sum pool over the sequence (as a (1,S)x(S,DP) matmul) + L2 normalize ----
    pool_w = key_mask if MASK_SUM else jnp.ones_like(key_mask)           # (1, S)
    y = jnp.dot(pool_w, h, preferred_element_type=f32)                   # (1, DP)
    nrm = jnp.sqrt(jnp.sum(y * y, axis=-1, keepdims=True))
    y = y / jnp.maximum(nrm, 1e-12)
    out_ref[...] = y.reshape(1, 1, DP).astype(out_ref.dtype)


# ------------------------- weight padding / stacking (wrapper-side layout plumbing) -------------------------

def _pad2(w, rows, cols):
    return jnp.pad(w, ((0, rows - w.shape[0]), (0, cols - w.shape[1])))


def _pad1(b, n):
    return jnp.pad(b, (0, n - b.shape[0]))


def _pad_head_cols(w, b):
    # projection producing per-head features: columns ordered (head, d_head)
    w3 = w.reshape(D_MODEL, N_HEADS, D_HEAD)
    w3 = jnp.pad(w3, ((0, DP - D_MODEL), (0, 0), (0, DHP - D_HEAD)))
    b2 = jnp.pad(b.reshape(N_HEADS, D_HEAD), ((0, 0), (0, DHP - D_HEAD)))
    return w3.reshape(DP, HDP), b2.reshape(HDP)


def _pad_head_rows(w, b):
    # output projection consuming per-head features: rows ordered (head, d_head)
    w3 = w.reshape(N_HEADS, D_HEAD, D_MODEL)
    w3 = jnp.pad(w3, ((0, 0), (0, DHP - D_HEAD), (0, DP - D_MODEL)))
    return w3.reshape(HDP, DP), _pad1(b, DP)


def prepare_fused_params(params):
    bf16 = jnp.bfloat16
    wqkv, bqkv, wo, bo = [], [], [], []
    ln1g, ln1b, w1, b1, w2, b2, ln2g, ln2b = [], [], [], [], [], [], [], []
    for lp in params["layers"]:
        wq, bq = _pad_head_cols(lp["wq"], lp["bq"])
        wk, bk = _pad_head_cols(lp["wk"], lp["bk"])
        wv, bv = _pad_head_cols(lp["wv"], lp["bv"])
        wqkv.append(jnp.concatenate([wq, wk, wv], axis=1))                  # (DP, 3*HDP)
        bqkv.append(jnp.concatenate([bq, bk, bv]).reshape(1, 3 * HDP))
        wop, bop = _pad_head_rows(lp["wo"], lp["bo"])
        wo.append(wop)
        bo.append(bop.reshape(1, DP))
        ln1g.append(_pad1(lp["ln1_g"], DP).reshape(1, DP))
        ln1b.append(_pad1(lp["ln1_b"], DP).reshape(1, DP))
        w1.append(_pad2(lp["w1"], DP, FP))
        b1.append(_pad1(lp["b1"], FP).reshape(1, FP))
        w2.append(_pad2(lp["w2"], FP, DP))
        b2.append(_pad1(lp["b2"], DP).reshape(1, DP))
        ln2g.append(_pad1(lp["ln2_g"], DP).reshape(1, DP))
        ln2b.append(_pad1(lp["ln2_b"], DP).reshape(1, DP))
    return {
        "tok_emb": _pad2(params["tok_emb"], VOCAB, DP),
        "pos_emb": _pad2(params["pos_emb"], MAX_SEQ, DP),
        "emb_ln_g": _pad1(params["emb_ln_g"], DP).reshape(1, DP),
        "emb_ln_b": _pad1(params["emb_ln_b"], DP).reshape(1, DP),
        "wqkv": jnp.stack(wqkv).astype(bf16), "bqkv": jnp.stack(bqkv),
        "wo": jnp.stack(wo).astype(bf16),     "bo": jnp.stack(bo),
        "ln1_g": jnp.stack(ln1g), "ln1_b": jnp.stack(ln1b),
        "w1": jnp.stack(w1).astype(bf16), "b1": jnp.stack(b1),
        "w2": jnp.stack(w2).astype(bf16), "b2": jnp.stack(b2),
        "ln2_g": jnp.stack(ln2g), "ln2_b": jnp.stack(ln2b),
    }


# ------------------------- parameter init (synthetic RoBERTa-style weights) -------------------------

def _normal(key, shape):
    return 0.02 * jax.random.normal(key, shape, jnp.float32)


def init_params(key):
    keys = jax.random.split(key, 2 + N_LAYERS)
    params = {
        "tok_emb": _normal(keys[0], (VOCAB, D_MODEL)),
        "pos_emb": _normal(keys[1], (MAX_SEQ, D_MODEL)),
        "emb_ln_g": jnp.ones((D_MODEL,), jnp.float32),
        "emb_ln_b": jnp.zeros((D_MODEL,), jnp.float32),
        "layers": [],
    }
    for l in range(N_LAYERS):
        lk = jax.random.split(keys[2 + l], 6)
        params["layers"].append({
            "wq": _normal(lk[0], (D_MODEL, D_MODEL)), "bq": jnp.zeros((D_MODEL,), jnp.float32),
            "wk": _normal(lk[1], (D_MODEL, D_MODEL)), "bk": jnp.zeros((D_MODEL,), jnp.float32),
            "wv": _normal(lk[2], (D_MODEL, D_MODEL)), "bv": jnp.zeros((D_MODEL,), jnp.float32),
            "wo": _normal(lk[3], (D_MODEL, D_MODEL)), "bo": jnp.zeros((D_MODEL,), jnp.float32),
            "ln1_g": jnp.ones((D_MODEL,), jnp.float32), "ln1_b": jnp.zeros((D_MODEL,), jnp.float32),
            "w1": _normal(lk[4], (D_MODEL, D_FFN)), "b1": jnp.zeros((D_FFN,), jnp.float32),
            "w2": _normal(lk[5], (D_FFN, D_MODEL)), "b2": jnp.zeros((D_MODEL,), jnp.float32),
            "ln2_g": jnp.ones((D_MODEL,), jnp.float32), "ln2_b": jnp.zeros((D_MODEL,), jnp.float32),
        })
    return params


# ------------------------- forward (glue + single fused kernel) -------------------------

@jax.jit
def text_encoder_forward(params, token_ids, mask):
    B, S = token_ids.shape
    pp = prepare_fused_params(params)

    # embedding gather stays as XLA glue; everything downstream is ONE fused Pallas kernel
    h0 = pp["tok_emb"][token_ids] + pp["pos_emb"][:S][None, :, :]        # (B, S, DP), pads are 0
    h0 = h0.reshape(B * S, DP)
    mask3 = mask.astype(jnp.float32).reshape(B, 1, S)

    full3 = lambda b: (0, 0, 0)
    y = pl.pallas_call(
        encoder_kernel,
        out_shape=jax.ShapeDtypeStruct((B, 1, DP), jnp.float32),
        grid=(B,),
        in_specs=[
            pl.BlockSpec((S, DP), lambda b: (b, 0)),                     # h0 (per-batch rows)
            pl.BlockSpec((1, 1, S), lambda b: (b, 0, 0)),                # mask
            pl.BlockSpec((1, DP), lambda b: (0, 0)),                     # emb_ln_g
            pl.BlockSpec((1, DP), lambda b: (0, 0)),                     # emb_ln_b
            pl.BlockSpec((N_LAYERS, DP, 3 * HDP), full3),                # wqkv (bf16)
            pl.BlockSpec((N_LAYERS, 1, 3 * HDP), full3),                 # bqkv
            pl.BlockSpec((N_LAYERS, HDP, DP), full3),                    # wo (bf16)
            pl.BlockSpec((N_LAYERS, 1, DP), full3),                      # bo
            pl.BlockSpec((N_LAYERS, 1, DP), full3),                      # ln1_g
            pl.BlockSpec((N_LAYERS, 1, DP), full3),                      # ln1_b
            pl.BlockSpec((N_LAYERS, DP, FP), full3),                     # w1 (bf16)
            pl.BlockSpec((N_LAYERS, 1, FP), full3),                      # b1
            pl.BlockSpec((N_LAYERS, FP, DP), full3),                     # w2 (bf16)
            pl.BlockSpec((N_LAYERS, 1, DP), full3),                      # b2
            pl.BlockSpec((N_LAYERS, 1, DP), full3),                      # ln2_g
            pl.BlockSpec((N_LAYERS, 1, DP), full3),                      # ln2_b
        ],
        out_specs=pl.BlockSpec((1, 1, DP), lambda b: (b, 0, 0)),
        compiler_params=pltpu.CompilerParams(dimension_semantics=("parallel",)),
    )(h0, mask3, pp["emb_ln_g"], pp["emb_ln_b"],
      pp["wqkv"], pp["bqkv"], pp["wo"], pp["bo"],
      pp["ln1_g"], pp["ln1_b"], pp["w1"], pp["b1"], pp["w2"], pp["b2"],
      pp["ln2_g"], pp["ln2_b"])

    return y.reshape(B, DP)[:, :D_MODEL]                                 # drop padded lanes


# ------------------------- main -------------------------

if __name__ == "__main__":
    key = jax.random.PRNGKey(0)
    pkey, tkey = jax.random.split(key)
    params = init_params(pkey)

    B, S = 2, 8
    token_ids = jax.random.randint(tkey, (B, S), 0, VOCAB, dtype=jnp.int32)
    lengths = jnp.array([8, 5], dtype=jnp.int32)
    mask = (jnp.arange(S)[None, :] < lengths[:, None]).astype(jnp.float32)   # (B, S)

    y = text_encoder_forward(params, token_ids, mask)
    y = jax.block_until_ready(y)

    assert y.shape == (B, D_MODEL), y.shape
    assert bool(jnp.all(jnp.isfinite(y)))
    # L2-normalized rows should have unit norm
    assert bool(jnp.allclose(jnp.sqrt(jnp.sum(y * y, axis=-1)), 1.0, atol=1e-4))
    print("KERNEL_OK")
</pallas_src>

<mosaic_0001>
module attributes {stable_mosaic.version = 11 : i64} {
  func.func @encoder_kernel(%arg0: i32, %arg1: memref<8x128xf32, #tpu.memory_space<vmem>>, %arg2: memref<1x1x8xf32, #tpu.memory_space<vmem>>, %arg3: memref<1x128xf32, #tpu.memory_space<vmem>>, %arg4: memref<1x128xf32, #tpu.memory_space<vmem>>, %arg5: memref<2x128x384xbf16, #tpu.memory_space<vmem>>, %arg6: memref<2x1x384xf32, #tpu.memory_space<vmem>>, %arg7: memref<2x128x128xbf16, #tpu.memory_space<vmem>>, %arg8: memref<2x1x128xf32, #tpu.memory_space<vmem>>, %arg9: memref<2x1x128xf32, #tpu.memory_space<vmem>>, %arg10: memref<2x1x128xf32, #tpu.memory_space<vmem>>, %arg11: memref<2x128x128xbf16, #tpu.memory_space<vmem>>, %arg12: memref<2x1x128xf32, #tpu.memory_space<vmem>>, %arg13: memref<2x128x128xbf16, #tpu.memory_space<vmem>>, %arg14: memref<2x1x128xf32, #tpu.memory_space<vmem>>, %arg15: memref<2x1x128xf32, #tpu.memory_space<vmem>>, %arg16: memref<2x1x128xf32, #tpu.memory_space<vmem>>, %arg17: memref<1x1x128xf32, #tpu.memory_space<vmem>>) attributes {dimension_semantics = [#tpu.dimension_semantics<parallel>], iteration_bounds = array<i64: 2>, scalar_prefetch = 0 : i64, scratch_operands = 0 : i64, tpu.core_type = #tpu.core_type<tc>, window_params = [{transform_indices = @transform_0, window_bounds = array<i64: 8, 128>}, {transform_indices = @transform_1, window_bounds = array<i64: 1, 1, 8>}, {pipeline_mode = #tpu.pipeline_mode<synchronous>, transform_indices = @transform_2, window_bounds = array<i64: 1, 128>}, {pipeline_mode = #tpu.pipeline_mode<synchronous>, transform_indices = @transform_3, window_bounds = array<i64: 1, 128>}, {pipeline_mode = #tpu.pipeline_mode<synchronous>, transform_indices = @transform_4, window_bounds = array<i64: 2, 128, 384>}, {pipeline_mode = #tpu.pipeline_mode<synchronous>, transform_indices = @transform_5, window_bounds = array<i64: 2, 1, 384>}, {pipeline_mode = #tpu.pipeline_mode<synchronous>, transform_indices = @transform_6, window_bounds = array<i64: 2, 128, 128>}, {pipeline_mode = #tpu.pipeline_mode<synchronous>, transform_indices = @transform_7, window_bounds = array<i64: 2, 1, 128>}, {pipeline_mode = #tpu.pipeline_mode<synchronous>, transform_indices = @transform_8, window_bounds = array<i64: 2, 1, 128>}, {pipeline_mode = #tpu.pipeline_mode<synchronous>, transform_indices = @transform_9, window_bounds = array<i64: 2, 1, 128>}, {pipeline_mode = #tpu.pipeline_mode<synchronous>, transform_indices = @transform_10, window_bounds = array<i64: 2, 128, 128>}, {pipeline_mode = #tpu.pipeline_mode<synchronous>, transform_indices = @transform_11, window_bounds = array<i64: 2, 1, 128>}, {pipeline_mode = #tpu.pipeline_mode<synchronous>, transform_indices = @transform_12, window_bounds = array<i64: 2, 128, 128>}, {pipeline_mode = #tpu.pipeline_mode<synchronous>, transform_indices = @transform_13, window_bounds = array<i64: 2, 1, 128>}, {pipeline_mode = #tpu.pipeline_mode<synchronous>, transform_indices = @transform_14, window_bounds = array<i64: 2, 1, 128>}, {pipeline_mode = #tpu.pipeline_mode<synchronous>, transform_indices = @transform_15, window_bounds = array<i64: 2, 1, 128>}, {transform_indices = @transform_16, window_bounds = array<i64: 1, 1, 128>}]} {
    %0 = tpu.iota {dimensions = array<i32: 1>} : vector<1x128xi32>
    %c32_i32 = arith.constant 32 : i32
    %1 = vector.broadcast %c32_i32 : i32 to vector<1x128xi32>
    %2 = arith.cmpi slt, %0, %1 : vector<1x128xi32>
    %3 = arith.extui %2 : vector<1x128xi1> to vector<1x128xi32>
    %4 = arith.sitofp %3 : vector<1x128xi32> to vector<1x128xf32>
    %c0 = arith.constant 0 : index
    %c0_0 = arith.constant 0 : index
    %c0_1 = arith.constant 0 : index
    %5 = vector.load %arg2[%c0, %c0_0, %c0_1] : memref<1x1x8xf32, #tpu.memory_space<vmem>>, vector<1x1x8xf32>
    %6 = vector.shape_cast %5 : vector<1x1x8xf32> to vector<1x8xf32>
    %c0_2 = arith.constant 0 : index
    %c0_3 = arith.constant 0 : index
    %7 = vector.load %arg1[%c0_2, %c0_3] : memref<8x128xf32, #tpu.memory_space<vmem>>, vector<8x128xf32>
    %c0_4 = arith.constant 0 : index
    %c0_5 = arith.constant 0 : index
    %8 = vector.load %arg3[%c0_4, %c0_5] : memref<1x128xf32, #tpu.memory_space<vmem>>, vector<1x128xf32>
    %c0_6 = arith.constant 0 : index
    %c0_7 = arith.constant 0 : index
    %9 = vector.load %arg4[%c0_6, %c0_7] : memref<1x128xf32, #tpu.memory_space<vmem>>, vector<1x128xf32>
    %10 = vector.broadcast %4 : vector<1x128xf32> to vector<8x128xf32>
    %11 = arith.mulf %7, %10 : vector<8x128xf32>
    %cst = arith.constant dense<0.000000e+00> : vector<8xf32>
    %12 = vector.multi_reduction <add>, %11, %cst [1] : vector<8x128xf32> to vector<8xf32>
    %13 = vector.shape_cast %12 : vector<8xf32> to vector<8x1xf32>
    %cst_8 = arith.constant 3.125000e-02 : f32
    %14 = vector.broadcast %cst_8 : f32 to vector<8x1xf32>
    %15 = arith.mulf %13, %14 : vector<8x1xf32>
    %16 = vector.broadcast %15 : vector<8x1xf32> to vector<8x128xf32>
    %17 = arith.subf %7, %16 : vector<8x128xf32>
    %18 = vector.broadcast %4 : vector<1x128xf32> to vector<8x128xf32>
    %19 = arith.mulf %17, %18 : vector<8x128xf32>
    %20 = arith.mulf %19, %19 : vector<8x128xf32>
    %cst_9 = arith.constant dense<0.000000e+00> : vector<8xf32>
    %21 = vector.multi_reduction <add>, %20, %cst_9 [1] : vector<8x128xf32> to vector<8xf32>
    %22 = vector.shape_cast %21 : vector<8xf32> to vector<8x1xf32>
    %cst_10 = arith.constant 3.125000e-02 : f32
    %23 = vector.broadcast %cst_10 : f32 to vector<8x1xf32>
    %24 = arith.mulf %22, %23 : vector<8x1xf32>
    %cst_11 = arith.constant 9.99999974E-6 : f32
    %25 = vector.broadcast %cst_11 : f32 to vector<8x1xf32>
    %26 = arith.addf %24, %25 : vector<8x1xf32>
    %27 = math.rsqrt %26 : vector<8x1xf32>
    %28 = vector.broadcast %27 : vector<8x1xf32> to vector<8x128xf32>
    %29 = arith.mulf %19, %28 : vector<8x128xf32>
    %30 = vector.broadcast %8 : vector<1x128xf32> to vector<8x128xf32>
    %31 = arith.mulf %29, %30 : vector<8x128xf32>
    %32 = vector.broadcast %9 : vector<1x128xf32> to vector<8x128xf32>
    %33 = arith.addf %31, %32 : vector<8x128xf32>
    %34 = arith.truncf %33 : vector<8x128xf32> to vector<8x128xbf16>
    %c0_12 = arith.constant 0 : index
    %c0_13 = arith.constant 0 : index
    %c0_14 = arith.constant 0 : index
    %35 = vector.load %arg5[%c0_12, %c0_13, %c0_14] : memref<2x128x384xbf16, #tpu.memory_space<vmem>>, vector<1x128x384xbf16>
    %36 = vector.shape_cast %35 : vector<1x128x384xbf16> to vector<128x384xbf16>
    %cst_15 = arith.constant dense<0.000000e+00> : vector<8x384xf32>
    %37 = tpu.matmul %34, %36, %cst_15 {dimension_numbers = #tpu.dot_dimension_numbers<[1], [0], [0], [1], [0, 0, 1, 1], [], []>} : vector<8x128xbf16>, vector<128x384xbf16>, vector<8x384xf32> -> vector<8x384xf32>
    %c0_16 = arith.constant 0 : index
    %c0_17 = arith.constant 0 : index
    %c0_18 = arith.constant 0 : index
    %38 = vector.load %arg6[%c0_16, %c0_17, %c0_18] : memref<2x1x384xf32, #tpu.memory_space<vmem>>, vector<1x1x384xf32>
    %39 = vector.shape_cast %38 : vector<1x1x384xf32> to vector<1x384xf32>
    %40 = vector.broadcast %39 : vector<1x384xf32> to vector<8x384xf32>
    %41 = arith.addf %37, %40 : vector<8x384xf32>
    %42 = vector.extract_strided_slice %41 {offsets = [0, 0], sizes = [8, 32], strides = [1, 1]} : vector<8x384xf32> to vector<8x32xf32>
    %43 = vector.extract_strided_slice %41 {offsets = [0, 128], sizes = [8, 32], strides = [1, 1]} : vector<8x384xf32> to vector<8x32xf32>
    %44 = vector.extract_strided_slice %41 {offsets = [0, 256], sizes = [8, 32], strides = [1, 1]} : vector<8x384xf32> to vector<8x32xf32>
    %45 = arith.truncf %42 : vector<8x32xf32> to vector<8x32xbf16>
    %46 = arith.truncf %43 : vector<8x32xf32> to vector<8x32xbf16>
    "tpu.trace_start"() <{level = 10 : i32, message = "sd,td->st"}> : () -> ()
    %cst_19 = arith.constant dense<0.000000e+00> : vector<8x8xf32>
    %47 = tpu.matmul %45, %46, %cst_19 {dimension_numbers = #tpu.dot_dimension_numbers<[1], [1], [0], [0], [0, 0, 1, 0], [], []>} : vector<8x32xbf16>, vector<8x32xbf16>, vector<8x8xf32> -> vector<8x8xf32>
    "tpu.trace_stop"() : () -> ()
    %cst_20 = arith.constant 0.353553385 : f32
    %48 = vector.broadcast %cst_20 : f32 to vector<8x8xf32>
    %49 = arith.mulf %47, %48 : vector<8x8xf32>
    %cst_21 = arith.constant 0.000000e+00 : f32
    %50 = vector.broadcast %cst_21 : f32 to vector<1x8xf32>
    %51 = arith.cmpf ogt, %6, %50 : vector<1x8xf32>
    %cst_22 = arith.constant -1.000000e+30 : f32
    %52 = vector.shape_cast %51 : vector<1x8xi1> to vector<1x8xi1>
    %53 = vector.broadcast %52 : vector<1x8xi1> to vector<8x8xi1>
    %54 = vector.broadcast %cst_22 : f32 to vector<8x8xf32>
    %55 = arith.select %53, %49, %54 : vector<8x8xi1>, vector<8x8xf32>
    %cst_23 = arith.constant dense<0xFF800000> : vector<8xf32>
    %56 = vector.multi_reduction <maximumf>, %55, %cst_23 [1] : vector<8x8xf32> to vector<8xf32>
    %57 = vector.shape_cast %56 : vector<8xf32> to vector<8x1xf32>
    %58 = vector.broadcast %57 : vector<8x1xf32> to vector<8x8xf32>
    %59 = arith.subf %55, %58 : vector<8x8xf32>
    %60 = math.exp %59 : vector<8x8xf32>
    %cst_24 = arith.constant dense<0.000000e+00> : vector<8xf32>
    %61 = vector.multi_reduction <add>, %60, %cst_24 [1] : vector<8x8xf32> to vector<8xf32>
    %62 = vector.shape_cast %61 : vector<8xf32> to vector<8x1xf32>
    %63 = tpu.reciprocal %62 {approx = true} : vector<8x1xf32> -> vector<8x1xf32>
    %64 = vector.broadcast %63 : vector<8x1xf32> to vector<8x8xf32>
    %65 = arith.mulf %60, %64 : vector<8x8xf32>
    %66 = arith.truncf %65 : vector<8x8xf32> to vector<8x8xbf16>
    %67 = arith.truncf %44 : vector<8x32xf32> to vector<8x32xbf16>
    %cst_25 = arith.constant dense<0.000000e+00> : vector<8x32xf32>
    %68 = tpu.matmul %66, %67, %cst_25 {dimension_numbers = #tpu.dot_dimension_numbers<[1], [0], [0], [1], [0, 0, 1, 1], [], []>} : vector<8x8xbf16>, vector<8x32xbf16>, vector<8x32xf32> -> vector<8x32xf32>
    %69 = vector.extract_strided_slice %41 {offsets = [0, 32], sizes = [8, 32], strides = [1, 1]} : vector<8x384xf32> to vector<8x32xf32>
    %70 = vector.extract_strided_slice %41 {offsets = [0, 160], sizes = [8, 32], strides = [1, 1]} : vector<8x384xf32> to vector<8x32xf32>
    %71 = vector.extract_strided_slice %41 {offsets = [0, 288], sizes = [8, 32], strides = [1, 1]} : vector<8x384xf32> to vector<8x32xf32>
    %72 = arith.truncf %69 : vector<8x32xf32> to vector<8x32xbf16>
    %73 = arith.truncf %70 : vector<8x32xf32> to vector<8x32xbf16>
    "tpu.trace_start"() <{level = 10 : i32, message = "sd,td->st"}> : () -> ()
    %cst_26 = arith.constant dense<0.000000e+00> : vector<8x8xf32>
    %74 = tpu.matmul %72, %73, %cst_26 {dimension_numbers = #tpu.dot_dimension_numbers<[1], [1], [0], [0], [0, 0, 1, 0], [], []>} : vector<8x32xbf16>, vector<8x32xbf16>, vector<8x8xf32> -> vector<8x8xf32>
    "tpu.trace_stop"() : () -> ()
    %cst_27 = arith.constant 0.353553385 : f32
    %75 = vector.broadcast %cst_27 : f32 to vector<8x8xf32>
    %76 = arith.mulf %74, %75 : vector<8x8xf32>
    %cst_28 = arith.constant 0.000000e+00 : f32
    %77 = vector.broadcast %cst_28 : f32 to vector<1x8xf32>
    %78 = arith.cmpf ogt, %6, %77 : vector<1x8xf32>
    %cst_29 = arith.constant -1.000000e+30 : f32
    %79 = vector.shape_cast %78 : vector<1x8xi1> to vector<1x8xi1>
    %80 = vector.broadcast %79 : vector<1x8xi1> to vector<8x8xi1>
    %81 = vector.broadcast %cst_29 : f32 to vector<8x8xf32>
    %82 = arith.select %80, %76, %81 : vector<8x8xi1>, vector<8x8xf32>
    %cst_30 = arith.constant dense<0xFF800000> : vector<8xf32>
    %83 = vector.multi_reduction <maximumf>, %82, %cst_30 [1] : vector<8x8xf32> to vector<8xf32>
    %84 = vector.shape_cast %83 : vector<8xf32> to vector<8x1xf32>
    %85 = vector.broadcast %84 : vector<8x1xf32> to vector<8x8xf32>
    %86 = arith.subf %82, %85 : vector<8x8xf32>
    %87 = math.exp %86 : vector<8x8xf32>
    %cst_31 = arith.constant dense<0.000000e+00> : vector<8xf32>
    %88 = vector.multi_reduction <add>, %87, %cst_31 [1] : vector<8x8xf32> to vector<8xf32>
    %89 = vector.shape_cast %88 : vector<8xf32> to vector<8x1xf32>
    %90 = tpu.reciprocal %89 {approx = true} : vector<8x1xf32> -> vector<8x1xf32>
    %91 = vector.broadcast %90 : vector<8x1xf32> to vector<8x8xf32>
    %92 = arith.mulf %87, %91 : vector<8x8xf32>
    %93 = arith.truncf %92 : vector<8x8xf32> to vector<8x8xbf16>
    %94 = arith.truncf %71 : vector<8x32xf32> to vector<8x32xbf16>
    %cst_32 = arith.constant dense<0.000000e+00> : vector<8x32xf32>
    %95 = tpu.matmul %93, %94, %cst_32 {dimension_numbers = #tpu.dot_dimension_numbers<[1], [0], [0], [1], [0, 0, 1, 1], [], []>} : vector<8x8xbf16>, vector<8x32xbf16>, vector<8x32xf32> -> vector<8x32xf32>
    %96 = vector.extract_strided_slice %41 {offsets = [0, 64], sizes = [8, 32], strides = [1, 1]} : vector<8x384xf32> to vector<8x32xf32>
    %97 = vector.extract_strided_slice %41 {offsets = [0, 192], sizes = [8, 32], strides = [1, 1]} : vector<8x384xf32> to vector<8x32xf32>
    %98 = vector.extract_strided_slice %41 {offsets = [0, 320], sizes = [8, 32], strides = [1, 1]} : vector<8x384xf32> to vector<8x32xf32>
    %99 = arith.truncf %96 : vector<8x32xf32> to vector<8x32xbf16>
    %100 = arith.truncf %97 : vector<8x32xf32> to vector<8x32xbf16>
    "tpu.trace_start"() <{level = 10 : i32, message = "sd,td->st"}> : () -> ()
    %cst_33 = arith.constant dense<0.000000e+00> : vector<8x8xf32>
    %101 = tpu.matmul %99, %100, %cst_33 {dimension_numbers = #tpu.dot_dimension_numbers<[1], [1], [0], [0], [0, 0, 1, 0], [], []>} : vector<8x32xbf16>, vector<8x32xbf16>, vector<8x8xf32> -> vector<8x8xf32>
    "tpu.trace_stop"() : () -> ()
    %cst_34 = arith.constant 0.353553385 : f32
    %102 = vector.broadcast %cst_34 : f32 to vector<8x8xf32>
    %103 = arith.mulf %101, %102 : vector<8x8xf32>
    %cst_35 = arith.constant 0.000000e+00 : f32
    %104 = vector.broadcast %cst_35 : f32 to vector<1x8xf32>
    %105 = arith.cmpf ogt, %6, %104 : vector<1x8xf32>
    %cst_36 = arith.constant -1.000000e+30 : f32
    %106 = vector.shape_cast %105 : vector<1x8xi1> to vector<1x8xi1>
    %107 = vector.broadcast %106 : vector<1x8xi1> to vector<8x8xi1>
    %108 = vector.broadcast %cst_36 : f32 to vector<8x8xf32>
    %109 = arith.select %107, %103, %108 : vector<8x8xi1>, vector<8x8xf32>
    %cst_37 = arith.constant dense<0xFF800000> : vector<8xf32>
    %110 = vector.multi_reduction <maximumf>, %109, %cst_37 [1] : vector<8x8xf32> to vector<8xf32>
    %111 = vector.shape_cast %110 : vector<8xf32> to vector<8x1xf32>
    %112 = vector.broadcast %111 : vector<8x1xf32> to vector<8x8xf32>
    %113 = arith.subf %109, %112 : vector<8x8xf32>
    %114 = math.exp %113 : vector<8x8xf32>
    %cst_38 = arith.constant dense<0.000000e+00> : vector<8xf32>
    %115 = vector.multi_reduction <add>, %114, %cst_38 [1] : vector<8x8xf32> to vector<8xf32>
    %116 = vector.shape_cast %115 : vector<8xf32> to vector<8x1xf32>
    %117 = tpu.reciprocal %116 {approx = true} : vector<8x1xf32> -> vector<8x1xf32>
    %118 = vector.broadcast %117 : vector<8x1xf32> to vector<8x8xf32>
    %119 = arith.mulf %114, %118 : vector<8x8xf32>
    %120 = arith.truncf %119 : vector<8x8xf32> to vector<8x8xbf16>
    %121 = arith.truncf %98 : vector<8x32xf32> to vector<8x32xbf16>
    %cst_39 = arith.constant dense<0.000000e+00> : vector<8x32xf32>
    %122 = tpu.matmul %120, %121, %cst_39 {dimension_numbers = #tpu.dot_dimension_numbers<[1], [0], [0], [1], [0, 0, 1, 1], [], []>} : vector<8x8xbf16>, vector<8x32xbf16>, vector<8x32xf32> -> vector<8x32xf32>
    %123 = vector.extract_strided_slice %41 {offsets = [0, 96], sizes = [8, 32], strides = [1, 1]} : vector<8x384xf32> to vector<8x32xf32>
    %124 = vector.extract_strided_slice %41 {offsets = [0, 224], sizes = [8, 32], strides = [1, 1]} : vector<8x384xf32> to vector<8x32xf32>
    %125 = vector.extract_strided_slice %41 {offsets = [0, 352], sizes = [8, 32], strides = [1, 1]} : vector<8x384xf32> to vector<8x32xf32>
    %126 = arith.truncf %123 : vector<8x32xf32> to vector<8x32xbf16>
    %127 = arith.truncf %124 : vector<8x32xf32> to vector<8x32xbf16>
    "tpu.trace_start"() <{level = 10 : i32, message = "sd,td->st"}> : () -> ()
    %cst_40 = arith.constant dense<0.000000e+00> : vector<8x8xf32>
    %128 = tpu.matmul %126, %127, %cst_40 {dimension_numbers = #tpu.dot_dimension_numbers<[1], [1], [0], [0], [0, 0, 1, 0], [], []>} : vector<8x32xbf16>, vector<8x32xbf16>, vector<8x8xf32> -> vector<8x8xf32>
    "tpu.trace_stop"() : () -> ()
    %cst_41 = arith.constant 0.353553385 : f32
    %129 = vector.broadcast %cst_41 : f32 to vector<8x8xf32>
    %130 = arith.mulf %128, %129 : vector<8x8xf32>
    %cst_42 = arith.constant 0.000000e+00 : f32
    %131 = vector.broadcast %cst_42 : f32 to vector<1x8xf32>
    %132 = arith.cmpf ogt, %6, %131 : vector<1x8xf32>
    %cst_43 = arith.constant -1.000000e+30 : f32
    %133 = vector.shape_cast %132 : vector<1x8xi1> to vector<1x8xi1>
    %134 = vector.broadcast %133 : vector<1x8xi1> to vector<8x8xi1>
    %135 = vector.broadcast %cst_43 : f32 to vector<8x8xf32>
    %136 = arith.select %134, %130, %135 : vector<8x8xi1>, vector<8x8xf32>
    %cst_44 = arith.constant dense<0xFF800000> : vector<8xf32>
    %137 = vector.multi_reduction <maximumf>, %136, %cst_44 [1] : vector<8x8xf32> to vector<8xf32>
    %138 = vector.shape_cast %137 : vector<8xf32> to vector<8x1xf32>
    %139 = vector.broadcast %138 : vector<8x1xf32> to vector<8x8xf32>
    %140 = arith.subf %136, %139 : vector<8x8xf32>
    %141 = math.exp %140 : vector<8x8xf32>
    %cst_45 = arith.constant dense<0.000000e+00> : vector<8xf32>
    %142 = vector.multi_reduction <add>, %141, %cst_45 [1] : vector<8x8xf32> to vector<8xf32>
    %143 = vector.shape_cast %142 : vector<8xf32> to vector<8x1xf32>
    %144 = tpu.reciprocal %143 {approx = true} : vector<8x1xf32> -> vector<8x1xf32>
    %145 = vector.broadcast %144 : vector<8x1xf32> to vector<8x8xf32>
    %146 = arith.mulf %141, %145 : vector<8x8xf32>
    %147 = arith.truncf %146 : vector<8x8xf32> to vector<8x8xbf16>
    %148 = arith.truncf %125 : vector<8x32xf32> to vector<8x32xbf16>
    %cst_46 = arith.constant dense<0.000000e+00> : vector<8x32xf32>
    %149 = tpu.matmul %147, %148, %cst_46 {dimension_numbers = #tpu.dot_dimension_numbers<[1], [0], [0], [1], [0, 0, 1, 1], [], []>} : vector<8x8xbf16>, vector<8x32xbf16>, vector<8x32xf32> -> vector<8x32xf32>
    %150 = tpu.concatenate %68, %95, %122, %149 in 1 : vector<8x32xf32>, vector<8x32xf32>, vector<8x32xf32>, vector<8x32xf32> -> vector<8x128xf32>
    %151 = arith.truncf %150 : vector<8x128xf32> to vector<8x128xbf16>
    %c0_47 = arith.constant 0 : index
    %c0_48 = arith.constant 0 : index
    %c0_49 = arith.constant 0 : index
    %152 = vector.load %arg7[%c0_47, %c0_48, %c0_49] : memref<2x128x128xbf16, #tpu.memory_space<vmem>>, vector<1x128x128xbf16>
    %153 = vector.shape_cast %152 : vector<1x128x128xbf16> to vector<128x128xbf16>
    %cst_50 = arith.constant dense<0.000000e+00> : vector<8x128xf32>
    %154 = tpu.matmul %151, %153, %cst_50 {dimension_numbers = #tpu.dot_dimension_numbers<[1], [0], [0], [1], [0, 0, 1, 1], [], []>} : vector<8x128xbf16>, vector<128x128xbf16>, vector<8x128xf32> -> vector<8x128xf32>
    %c0_51 = arith.constant 0 : index
    %c0_52 = arith.constant 0 : index
    %c0_53 = arith.constant 0 : index
    %155 = vector.load %arg8[%c0_51, %c0_52, %c0_53] : memref<2x1x128xf32, #tpu.memory_space<vmem>>, vector<1x1x128xf32>
    %156 = vector.shape_cast %155 : vector<1x1x128xf32> to vector<1x128xf32>
    %157 = vector.broadcast %156 : vector<1x128xf32> to vector<8x128xf32>
    %158 = arith.addf %154, %157 : vector<8x128xf32>
    %159 = arith.addf %33, %158 : vector<8x128xf32>
    %c0_54 = arith.constant 0 : index
    %c0_55 = arith.constant 0 : index
    %c0_56 = arith.constant 0 : index
    %160 = vector.load %arg9[%c0_54, %c0_55, %c0_56] : memref<2x1x128xf32, #tpu.memory_space<vmem>>, vector<1x1x128xf32>
    %161 = vector.shape_cast %160 : vector<1x1x128xf32> to vector<1x128xf32>
    %c0_57 = arith.constant 0 : index
    %c0_58 = arith.constant 0 : index
    %c0_59 = arith.constant 0 : index
    %162 = vector.load %arg10[%c0_57, %c0_58, %c0_59] : memref<2x1x128xf32, #tpu.memory_space<vmem>>, vector<1x1x128xf32>
    %163 = vector.shape_cast %162 : vector<1x1x128xf32> to vector<1x128xf32>
    %164 = vector.broadcast %4 : vector<1x128xf32> to vector<8x128xf32>
    %165 = arith.mulf %159, %164 : vector<8x128xf32>
    %cst_60 = arith.constant dense<0.000000e+00> : vector<8xf32>
    %166 = vector.multi_reduction <add>, %165, %cst_60 [1] : vector<8x128xf32> to vector<8xf32>
    %167 = vector.shape_cast %166 : vector<8xf32> to vector<8x1xf32>
    %cst_61 = arith.constant 3.125000e-02 : f32
    %168 = vector.broadcast %cst_61 : f32 to vector<8x1xf32>
    %169 = arith.mulf %167, %168 : vector<8x1xf32>
    %170 = vector.broadcast %169 : vector<8x1xf32> to vector<8x128xf32>
    %171 = arith.subf %159, %170 : vector<8x128xf32>
    %172 = vector.broadcast %4 : vector<1x128xf32> to vector<8x128xf32>
    %173 = arith.mulf %171, %172 : vector<8x128xf32>
    %174 = arith.mulf %173, %173 : vector<8x128xf32>
    %cst_62 = arith.constant dense<0.000000e+00> : vector<8xf32>
    %175 = vector.multi_reduction <add>, %174, %cst_62 [1] : vector<8x128xf32> to vector<8xf32>
    %176 = vector.shape_cast %175 : vector<8xf32> to vector<8x1xf32>
    %cst_63 = arith.constant 3.125000e-02 : f32
    %177 = vector.broadcast %cst_63 : f32 to vector<8x1xf32>
    %178 = arith.mulf %176, %177 : vector<8x1xf32>
    %cst_64 = arith.constant 9.99999974E-6 : f32
    %179 = vector.broadcast %cst_64 : f32 to vector<8x1xf32>
    %180 = arith.addf %178, %179 : vector<8x1xf32>
    %181 = math.rsqrt %180 : vector<8x1xf32>
    %182 = vector.broadcast %181 : vector<8x1xf32> to vector<8x128xf32>
    %183 = arith.mulf %173, %182 : vector<8x128xf32>
    %184 = vector.broadcast %161 : vector<1x128xf32> to vector<8x128xf32>
    %185 = arith.mulf %183, %184 : vector<8x128xf32>
    %186 = vector.broadcast %163 : vector<1x128xf32> to vector<8x128xf32>
    %187 = arith.addf %185, %186 : vector<8x128xf32>
    %188 = arith.truncf %187 : vector<8x128xf32> to vector<8x128xbf16>
    %c0_65 = arith.constant 0 : index
    %c0_66 = arith.constant 0 : index
    %c0_67 = arith.constant 0 : index
    %189 = vector.load %arg11[%c0_65, %c0_66, %c0_67] : memref<2x128x128xbf16, #tpu.memory_space<vmem>>, vector<1x128x128xbf16>
    %190 = vector.shape_cast %189 : vector<1x128x128xbf16> to vector<128x128xbf16>
    %cst_68 = arith.constant dense<0.000000e+00> : vector<8x128xf32>
    %191 = tpu.matmul %188, %190, %cst_68 {dimension_numbers = #tpu.dot_dimension_numbers<[1], [0], [0], [1], [0, 0, 1, 1], [], []>} : vector<8x128xbf16>, vector<128x128xbf16>, vector<8x128xf32> -> vector<8x128xf32>
    %c0_69 = arith.constant 0 : index
    %c0_70 = arith.constant 0 : index
    %c0_71 = arith.constant 0 : index
    %192 = vector.load %arg12[%c0_69, %c0_70, %c0_71] : memref<2x1x128xf32, #tpu.memory_space<vmem>>, vector<1x1x128xf32>
    %193 = vector.shape_cast %192 : vector<1x1x128xf32> to vector<1x128xf32>
    %194 = vector.broadcast %193 : vector<1x128xf32> to vector<8x128xf32>
    %195 = arith.addf %191, %194 : vector<8x128xf32>
    %196 = arith.mulf %195, %195 : vector<8x128xf32>
    %197 = arith.mulf %195, %196 : vector<8x128xf32>
    %cst_72 = arith.constant 4.471500e-02 : f32
    %198 = vector.broadcast %cst_72 : f32 to vector<8x128xf32>
    %199 = arith.mulf %198, %197 : vector<8x128xf32>
    %200 = arith.addf %195, %199 : vector<8x128xf32>
    %cst_73 = arith.constant 0.797884583 : f32
    %201 = vector.broadcast %cst_73 : f32 to vector<8x128xf32>
    %202 = arith.mulf %201, %200 : vector<8x128xf32>
    %203 = math.tanh %202 : vector<8x128xf32>
    %cst_74 = arith.constant 1.000000e+00 : f32
    %204 = vector.broadcast %cst_74 : f32 to vector<8x128xf32>
    %205 = arith.addf %204, %203 : vector<8x128xf32>
    %cst_75 = arith.constant 5.000000e-01 : f32
    %206 = vector.broadcast %cst_75 : f32 to vector<8x128xf32>
    %207 = arith.mulf %206, %205 : vector<8x128xf32>
    %208 = arith.mulf %195, %207 : vector<8x128xf32>
    %209 = arith.truncf %208 : vector<8x128xf32> to vector<8x128xbf16>
    %c0_76 = arith.constant 0 : index
    %c0_77 = arith.constant 0 : index
    %c0_78 = arith.constant 0 : index
    %210 = vector.load %arg13[%c0_76, %c0_77, %c0_78] : memref<2x128x128xbf16, #tpu.memory_space<vmem>>, vector<1x128x128xbf16>
    %211 = vector.shape_cast %210 : vector<1x128x128xbf16> to vector<128x128xbf16>
    %cst_79 = arith.constant dense<0.000000e+00> : vector<8x128xf32>
    %212 = tpu.matmul %209, %211, %cst_79 {dimension_numbers = #tpu.dot_dimension_numbers<[1], [0], [0], [1], [0, 0, 1, 1], [], []>} : vector<8x128xbf16>, vector<128x128xbf16>, vector<8x128xf32> -> vector<8x128xf32>
    %c0_80 = arith.constant 0 : index
    %c0_81 = arith.constant 0 : index
    %c0_82 = arith.constant 0 : index
    %213 = vector.load %arg14[%c0_80, %c0_81, %c0_82] : memref<2x1x128xf32, #tpu.memory_space<vmem>>, vector<1x1x128xf32>
    %214 = vector.shape_cast %213 : vector<1x1x128xf32> to vector<1x128xf32>
    %215 = vector.broadcast %214 : vector<1x128xf32> to vector<8x128xf32>
    %216 = arith.addf %212, %215 : vector<8x128xf32>
    %217 = arith.addf %187, %216 : vector<8x128xf32>
    %c0_83 = arith.constant 0 : index
    %c0_84 = arith.constant 0 : index
    %c0_85 = arith.constant 0 : index
    %218 = vector.load %arg15[%c0_83, %c0_84, %c0_85] : memref<2x1x128xf32, #tpu.memory_space<vmem>>, vector<1x1x128xf32>
    %219 = vector.shape_cast %218 : vector<1x1x128xf32> to vector<1x128xf32>
    %c0_86 = arith.constant 0 : index
    %c0_87 = arith.constant 0 : index
    %c0_88 = arith.constant 0 : index
    %220 = vector.load %arg16[%c0_86, %c0_87, %c0_88] : memref<2x1x128xf32, #tpu.memory_space<vmem>>, vector<1x1x128xf32>
    %221 = vector.shape_cast %220 : vector<1x1x128xf32> to vector<1x128xf32>
    %222 = vector.broadcast %4 : vector<1x128xf32> to vector<8x128xf32>
    %223 = arith.mulf %217, %222 : vector<8x128xf32>
    %cst_89 = arith.constant dense<0.000000e+00> : vector<8xf32>
    %224 = vector.multi_reduction <add>, %223, %cst_89 [1] : vector<8x128xf32> to vector<8xf32>
    %225 = vector.shape_cast %224 : vector<8xf32> to vector<8x1xf32>
    %cst_90 = arith.constant 3.125000e-02 : f32
    %226 = vector.broadcast %cst_90 : f32 to vector<8x1xf32>
    %227 = arith.mulf %225, %226 : vector<8x1xf32>
    %228 = vector.broadcast %227 : vector<8x1xf32> to vector<8x128xf32>
    %229 = arith.subf %217, %228 : vector<8x128xf32>
    %230 = vector.broadcast %4 : vector<1x128xf32> to vector<8x128xf32>
    %231 = arith.mulf %229, %230 : vector<8x128xf32>
    %232 = arith.mulf %231, %231 : vector<8x128xf32>
    %cst_91 = arith.constant dense<0.000000e+00> : vector<8xf32>
    %233 = vector.multi_reduction <add>, %232, %cst_91 [1] : vector<8x128xf32> to vector<8xf32>
    %234 = vector.shape_cast %233 : vector<8xf32> to vector<8x1xf32>
    %cst_92 = arith.constant 3.125000e-02 : f32
    %235 = vector.broadcast %cst_92 : f32 to vector<8x1xf32>
    %236 = arith.mulf %234, %235 : vector<8x1xf32>
    %cst_93 = arith.constant 9.99999974E-6 : f32
    %237 = vector.broadcast %cst_93 : f32 to vector<8x1xf32>
    %238 = arith.addf %236, %237 : vector<8x1xf32>
    %239 = math.rsqrt %238 : vector<8x1xf32>
    %240 = vector.broadcast %239 : vector<8x1xf32> to vector<8x128xf32>
    %241 = arith.mulf %231, %240 : vector<8x128xf32>
    %242 = vector.broadcast %219 : vector<1x128xf32> to vector<8x128xf32>
    %243 = arith.mulf %241, %242 : vector<8x128xf32>
    %244 = vector.broadcast %221 : vector<1x128xf32> to vector<8x128xf32>
    %245 = arith.addf %243, %244 : vector<8x128xf32>
    %246 = arith.truncf %245 : vector<8x128xf32> to vector<8x128xbf16>
    %c1 = arith.constant 1 : index
    %c0_94 = arith.constant 0 : index
    %c0_95 = arith.constant 0 : index
    %247 = vector.load %arg5[%c1, %c0_94, %c0_95] : memref<2x128x384xbf16, #tpu.memory_space<vmem>>, vector<1x128x384xbf16>
    %248 = vector.shape_cast %247 : vector<1x128x384xbf16> to vector<128x384xbf16>
    %cst_96 = arith.constant dense<0.000000e+00> : vector<8x384xf32>
    %249 = tpu.matmul %246, %248, %cst_96 {dimension_numbers = #tpu.dot_dimension_numbers<[1], [0], [0], [1], [0, 0, 1, 1], [], []>} : vector<8x128xbf16>, vector<128x384xbf16>, vector<8x384xf32> -> vector<8x384xf32>
    %c1_97 = arith.constant 1 : index
    %c0_98 = arith.constant 0 : index
    %c0_99 = arith.constant 0 : index
    %250 = vector.load %arg6[%c1_97, %c0_98, %c0_99] : memref<2x1x384xf32, #tpu.memory_space<vmem>>, vector<1x1x384xf32>
    %251 = vector.shape_cast %250 : vector<1x1x384xf32> to vector<1x384xf32>
    %252 = vector.broadcast %251 : vector<1x384xf32> to vector<8x384xf32>
    %253 = arith.addf %249, %252 : vector<8x384xf32>
    %254 = vector.extract_strided_slice %253 {offsets = [0, 0], sizes = [8, 32], strides = [1, 1]} : vector<8x384xf32> to vector<8x32xf32>
    %255 = vector.extract_strided_slice %253 {offsets = [0, 128], sizes = [8, 32], strides = [1, 1]} : vector<8x384xf32> to vector<8x32xf32>
    %256 = vector.extract_strided_slice %253 {offsets = [0, 256], sizes = [8, 32], strides = [1, 1]} : vector<8x384xf32> to vector<8x32xf32>
    %257 = arith.truncf %254 : vector<8x32xf32> to vector<8x32xbf16>
    %258 = arith.truncf %255 : vector<8x32xf32> to vector<8x32xbf16>
    "tpu.trace_start"() <{level = 10 : i32, message = "sd,td->st"}> : () -> ()
    %cst_100 = arith.constant dense<0.000000e+00> : vector<8x8xf32>
    %259 = tpu.matmul %257, %258, %cst_100 {dimension_numbers = #tpu.dot_dimension_numbers<[1], [1], [0], [0], [0, 0, 1, 0], [], []>} : vector<8x32xbf16>, vector<8x32xbf16>, vector<8x8xf32> -> vector<8x8xf32>
    "tpu.trace_stop"() : () -> ()
    %cst_101 = arith.constant 0.353553385 : f32
    %260 = vector.broadcast %cst_101 : f32 to vector<8x8xf32>
    %261 = arith.mulf %259, %260 : vector<8x8xf32>
    %cst_102 = arith.constant 0.000000e+00 : f32
    %262 = vector.broadcast %cst_102 : f32 to vector<1x8xf32>
    %263 = arith.cmpf ogt, %6, %262 : vector<1x8xf32>
    %cst_103 = arith.constant -1.000000e+30 : f32
    %264 = vector.shape_cast %263 : vector<1x8xi1> to vector<1x8xi1>
    %265 = vector.broadcast %264 : vector<1x8xi1> to vector<8x8xi1>
    %266 = vector.broadcast %cst_103 : f32 to vector<8x8xf32>
    %267 = arith.select %265, %261, %266 : vector<8x8xi1>, vector<8x8xf32>
    %cst_104 = arith.constant dense<0xFF800000> : vector<8xf32>
    %268 = vector.multi_reduction <maximumf>, %267, %cst_104 [1] : vector<8x8xf32> to vector<8xf32>
    %269 = vector.shape_cast %268 : vector<8xf32> to vector<8x1xf32>
    %270 = vector.broadcast %269 : vector<8x1xf32> to vector<8x8xf32>
    %271 = arith.subf %267, %270 : vector<8x8xf32>
    %272 = math.exp %271 : vector<8x8xf32>
    %cst_105 = arith.constant dense<0.000000e+00> : vector<8xf32>
    %273 = vector.multi_reduction <add>, %272, %cst_105 [1] : vector<8x8xf32> to vector<8xf32>
    %274 = vector.shape_cast %273 : vector<8xf32> to vector<8x1xf32>
    %275 = tpu.reciprocal %274 {approx = true} : vector<8x1xf32> -> vector<8x1xf32>
    %276 = vector.broadcast %275 : vector<8x1xf32> to vector<8x8xf32>
    %277 = arith.mulf %272, %276 : vector<8x8xf32>
    %278 = arith.truncf %277 : vector<8x8xf32> to vector<8x8xbf16>
    %279 = arith.truncf %256 : vector<8x32xf32> to vector<8x32xbf16>
    %cst_106 = arith.constant dense<0.000000e+00> : vector<8x32xf32>
    %280 = tpu.matmul %278, %279, %cst_106 {dimension_numbers = #tpu.dot_dimension_numbers<[1], [0], [0], [1], [0, 0, 1, 1], [], []>} : vector<8x8xbf16>, vector<8x32xbf16>, vector<8x32xf32> -> vector<8x32xf32>
    %281 = vector.extract_strided_slice %253 {offsets = [0, 32], sizes = [8, 32], strides = [1, 1]} : vector<8x384xf32> to vector<8x32xf32>
    %282 = vector.extract_strided_slice %253 {offsets = [0, 160], sizes = [8, 32], strides = [1, 1]} : vector<8x384xf32> to vector<8x32xf32>
    %283 = vector.extract_strided_slice %253 {offsets = [0, 288], sizes = [8, 32], strides = [1, 1]} : vector<8x384xf32> to vector<8x32xf32>
    %284 = arith.truncf %281 : vector<8x32xf32> to vector<8x32xbf16>
    %285 = arith.truncf %282 : vector<8x32xf32> to vector<8x32xbf16>
    "tpu.trace_start"() <{level = 10 : i32, message = "sd,td->st"}> : () -> ()
    %cst_107 = arith.constant dense<0.000000e+00> : vector<8x8xf32>
    %286 = tpu.matmul %284, %285, %cst_107 {dimension_numbers = #tpu.dot_dimension_numbers<[1], [1], [0], [0], [0, 0, 1, 0], [], []>} : vector<8x32xbf16>, vector<8x32xbf16>, vector<8x8xf32> -> vector<8x8xf32>
    "tpu.trace_stop"() : () -> ()
    %cst_108 = arith.constant 0.353553385 : f32
    %287 = vector.broadcast %cst_108 : f32 to vector<8x8xf32>
    %288 = arith.mulf %286, %287 : vector<8x8xf32>
    %cst_109 = arith.constant 0.000000e+00 : f32
    %289 = vector.broadcast %cst_109 : f32 to vector<1x8xf32>
    %290 = arith.cmpf ogt, %6, %289 : vector<1x8xf32>
    %cst_110 = arith.constant -1.000000e+30 : f32
    %291 = vector.shape_cast %290 : vector<1x8xi1> to vector<1x8xi1>
    %292 = vector.broadcast %291 : vector<1x8xi1> to vector<8x8xi1>
    %293 = vector.broadcast %cst_110 : f32 to vector<8x8xf32>
    %294 = arith.select %292, %288, %293 : vector<8x8xi1>, vector<8x8xf32>
    %cst_111 = arith.constant dense<0xFF800000> : vector<8xf32>
    %295 = vector.multi_reduction <maximumf>, %294, %cst_111 [1] : vector<8x8xf32> to vector<8xf32>
    %296 = vector.shape_cast %295 : vector<8xf32> to vector<8x1xf32>
    %297 = vector.broadcast %296 : vector<8x1xf32> to vector<8x8xf32>
    %298 = arith.subf %294, %297 : vector<8x8xf32>
    %299 = math.exp %298 : vector<8x8xf32>
    %cst_112 = arith.constant dense<0.000000e+00> : vector<8xf32>
    %300 = vector.multi_reduction <add>, %299, %cst_112 [1] : vector<8x8xf32> to vector<8xf32>
    %301 = vector.shape_cast %300 : vector<8xf32> to vector<8x1xf32>
    %302 = tpu.reciprocal %301 {approx = true} : vector<8x1xf32> -> vector<8x1xf32>
    %303 = vector.broadcast %302 : vector<8x1xf32> to vector<8x8xf32>
    %304 = arith.mulf %299, %303 : vector<8x8xf32>
    %305 = arith.truncf %304 : vector<8x8xf32> to vector<8x8xbf16>
    %306 = arith.truncf %283 : vector<8x32xf32> to vector<8x32xbf16>
    %cst_113 = arith.constant dense<0.000000e+00> : vector<8x32xf32>
    %307 = tpu.matmul %305, %306, %cst_113 {dimension_numbers = #tpu.dot_dimension_numbers<[1], [0], [0], [1], [0, 0, 1, 1], [], []>} : vector<8x8xbf16>, vector<8x32xbf16>, vector<8x32xf32> -> vector<8x32xf32>
    %308 = vector.extract_strided_slice %253 {offsets = [0, 64], sizes = [8, 32], strides = [1, 1]} : vector<8x384xf32> to vector<8x32xf32>
    %309 = vector.extract_strided_slice %253 {offsets = [0, 192], sizes = [8, 32], strides = [1, 1]} : vector<8x384xf32> to vector<8x32xf32>
    %310 = vector.extract_strided_slice %253 {offsets = [0, 320], sizes = [8, 32], strides = [1, 1]} : vector<8x384xf32> to vector<8x32xf32>
    %311 = arith.truncf %308 : vector<8x32xf32> to vector<8x32xbf16>
    %312 = arith.truncf %309 : vector<8x32xf32> to vector<8x32xbf16>
    "tpu.trace_start"() <{level = 10 : i32, message = "sd,td->st"}> : () -> ()
    %cst_114 = arith.constant dense<0.000000e+00> : vector<8x8xf32>
    %313 = tpu.matmul %311, %312, %cst_114 {dimension_numbers = #tpu.dot_dimension_numbers<[1], [1], [0], [0], [0, 0, 1, 0], [], []>} : vector<8x32xbf16>, vector<8x32xbf16>, vector<8x8xf32> -> vector<8x8xf32>
    "tpu.trace_stop"() : () -> ()
    %cst_115 = arith.constant 0.353553385 : f32
    %314 = vector.broadcast %cst_115 : f32 to vector<8x8xf32>
    %315 = arith.mulf %313, %314 : vector<8x8xf32>
    %cst_116 = arith.constant 0.000000e+00 : f32
    %316 = vector.broadcast %cst_116 : f32 to vector<1x8xf32>
    %317 = arith.cmpf ogt, %6, %316 : vector<1x8xf32>
    %cst_117 = arith.constant -1.000000e+30 : f32
    %318 = vector.shape_cast %317 : vector<1x8xi1> to vector<1x8xi1>
    %319 = vector.broadcast %318 : vector<1x8xi1> to vector<8x8xi1>
    %320 = vector.broadcast %cst_117 : f32 to vector<8x8xf32>
    %321 = arith.select %319, %315, %320 : vector<8x8xi1>, vector<8x8xf32>
    %cst_118 = arith.constant dense<0xFF800000> : vector<8xf32>
    %322 = vector.multi_reduction <maximumf>, %321, %cst_118 [1] : vector<8x8xf32> to vector<8xf32>
    %323 = vector.shape_cast %322 : vector<8xf32> to vector<8x1xf32>
    %324 = vector.broadcast %323 : vector<8x1xf32> to vector<8x8xf32>
    %325 = arith.subf %321, %324 : vector<8x8xf32>
    %326 = math.exp %325 : vector<8x8xf32>
    %cst_119 = arith.constant dense<0.000000e+00> : vector<8xf32>
    %327 = vector.multi_reduction <add>, %326, %cst_119 [1] : vector<8x8xf32> to vector<8xf32>
    %328 = vector.shape_cast %327 : vector<8xf32> to vector<8x1xf32>
    %329 = tpu.reciprocal %328 {approx = true} : vector<8x1xf32> -> vector<8x1xf32>
    %330 = vector.broadcast %329 : vector<8x1xf32> to vector<8x8xf32>
    %331 = arith.mulf %326, %330 : vector<8x8xf32>
    %332 = arith.truncf %331 : vector<8x8xf32> to vector<8x8xbf16>
    %333 = arith.truncf %310 : vector<8x32xf32> to vector<8x32xbf16>
    %cst_120 = arith.constant dense<0.000000e+00> : vector<8x32xf32>
    %334 = tpu.matmul %332, %333, %cst_120 {dimension_numbers = #tpu.dot_dimension_numbers<[1], [0], [0], [1], [0, 0, 1, 1], [], []>} : vector<8x8xbf16>, vector<8x32xbf16>, vector<8x32xf32> -> vector<8x32xf32>
    %335 = vector.extract_strided_slice %253 {offsets = [0, 96], sizes = [8, 32], strides = [1, 1]} : vector<8x384xf32> to vector<8x32xf32>
    %336 = vector.extract_strided_slice %253 {offsets = [0, 224], sizes = [8, 32], strides = [1, 1]} : vector<8x384xf32> to vector<8x32xf32>
    %337 = vector.extract_strided_slice %253 {offsets = [0, 352], sizes = [8, 32], strides = [1, 1]} : vector<8x384xf32> to vector<8x32xf32>
    %338 = arith.truncf %335 : vector<8x32xf32> to vector<8x32xbf16>
    %339 = arith.truncf %336 : vector<8x32xf32> to vector<8x32xbf16>
    "tpu.trace_start"() <{level = 10 : i32, message = "sd,td->st"}> : () -> ()
    %cst_121 = arith.constant dense<0.000000e+00> : vector<8x8xf32>
    %340 = tpu.matmul %338, %339, %cst_121 {dimension_numbers = #tpu.dot_dimension_numbers<[1], [1], [0], [0], [0, 0, 1, 0], [], []>} : vector<8x32xbf16>, vector<8x32xbf16>, vector<8x8xf32> -> vector<8x8xf32>
    "tpu.trace_stop"() : () -> ()
    %cst_122 = arith.constant 0.353553385 : f32
    %341 = vector.broadcast %cst_122 : f32 to vector<8x8xf32>
    %342 = arith.mulf %340, %341 : vector<8x8xf32>
    %cst_123 = arith.constant 0.000000e+00 : f32
    %343 = vector.broadcast %cst_123 : f32 to vector<1x8xf32>
    %344 = arith.cmpf ogt, %6, %343 : vector<1x8xf32>
    %cst_124 = arith.constant -1.000000e+30 : f32
    %345 = vector.shape_cast %344 : vector<1x8xi1> to vector<1x8xi1>
    %346 = vector.broadcast %345 : vector<1x8xi1> to vector<8x8xi1>
    %347 = vector.broadcast %cst_124 : f32 to vector<8x8xf32>
    %348 = arith.select %346, %342, %347 : vector<8x8xi1>, vector<8x8xf32>
    %cst_125 = arith.constant dense<0xFF800000> : vector<8xf32>
    %349 = vector.multi_reduction <maximumf>, %348, %cst_125 [1] : vector<8x8xf32> to vector<8xf32>
    %350 = vector.shape_cast %349 : vector<8xf32> to vector<8x1xf32>
    %351 = vector.broadcast %350 : vector<8x1xf32> to vector<8x8xf32>
    %352 = arith.subf %348, %351 : vector<8x8xf32>
    %353 = math.exp %352 : vector<8x8xf32>
    %cst_126 = arith.constant dense<0.000000e+00> : vector<8xf32>
    %354 = vector.multi_reduction <add>, %353, %cst_126 [1] : vector<8x8xf32> to vector<8xf32>
    %355 = vector.shape_cast %354 : vector<8xf32> to vector<8x1xf32>
    %356 = tpu.reciprocal %355 {approx = true} : vector<8x1xf32> -> vector<8x1xf32>
    %357 = vector.broadcast %356 : vector<8x1xf32> to vector<8x8xf32>
    %358 = arith.mulf %353, %357 : vector<8x8xf32>
    %359 = arith.truncf %358 : vector<8x8xf32> to vector<8x8xbf16>
    %360 = arith.truncf %337 : vector<8x32xf32> to vector<8x32xbf16>
    %cst_127 = arith.constant dense<0.000000e+00> : vector<8x32xf32>
    %361 = tpu.matmul %359, %360, %cst_127 {dimension_numbers = #tpu.dot_dimension_numbers<[1], [0], [0], [1], [0, 0, 1, 1], [], []>} : vector<8x8xbf16>, vector<8x32xbf16>, vector<8x32xf32> -> vector<8x32xf32>
    %362 = tpu.concatenate %280, %307, %334, %361 in 1 : vector<8x32xf32>, vector<8x32xf32>, vector<8x32xf32>, vector<8x32xf32> -> vector<8x128xf32>
    %363 = arith.truncf %362 : vector<8x128xf32> to vector<8x128xbf16>
    %c1_128 = arith.constant 1 : index
    %c0_129 = arith.constant 0 : index
    %c0_130 = arith.constant 0 : index
    %364 = vector.load %arg7[%c1_128, %c0_129, %c0_130] : memref<2x128x128xbf16, #tpu.memory_space<vmem>>, vector<1x128x128xbf16>
    %365 = vector.shape_cast %364 : vector<1x128x128xbf16> to vector<128x128xbf16>
    %cst_131 = arith.constant dense<0.000000e+00> : vector<8x128xf32>
    %366 = tpu.matmul %363, %365, %cst_131 {dimension_numbers = #tpu.dot_dimension_numbers<[1], [0], [0], [1], [0, 0, 1, 1], [], []>} : vector<8x128xbf16>, vector<128x128xbf16>, vector<8x128xf32> -> vector<8x128xf32>
    %c1_132 = arith.constant 1 : index
    %c0_133 = arith.constant 0 : index
    %c0_134 = arith.constant 0 : index
    %367 = vector.load %arg8[%c1_132, %c0_133, %c0_134] : memref<2x1x128xf32, #tpu.memory_space<vmem>>, vector<1x1x128xf32>
    %368 = vector.shape_cast %367 : vector<1x1x128xf32> to vector<1x128xf32>
    %369 = vector.broadcast %368 : vector<1x128xf32> to vector<8x128xf32>
    %370 = arith.addf %366, %369 : vector<8x128xf32>
    %371 = arith.addf %245, %370 : vector<8x128xf32>
    %c1_135 = arith.constant 1 : index
    %c0_136 = arith.constant 0 : index
    %c0_137 = arith.constant 0 : index
    %372 = vector.load %arg9[%c1_135, %c0_136, %c0_137] : memref<2x1x128xf32, #tpu.memory_space<vmem>>, vector<1x1x128xf32>
    %373 = vector.shape_cast %372 : vector<1x1x128xf32> to vector<1x128xf32>
    %c1_138 = arith.constant 1 : index
    %c0_139 = arith.constant 0 : index
    %c0_140 = arith.constant 0 : index
    %374 = vector.load %arg10[%c1_138, %c0_139, %c0_140] : memref<2x1x128xf32, #tpu.memory_space<vmem>>, vector<1x1x128xf32>
    %375 = vector.shape_cast %374 : vector<1x1x128xf32> to vector<1x128xf32>
    %376 = vector.broadcast %4 : vector<1x128xf32> to vector<8x128xf32>
    %377 = arith.mulf %371, %376 : vector<8x128xf32>
    %cst_141 = arith.constant dense<0.000000e+00> : vector<8xf32>
    %378 = vector.multi_reduction <add>, %377, %cst_141 [1] : vector<8x128xf32> to vector<8xf32>
    %379 = vector.shape_cast %378 : vector<8xf32> to vector<8x1xf32>
    %cst_142 = arith.constant 3.125000e-02 : f32
    %380 = vector.broadcast %cst_142 : f32 to vector<8x1xf32>
    %381 = arith.mulf %379, %380 : vector<8x1xf32>
    %382 = vector.broadcast %381 : vector<8x1xf32> to vector<8x128xf32>
    %383 = arith.subf %371, %382 : vector<8x128xf32>
    %384 = vector.broadcast %4 : vector<1x128xf32> to vector<8x128xf32>
    %385 = arith.mulf %383, %384 : vector<8x128xf32>
    %386 = arith.mulf %385, %385 : vector<8x128xf32>
    %cst_143 = arith.constant dense<0.000000e+00> : vector<8xf32>
    %387 = vector.multi_reduction <add>, %386, %cst_143 [1] : vector<8x128xf32> to vector<8xf32>
    %388 = vector.shape_cast %387 : vector<8xf32> to vector<8x1xf32>
    %cst_144 = arith.constant 3.125000e-02 : f32
    %389 = vector.broadcast %cst_144 : f32 to vector<8x1xf32>
    %390 = arith.mulf %388, %389 : vector<8x1xf32>
    %cst_145 = arith.constant 9.99999974E-6 : f32
    %391 = vector.broadcast %cst_145 : f32 to vector<8x1xf32>
    %392 = arith.addf %390, %391 : vector<8x1xf32>
    %393 = math.rsqrt %392 : vector<8x1xf32>
    %394 = vector.broadcast %393 : vector<8x1xf32> to vector<8x128xf32>
    %395 = arith.mulf %385, %394 : vector<8x128xf32>
    %396 = vector.broadcast %373 : vector<1x128xf32> to vector<8x128xf32>
    %397 = arith.mulf %395, %396 : vector<8x128xf32>
    %398 = vector.broadcast %375 : vector<1x128xf32> to vector<8x128xf32>
    %399 = arith.addf %397, %398 : vector<8x128xf32>
    %400 = arith.truncf %399 : vector<8x128xf32> to vector<8x128xbf16>
    %c1_146 = arith.constant 1 : index
    %c0_147 = arith.constant 0 : index
    %c0_148 = arith.constant 0 : index
    %401 = vector.load %arg11[%c1_146, %c0_147, %c0_148] : memref<2x128x128xbf16, #tpu.memory_space<vmem>>, vector<1x128x128xbf16>
    %402 = vector.shape_cast %401 : vector<1x128x128xbf16> to vector<128x128xbf16>
    %cst_149 = arith.constant dense<0.000000e+00> : vector<8x128xf32>
    %403 = tpu.matmul %400, %402, %cst_149 {dimension_numbers = #tpu.dot_dimension_numbers<[1], [0], [0], [1], [0, 0, 1, 1], [], []>} : vector<8x128xbf16>, vector<128x128xbf16>, vector<8x128xf32> -> vector<8x128xf32>
    %c1_150 = arith.constant 1 : index
    %c0_151 = arith.constant 0 : index
    %c0_152 = arith.constant 0 : index
    %404 = vector.load %arg12[%c1_150, %c0_151, %c0_152] : memref<2x1x128xf32, #tpu.memory_space<vmem>>, vector<1x1x128xf32>
    %405 = vector.shape_cast %404 : vector<1x1x128xf32> to vector<1x128xf32>
    %406 = vector.broadcast %405 : vector<1x128xf32> to vector<8x128xf32>
    %407 = arith.addf %403, %406 : vector<8x128xf32>
    %408 = arith.mulf %407, %407 : vector<8x128xf32>
    %409 = arith.mulf %407, %408 : vector<8x128xf32>
    %cst_153 = arith.constant 4.471500e-02 : f32
    %410 = vector.broadcast %cst_153 : f32 to vector<8x128xf32>
    %411 = arith.mulf %410, %409 : vector<8x128xf32>
    %412 = arith.addf %407, %411 : vector<8x128xf32>
    %cst_154 = arith.constant 0.797884583 : f32
    %413 = vector.broadcast %cst_154 : f32 to vector<8x128xf32>
    %414 = arith.mulf %413, %412 : vector<8x128xf32>
    %415 = math.tanh %414 : vector<8x128xf32>
    %cst_155 = arith.constant 1.000000e+00 : f32
    %416 = vector.broadcast %cst_155 : f32 to vector<8x128xf32>
    %417 = arith.addf %416, %415 : vector<8x128xf32>
    %cst_156 = arith.constant 5.000000e-01 : f32
    %418 = vector.broadcast %cst_156 : f32 to vector<8x128xf32>
    %419 = arith.mulf %418, %417 : vector<8x128xf32>
    %420 = arith.mulf %407, %419 : vector<8x128xf32>
    %421 = arith.truncf %420 : vector<8x128xf32> to vector<8x128xbf16>
    %c1_157 = arith.constant 1 : index
    %c0_158 = arith.constant 0 : index
    %c0_159 = arith.constant 0 : index
    %422 = vector.load %arg13[%c1_157, %c0_158, %c0_159] : memref<2x128x128xbf16, #tpu.memory_space<vmem>>, vector<1x128x128xbf16>
    %423 = vector.shape_cast %422 : vector<1x128x128xbf16> to vector<128x128xbf16>
    %cst_160 = arith.constant dense<0.000000e+00> : vector<8x128xf32>
    %424 = tpu.matmul %421, %423, %cst_160 {dimension_numbers = #tpu.dot_dimension_numbers<[1], [0], [0], [1], [0, 0, 1, 1], [], []>} : vector<8x128xbf16>, vector<128x128xbf16>, vector<8x128xf32> -> vector<8x128xf32>
    %c1_161 = arith.constant 1 : index
    %c0_162 = arith.constant 0 : index
    %c0_163 = arith.constant 0 : index
    %425 = vector.load %arg14[%c1_161, %c0_162, %c0_163] : memref<2x1x128xf32, #tpu.memory_space<vmem>>, vector<1x1x128xf32>
    %426 = vector.shape_cast %425 : vector<1x1x128xf32> to vector<1x128xf32>
    %427 = vector.broadcast %426 : vector<1x128xf32> to vector<8x128xf32>
    %428 = arith.addf %424, %427 : vector<8x128xf32>
    %429 = arith.addf %399, %428 : vector<8x128xf32>
    %c1_164 = arith.constant 1 : index
    %c0_165 = arith.constant 0 : index
    %c0_166 = arith.constant 0 : index
    %430 = vector.load %arg15[%c1_164, %c0_165, %c0_166] : memref<2x1x128xf32, #tpu.memory_space<vmem>>, vector<1x1x128xf32>
    %431 = vector.shape_cast %430 : vector<1x1x128xf32> to vector<1x128xf32>
    %c1_167 = arith.constant 1 : index
    %c0_168 = arith.constant 0 : index
    %c0_169 = arith.constant 0 : index
    %432 = vector.load %arg16[%c1_167, %c0_168, %c0_169] : memref<2x1x128xf32, #tpu.memory_space<vmem>>, vector<1x1x128xf32>
    %433 = vector.shape_cast %432 : vector<1x1x128xf32> to vector<1x128xf32>
    %434 = vector.broadcast %4 : vector<1x128xf32> to vector<8x128xf32>
    %435 = arith.mulf %429, %434 : vector<8x128xf32>
    %cst_170 = arith.constant dense<0.000000e+00> : vector<8xf32>
    %436 = vector.multi_reduction <add>, %435, %cst_170 [1] : vector<8x128xf32> to vector<8xf32>
    %437 = vector.shape_cast %436 : vector<8xf32> to vector<8x1xf32>
    %cst_171 = arith.constant 3.125000e-02 : f32
    %438 = vector.broadcast %cst_171 : f32 to vector<8x1xf32>
    %439 = arith.mulf %437, %438 : vector<8x1xf32>
    %440 = vector.broadcast %439 : vector<8x1xf32> to vector<8x128xf32>
    %441 = arith.subf %429, %440 : vector<8x128xf32>
    %442 = vector.broadcast %4 : vector<1x128xf32> to vector<8x128xf32>
    %443 = arith.mulf %441, %442 : vector<8x128xf32>
    %444 = arith.mulf %443, %443 : vector<8x128xf32>
    %cst_172 = arith.constant dense<0.000000e+00> : vector<8xf32>
    %445 = vector.multi_reduction <add>, %444, %cst_172 [1] : vector<8x128xf32> to vector<8xf32>
    %446 = vector.shape_cast %445 : vector<8xf32> to vector<8x1xf32>
    %cst_173 = arith.constant 3.125000e-02 : f32
    %447 = vector.broadcast %cst_173 : f32 to vector<8x1xf32>
    %448 = arith.mulf %446, %447 : vector<8x1xf32>
    %cst_174 = arith.constant 9.99999974E-6 : f32
    %449 = vector.broadcast %cst_174 : f32 to vector<8x1xf32>
    %450 = arith.addf %448, %449 : vector<8x1xf32>
    %451 = math.rsqrt %450 : vector<8x1xf32>
    %452 = vector.broadcast %451 : vector<8x1xf32> to vector<8x128xf32>
    %453 = arith.mulf %443, %452 : vector<8x128xf32>
    %454 = vector.broadcast %431 : vector<1x128xf32> to vector<8x128xf32>
    %455 = arith.mulf %453, %454 : vector<8x128xf32>
    %456 = vector.broadcast %433 : vector<1x128xf32> to vector<8x128xf32>
    %457 = arith.addf %455, %456 : vector<8x128xf32>
    %cst_175 = arith.constant dense<0.000000e+00> : vector<1x128xf32>
    %458 = tpu.matmul %6, %457, %cst_175 {dimension_numbers = #tpu.dot_dimension_numbers<[1], [0], [0], [1], [0, 0, 1, 1], [], []>} : vector<1x8xf32>, vector<8x128xf32>, vector<1x128xf32> -> vector<1x128xf32>
    %459 = arith.mulf %458, %458 : vector<1x128xf32>
    %cst_176 = arith.constant dense<0.000000e+00> : vector<1xf32>
    %460 = vector.multi_reduction <add>, %459, %cst_176 [1] : vector<1x128xf32> to vector<1xf32>
    %461 = vector.shape_cast %460 : vector<1xf32> to vector<1x1xf32>
    %462 = math.sqrt %461 : vector<1x1xf32>
    %cst_177 = arith.constant 9.99999996E-13 : f32
    %463 = vector.broadcast %cst_177 : f32 to vector<1x1xf32>
    %464 = arith.maximumf %462, %463 : vector<1x1xf32>
    %465 = vector.broadcast %464 : vector<1x1xf32> to vector<1x128xf32>
    %466 = arith.divf %458, %465 : vector<1x128xf32>
    %467 = vector.shape_cast %466 : vector<1x128xf32> to vector<1x1x128xf32>
    %c0_178 = arith.constant 0 : index
    %c0_179 = arith.constant 0 : index
    %c0_180 = arith.constant 0 : index
    %468 = vector.load %arg17[%c0_178, %c0_179, %c0_180] : memref<1x1x128xf32, #tpu.memory_space<vmem>>, vector<1x1x128xf32>
    tpu.vector_store %arg17[%c0_178, %c0_179, %c0_180], %467 {strides = array<i32>} : memref<1x1x128xf32, #tpu.memory_space<vmem>>, vector<1x1x128xf32>,
    return
  }
  func.func @transform_0(%arg0: i32) -> (i32, i32) {
    %c0_i32 = arith.constant 0 : i32
    %c0_i32_0 = arith.constant 0 : i32
    return %arg0, %c0_i32 : i32, i32
  }
  func.func @transform_1(%arg0: i32) -> (i32, i32, i32) {
    %c0_i32 = arith.constant 0 : i32
    %c0_i32_0 = arith.constant 0 : i32
    %c0_i32_1 = arith.constant 0 : i32
    return %arg0, %c0_i32, %c0_i32_0 : i32, i32, i32
  }
  func.func @transform_2(%arg0: i32) -> (i32, i32) {
    %c0_i32 = arith.constant 0 : i32
    %c0_i32_0 = arith.constant 0 : i32
    %c0_i32_1 = arith.constant 0 : i32
    return %c0_i32, %c0_i32_0 : i32, i32
  }
  func.func @transform_3(%arg0: i32) -> (i32, i32) {
    %c0_i32 = arith.constant 0 : i32
    %c0_i32_0 = arith.constant 0 : i32
    %c0_i32_1 = arith.constant 0 : i32
    return %c0_i32, %c0_i32_0 : i32, i32
  }
  func.func @transform_4(%arg0: i32) -> (i32, i32, i32) {
    %c0_i32 = arith.constant 0 : i32
    %c0_i32_0 = arith.constant 0 : i32
    %c0_i32_1 = arith.constant 0 : i32
    %c0_i32_2 = arith.constant 0 : i32
    return %c0_i32, %c0_i32_0, %c0_i32_1 : i32, i32, i32
  }
  func.func @transform_5(%arg0: i32) -> (i32, i32, i32) {
    %c0_i32 = arith.constant 0 : i32
    %c0_i32_0 = arith.constant 0 : i32
    %c0_i32_1 = arith.constant 0 : i32
    %c0_i32_2 = arith.constant 0 : i32
    return %c0_i32, %c0_i32_0, %c0_i32_1 : i32, i32, i32
  }
  func.func @transform_6(%arg0: i32) -> (i32, i32, i32) {
    %c0_i32 = arith.constant 0 : i32
    %c0_i32_0 = arith.constant 0 : i32
    %c0_i32_1 = arith.constant 0 : i32
    %c0_i32_2 = arith.constant 0 : i32
    return %c0_i32, %c0_i32_0, %c0_i32_1 : i32, i32, i32
  }
  func.func @transform_7(%arg0: i32) -> (i32, i32, i32) {
    %c0_i32 = arith.constant 0 : i32
    %c0_i32_0 = arith.constant 0 : i32
    %c0_i32_1 = arith.constant 0 : i32
    %c0_i32_2 = arith.constant 0 : i32
    return %c0_i32, %c0_i32_0, %c0_i32_1 : i32, i32, i32
  }
  func.func @transform_8(%arg0: i32) -> (i32, i32, i32) {
    %c0_i32 = arith.constant 0 : i32
    %c0_i32_0 = arith.constant 0 : i32
    %c0_i32_1 = arith.constant 0 : i32
    %c0_i32_2 = arith.constant 0 : i32
    return %c0_i32, %c0_i32_0, %c0_i32_1 : i32, i32, i32
  }
  func.func @transform_9(%arg0: i32) -> (i32, i32, i32) {
    %c0_i32 = arith.constant 0 : i32
    %c0_i32_0 = arith.constant 0 : i32
    %c0_i32_1 = arith.constant 0 : i32
    %c0_i32_2 = arith.constant 0 : i32
    return %c0_i32, %c0_i32_0, %c0_i32_1 : i32, i32, i32
  }
  func.func @transform_10(%arg0: i32) -> (i32, i32, i32) {
    %c0_i32 = arith.constant 0 : i32
    %c0_i32_0 = arith.constant 0 : i32
    %c0_i32_1 = arith.constant 0 : i32
    %c0_i32_2 = arith.constant 0 : i32
    return %c0_i32, %c0_i32_0, %c0_i32_1 : i32, i32, i32
  }
  func.func @transform_11(%arg0: i32) -> (i32, i32, i32) {
    %c0_i32 = arith.constant 0 : i32
    %c0_i32_0 = arith.constant 0 : i32
    %c0_i32_1 = arith.constant 0 : i32
    %c0_i32_2 = arith.constant 0 : i32
    return %c0_i32, %c0_i32_0, %c0_i32_1 : i32, i32, i32
  }
  func.func @transform_12(%arg0: i32) -> (i32, i32, i32) {
    %c0_i32 = arith.constant 0 : i32
    %c0_i32_0 = arith.constant 0 : i32
    %c0_i32_1 = arith.constant 0 : i32
    %c0_i32_2 = arith.constant 0 : i32
    return %c0_i32, %c0_i32_0, %c0_i32_1 : i32, i32, i32
  }
  func.func @transform_13(%arg0: i32) -> (i32, i32, i32) {
    %c0_i32 = arith.constant 0 : i32
    %c0_i32_0 = arith.constant 0 : i32
    %c0_i32_1 = arith.constant 0 : i32
    %c0_i32_2 = arith.constant 0 : i32
    return %c0_i32, %c0_i32_0, %c0_i32_1 : i32, i32, i32
  }
  func.func @transform_14(%arg0: i32) -> (i32, i32, i32) {
    %c0_i32 = arith.constant 0 : i32
    %c0_i32_0 = arith.constant 0 : i32
    %c0_i32_1 = arith.constant 0 : i32
    %c0_i32_2 = arith.constant 0 : i32
    return %c0_i32, %c0_i32_0, %c0_i32_1 : i32, i32, i32
  }
  func.func @transform_15(%arg0: i32) -> (i32, i32, i32) {
    %c0_i32 = arith.constant 0 : i32
    %c0_i32_0 = arith.constant 0 : i32
    %c0_i32_1 = arith.constant 0 : i32
    %c0_i32_2 = arith.constant 0 : i32
    return %c0_i32, %c0_i32_0, %c0_i32_1 : i32, i32, i32
  }
  func.func @transform_16(%arg0: i32) -> (i32, i32, i32) {
    %c0_i32 = arith.constant 0 : i32
    %c0_i32_0 = arith.constant 0 : i32
    %c0_i32_1 = arith.constant 0 : i32
    return %arg0, %c0_i32, %c0_i32_0 : i32, i32, i32
  }
}

</mosaic_0001>

<llo_original>
// kernel: text_encoder_forward.1
$region0: #{text_encoder_forward.1}
  #allocation0 [shape = 'u32[]', space=smem, size = 0x4, offset = 0x4, fixed_abs, tag = 'smem constant byte address 0x4 - core index']
  #allocation1 [shape = 'u32[144,128]{1,0:T(1,128)}', space=vmem, size = 0x12000, scoped, tag = 'internal scratch']
  %s0 = inlined_call_operand.vmem [shape: f32[16,128], index: 0, kind: input, shape index: {}]
  %s1 = inlined_call_operand.vmem [shape: f32[2,1,8], index: 1, kind: input, shape index: {}]
  %s2 = inlined_call_operand.vmem [shape: f32[1,128], index: 2, kind: input, shape index: {}]
  %s3 = inlined_call_operand.vmem [shape: f32[1,128], index: 3, kind: input, shape index: {}]
  %s4 = inlined_call_operand.vmem [shape: bf16[2,128,384], index: 4, kind: input, shape index: {}]
  %s5 = inlined_call_operand.vmem [shape: f32[2,1,384], index: 5, kind: input, shape index: {}]
  %s6 = inlined_call_operand.vmem [shape: bf16[2,128,128], index: 6, kind: input, shape index: {}]
  %s7 = inlined_call_operand.vmem [shape: f32[2,1,128], index: 7, kind: input, shape index: {}]
  %s8 = inlined_call_operand.vmem [shape: f32[2,1,128], index: 8, kind: input, shape index: {}]
  %s9 = inlined_call_operand.vmem [shape: f32[2,1,128], index: 9, kind: input, shape index: {}]
  %s10 = inlined_call_operand.vmem [shape: bf16[2,128,128], index: 10, kind: input, shape index: {}]
  %s11 = inlined_call_operand.vmem [shape: f32[2,1,128], index: 11, kind: input, shape index: {}]
  %s12 = inlined_call_operand.vmem [shape: bf16[2,128,128], index: 12, kind: input, shape index: {}]
  %s13 = inlined_call_operand.vmem [shape: f32[2,1,128], index: 13, kind: input, shape index: {}]
  %s14 = inlined_call_operand.vmem [shape: f32[2,1,128], index: 14, kind: input, shape index: {}]
  %s15 = inlined_call_operand.vmem [shape: f32[2,1,128], index: 15, kind: input, shape index: {}]
  %s16 = inlined_call_operand.hbm [shape: f32[2,1,128], index: 16, kind: output, shape index: {}]
  %s17 = sld [smem:[#allocation0]]
  $region97: #{text_encoder_forward.1} parent=0
    _
  %s19 = ssub.s32 1, %s17
  %s20 = scalar_select 0, %s19, %s17
  $region1: #{text_encoder_forward.1} parent=0
    #allocation2 [shape = 'u8[1024]{0}', space=vmem, size = 0x400, scoped, tag = 'output window, operand 0']
    #allocation3 [shape = 's32[2]{0}', space=sflag, size = 0x8, scoped, tag = 'scoped memory for text_encoder_forward.1']
    %21 = vsyncpa [#allocation3], 0
    %s22 = scalar_lea.sflag [#allocation3], 1
    %23 = vsyncpa %s22, 0
    loop: start=0, step=1, limit=4
    $region2: #{text_encoder_forward.1} parent=1 // loop_pre_header
      _
    $region3: #{text_encoder_forward.1} parent=1 // loop_header
      %s25 = sphi 0, %s29
      %p26 = scmp.ge.s32.totalorder %s25, 4
      %s35 = sphi 0, %s37
      %s38 = sphi 0, %s35
      %s39 = sphi 0, %s38
      %s55 = sphi 0, %s39
      %s61 = sphi 0, %s63
      %s64 = sphi 0, %s61
      %s65 = sphi 0, %s64
      %s81 = sphi 0, %s65
      %s85 = sphi 0, %s85
      %s87 = sphi 0, %s85
      %s88 = sphi 0, %s87
      %s102 = sphi 0, %s88
      %s106 = sphi 0, %s106
      %s108 = sphi 0, %s106
      %s109 = sphi 0, %s108
      %s123 = sphi 0, %s109
      %s127 = sphi 0, %s127
      %s129 = sphi 0, %s127
      %s130 = sphi 0, %s129
      %s144 = sphi 0, %s130
      %s148 = sphi 0, %s148
      %s150 = sphi 0, %s148
      %s151 = sphi 0, %s150
      %s165 = sphi 0, %s151
      %s169 = sphi 0, %s169
      %s171 = sphi 0, %s169
      %s172 = sphi 0, %s171
      %s186 = sphi 0, %s172
      %s190 = sphi 0, %s190
      %s192 = sphi 0, %s190
      %s193 = sphi 0, %s192
      %s207 = sphi 0, %s193
      %s211 = sphi 0, %s211
      %s213 = sphi 0, %s211
      %s214 = sphi 0, %s213
      %s228 = sphi 0, %s214
      %s232 = sphi 0, %s232
      %s234 = sphi 0, %s232
      %s235 = sphi 0, %s234
      %s249 = sphi 0, %s235
      %s253 = sphi 0, %s253
      %s255 = sphi 0, %s253
      %s256 = sphi 0, %s255
      %s270 = sphi 0, %s256
      %s274 = sphi 0, %s274
      %s276 = sphi 0, %s274
      %s277 = sphi 0, %s276
      %s291 = sphi 0, %s277
      %s295 = sphi 0, %s295
      %s297 = sphi 0, %s295
      %s298 = sphi 0, %s297
      %s312 = sphi 0, %s298
      %s316 = sphi 0, %s316
      %s318 = sphi 0, %s316
      %s319 = sphi 0, %s318
      %s333 = sphi 0, %s319
      %s337 = sphi 0, %s337
      %s339 = sphi 0, %s337
      %s340 = sphi 0, %s339
      %s354 = sphi 0, %s340
      %s358 = sphi 0, %s358
      %s360 = sphi 0, %s358
      %s361 = sphi 0, %s360
      %s375 = sphi 0, %s361
      %s381 = sphi 0, %s383
      %s384 = sphi 0, %s381
      %s385 = sphi 0, %s384
      %s401 = sphi 0, %s385
    $region4: #{text_encoder_forward.1} parent=1 // loop_header_branch
      %28 = sbr.rel (%p26) target = $region8
    $region5: #{text_encoder_forward.1} parent=1 // loop_body
      %s30 = ssub.s32 %s25, 1
      %s31 = ssub.s32 %s25, 2
      %s32 = sadd.s32 %s25, 1
      %s33 = ssub.s32 %s25, %s32
      %p34 = scmp.eq.s32.totalorder %s33, 0
      %s36 = sadd.s32 %s35, 1
      %s37 = scalar_select %p34, %s35, %s36
      %p40 = pneg %p34
      %p41 = scmp.eq.s32.totalorder %s25, 1
      %p42 = por %p40, %p41
      %p43 = scmp.ne.s32.totalorder %s35, %s38
      %p44 = scmp.eq.s32.totalorder %s25, 0
      %p45 = por %p43, %p44
      %p46 = scmp.ne.s32.totalorder %s35, %s38
      %p47 = scmp.eq.s32.totalorder %s30, 1
      %p48 = por %p46, %p47
      %p49 = scmp.ne.s32.totalorder %s38, %s39
      %p50 = scmp.eq.s32.totalorder %s30, 0
      %p51 = por %p49, %p50
      %p52 = scmp.ne.s32.totalorder %s38, %s39
      %p53 = scmp.eq.s32.totalorder %s31, 1
      %p54 = por %p52, %p53
      %p56 = scmp.ne.s32.totalorder %s39, %s55
      %p57 = scmp.eq.s32.totalorder %s31, 0
      %p58 = por %p56, %p57
      %s59 = ssub.s32 %s25, %s32
      %p60 = scmp.eq.s32.totalorder %s59, 0
      %s62 = sadd.s32 %s61, 1
      %s63 = scalar_select %p60, %s61, %s62
      %p66 = pneg %p60
      %p67 = scmp.eq.s32.totalorder %s25, 1
      %p68 = por %p66, %p67
      %p69 = scmp.ne.s32.totalorder %s61, %s64
      %p70 = scmp.eq.s32.totalorder %s25, 0
      %p71 = por %p69, %p70
      %p72 = scmp.ne.s32.totalorder %s61, %s64
      %p73 = scmp.eq.s32.totalorder %s30, 1
      %p74 = por %p72, %p73
      %p75 = scmp.ne.s32.totalorder %s64, %s65
      %p76 = scmp.eq.s32.totalorder %s30, 0
      %p77 = por %p75, %p76
      %p78 = scmp.ne.s32.totalorder %s64, %s65
      %p79 = scmp.eq.s32.totalorder %s31, 1
      %p80 = por %p78, %p79
      %p82 = scmp.ne.s32.totalorder %s65, %s81
      %p83 = scmp.eq.s32.totalorder %s31, 0
      %p84 = por %p82, %p83
      %s86 = sadd.s32 %s85, 1
      %p89 = scmp.eq.s32.totalorder %s25, 1
      %p90 = scmp.ne.s32.totalorder %s85, %s87
      %p91 = scmp.eq.s32.totalorder %s25, 0
      %p92 = por %p90, %p91
      %p93 = scmp.ne.s32.totalorder %s85, %s87
      %p94 = scmp.eq.s32.totalorder %s30, 1
      %p95 = por %p93, %p94
      %p96 = scmp.ne.s32.totalorder %s87, %s88
      %p97 = scmp.eq.s32.totalorder %s30, 0
      %p98 = por %p96, %p97
      %p99 = scmp.ne.s32.totalorder %s87, %s88
      %p100 = scmp.eq.s32.totalorder %s31, 1
      %p101 = por %p99, %p100
      %p103 = scmp.ne.s32.totalorder %s88, %s102
      %p104 = scmp.eq.s32.totalorder %s31, 0
      %p105 = por %p103, %p104
      %s107 = sadd.s32 %s106, 1
      %p110 = scmp.eq.s32.totalorder %s25, 1
      %p111 = scmp.ne.s32.totalorder %s106, %s108
      %p112 = scmp.eq.s32.totalorder %s25, 0
      %p113 = por %p111, %p112
      %p114 = scmp.ne.s32.totalorder %s106, %s108
      %p115 = scmp.eq.s32.totalorder %s30, 1
      %p116 = por %p114, %p115
      %p117 = scmp.ne.s32.totalorder %s108, %s109
      %p118 = scmp.eq.s32.totalorder %s30, 0
      %p119 = por %p117, %p118
      %p120 = scmp.ne.s32.totalorder %s108, %s109
      %p121 = scmp.eq.s32.totalorder %s31, 1
      %p122 = por %p120, %p121
      %p124 = scmp.ne.s32.totalorder %s109, %s123
      %p125 = scmp.eq.s32.totalorder %s31, 0
      %p126 = por %p124, %p125
      %s128 = sadd.s32 %s127, 1
      %p131 = scmp.eq.s32.totalorder %s25, 1
      %p132 = scmp.ne.s32.totalorder %s127, %s129
      %p133 = scmp.eq.s32.totalorder %s25, 0
      %p134 = por %p132, %p133
      %p135 = scmp.ne.s32.totalorder %s127, %s129
      %p136 = scmp.eq.s32.totalorder %s30, 1
      %p137 = por %p135, %p136
      %p138 = scmp.ne.s32.totalorder %s129, %s130
      %p139 = scmp.eq.s32.totalorder %s30, 0
      %p140 = por %p138, %p139
      %p141 = scmp.ne.s32.totalorder %s129, %s130
      %p142 = scmp.eq.s32.totalorder %s31, 1
      %p143 = por %p141, %p142
      %p145 = scmp.ne.s32.totalorder %s130, %s144
      %p146 = scmp.eq.s32.totalorder %s31, 0
      %p147 = por %p145, %p146
      %s149 = sadd.s32 %s148, 1
      %p152 = scmp.eq.s32.totalorder %s25, 1
      %p153 = scmp.ne.s32.totalorder %s148, %s150
      %p154 = scmp.eq.s32.totalorder %s25, 0
      %p155 = por %p153, %p154
      %p156 = scmp.ne.s32.totalorder %s148, %s150
      %p157 = scmp.eq.s32.totalorder %s30, 1
      %p158 = por %p156, %p157
      %p159 = scmp.ne.s32.totalorder %s150, %s151
      %p160 = scmp.eq.s32.totalorder %s30, 0
      %p161 = por %p159, %p160
      %p162 = scmp.ne.s32.totalorder %s150, %s151
      %p163 = scmp.eq.s32.totalorder %s31, 1
      %p164 = por %p162, %p163
      %p166 = scmp.ne.s32.totalorder %s151, %s165
      %p167 = scmp.eq.s32.totalorder %s31, 0
      %p168 = por %p166, %p167
      %s170 = sadd.s32 %s169, 1
      %p173 = scmp.eq.s32.totalorder %s25, 1
      %p174 = scmp.ne.s32.totalorder %s169, %s171
      %p175 = scmp.eq.s32.totalorder %s25, 0
      %p176 = por %p174, %p175
      %p177 = scmp.ne.s32.totalorder %s169, %s171
      %p178 = scmp.eq.s32.totalorder %s30, 1
      %p179 = por %p177, %p178
      %p180 = scmp.ne.s32.totalorder %s171, %s172
      %p181 = scmp.eq.s32.totalorder %s30, 0
      %p182 = por %p180, %p181
      %p183 = scmp.ne.s32.totalorder %s171, %s172
      %p184 = scmp.eq.s32.totalorder %s31, 1
      %p185 = por %p183, %p184
      %p187 = scmp.ne.s32.totalorder %s172, %s186
      %p188 = scmp.eq.s32.totalorder %s31, 0
      %p189 = por %p187, %p188
      %s191 = sadd.s32 %s190, 1
      %p194 = scmp.eq.s32.totalorder %s25, 1
      %p195 = scmp.ne.s32.totalorder %s190, %s192
      %p196 = scmp.eq.s32.totalorder %s25, 0
      %p197 = por %p195, %p196
      %p198 = scmp.ne.s32.totalorder %s190, %s192
      %p199 = scmp.eq.s32.totalorder %s30, 1
      %p200 = por %p198, %p199
      %p201 = scmp.ne.s32.totalorder %s192, %s193
      %p202 = scmp.eq.s32.totalorder %s30, 0
      %p203 = por %p201, %p202
      %p204 = scmp.ne.s32.totalorder %s192, %s193
      %p205 = scmp.eq.s32.totalorder %s31, 1
      %p206 = por %p204, %p205
      %p208 = scmp.ne.s32.totalorder %s193, %s207
      %p209 = scmp.eq.s32.totalorder %s31, 0
      %p210 = por %p208, %p209
      %s212 = sadd.s32 %s211, 1
      %p215 = scmp.eq.s32.totalorder %s25, 1
      %p216 = scmp.ne.s32.totalorder %s211, %s213
      %p217 = scmp.eq.s32.totalorder %s25, 0
      %p218 = por %p216, %p217
      %p219 = scmp.ne.s32.totalorder %s211, %s213
      %p220 = scmp.eq.s32.totalorder %s30, 1
      %p221 = por %p219, %p220
      %p222 = scmp.ne.s32.totalorder %s213, %s214
      %p223 = scmp.eq.s32.totalorder %s30, 0
      %p224 = por %p222, %p223
      %p225 = scmp.ne.s32.totalorder %s213, %s214
      %p226 = scmp.eq.s32.totalorder %s31, 1
      %p227 = por %p225, %p226
      %p229 = scmp.ne.s32.totalorder %s214, %s228
      %p230 = scmp.eq.s32.totalorder %s31, 0
      %p231 = por %p229, %p230
      %s233 = sadd.s32 %s232, 1
      %p236 = scmp.eq.s32.totalorder %s25, 1
      %p237 = scmp.ne.s32.totalorder %s232, %s234
      %p238 = scmp.eq.s32.totalorder %s25, 0
      %p239 = por %p237, %p238
      %p240 = scmp.ne.s32.totalorder %s232, %s234
      %p241 = scmp.eq.s32.totalorder %s30, 1
      %p242 = por %p240, %p241
      %p243 = scmp.ne.s32.totalorder %s234, %s235
      %p244 = scmp.eq.s32.totalorder %s30, 0
      %p245 = por %p243, %p244
      %p246 = scmp.ne.s32.totalorder %s234, %s235
      %p247 = scmp.eq.s32.totalorder %s31, 1
      %p248 = por %p246, %p247
      %p250 = scmp.ne.s32.totalorder %s235, %s249
      %p251 = scmp.eq.s32.totalorder %s31, 0
      %p252 = por %p250, %p251
      %s254 = sadd.s32 %s253, 1
      %p257 = scmp.eq.s32.totalorder %s25, 1
      %p258 = scmp.ne.s32.totalorder %s253, %s255
      %p259 = scmp.eq.s32.totalorder %s25, 0
      %p260 = por %p258, %p259
      %p261 = scmp.ne.s32.totalorder %s253, %s255
      %p262 = scmp.eq.s32.totalorder %s30, 1
      %p263 = por %p261, %p262
      %p264 = scmp.ne.s32.totalorder %s255, %s256
      %p265 = scmp.eq.s32.totalorder %s30, 0
      %p266 = por %p264, %p265
      %p267 = scmp.ne.s32.totalorder %s255, %s256
      %p268 = scmp.eq.s32.totalorder %s31, 1
      %p269 = por %p267, %p268
      %p271 = scmp.ne.s32.totalorder %s256, %s270
      %p272 = scmp.eq.s32.totalorder %s31, 0
      %p273 = por %p271, %p272
      %s275 = sadd.s32 %s274, 1
      %p278 = scmp.eq.s32.totalorder %s25, 1
      %p279 = scmp.ne.s32.totalorder %s274, %s276
      %p280 = scmp.eq.s32.totalorder %s25, 0
      %p281 = por %p279, %p280
      %p282 = scmp.ne.s32.totalorder %s274, %s276
      %p283 = scmp.eq.s32.totalorder %s30, 1
      %p284 = por %p282, %p283
      %p285 = scmp.ne.s32.totalorder %s276, %s277
      %p286 = scmp.eq.s32.totalorder %s30, 0
      %p287 = por %p285, %p286
      %p288 = scmp.ne.s32.totalorder %s276, %s277
      %p289 = scmp.eq.s32.totalorder %s31, 1
      %p290 = por %p288, %p289
      %p292 = scmp.ne.s32.totalorder %s277, %s291
      %p293 = scmp.eq.s32.totalorder %s31, 0
      %p294 = por %p292, %p293
      %s296 = sadd.s32 %s295, 1
      %p299 = scmp.eq.s32.totalorder %s25, 1
      %p300 = scmp.ne.s32.totalorder %s295, %s297
      %p301 = scmp.eq.s32.totalorder %s25, 0
      %p302 = por %p300, %p301
      %p303 = scmp.ne.s32.totalorder %s295, %s297
      %p304 = scmp.eq.s32.totalorder %s30, 1
      %p305 = por %p303, %p304
      %p306 = scmp.ne.s32.totalorder %s297, %s298
      %p307 = scmp.eq.s32.totalorder %s30, 0
      %p308 = por %p306, %p307
      %p309 = scmp.ne.s32.totalorder %s297, %s298
      %p310 = scmp.eq.s32.totalorder %s31, 1
      %p311 = por %p309, %p310
      %p313 = scmp.ne.s32.totalorder %s298, %s312
      %p314 = scmp.eq.s32.totalorder %s31, 0
      %p315 = por %p313, %p314
      %s317 = sadd.s32 %s316, 1
      %p320 = scmp.eq.s32.totalorder %s25, 1
      %p321 = scmp.ne.s32.totalorder %s316, %s318
      %p322 = scmp.eq.s32.totalorder %s25, 0
      %p323 = por %p321, %p322
      %p324 = scmp.ne.s32.totalorder %s316, %s318
      %p325 = scmp.eq.s32.totalorder %s30, 1
      %p326 = por %p324, %p325
      %p327 = scmp.ne.s32.totalorder %s318, %s319
      %p328 = scmp.eq.s32.totalorder %s30, 0
      %p329 = por %p327, %p328
      %p330 = scmp.ne.s32.totalorder %s318, %s319
      %p331 = scmp.eq.s32.totalorder %s31, 1
      %p332 = por %p330, %p331
      %p334 = scmp.ne.s32.totalorder %s319, %s333
      %p335 = scmp.eq.s32.totalorder %s31, 0
      %p336 = por %p334, %p335
      %s338 = sadd.s32 %s337, 1
      %p341 = scmp.eq.s32.totalorder %s25, 1
      %p342 = scmp.ne.s32.totalorder %s337, %s339
      %p343 = scmp.eq.s32.totalorder %s25, 0
      %p344 = por %p342, %p343
      %p345 = scmp.ne.s32.totalorder %s337, %s339
      %p346 = scmp.eq.s32.totalorder %s30, 1
      %p347 = por %p345, %p346
      %p348 = scmp.ne.s32.totalorder %s339, %s340
      %p349 = scmp.eq.s32.totalorder %s30, 0
      %p350 = por %p348, %p349
      %p351 = scmp.ne.s32.totalorder %s339, %s340
      %p352 = scmp.eq.s32.totalorder %s31, 1
      %p353 = por %p351, %p352
      %p355 = scmp.ne.s32.totalorder %s340, %s354
      %p356 = scmp.eq.s32.totalorder %s31, 0
      %p357 = por %p355, %p356
      %s359 = sadd.s32 %s358, 1
      %p362 = scmp.eq.s32.totalorder %s25, 1
      %p363 = scmp.ne.s32.totalorder %s358, %s360
      %p364 = scmp.eq.s32.totalorder %s25, 0
      %p365 = por %p363, %p364
      %p366 = scmp.ne.s32.totalorder %s358, %s360
      %p367 = scmp.eq.s32.totalorder %s30, 1
      %p368 = por %p366, %p367
      %p369 = scmp.ne.s32.totalorder %s360, %s361
      %p370 = scmp.eq.s32.totalorder %s30, 0
      %p371 = por %p369, %p370
      %p372 = scmp.ne.s32.totalorder %s360, %s361
      %p373 = scmp.eq.s32.totalorder %s31, 1
      %p374 = por %p372, %p373
      %p376 = scmp.ne.s32.totalorder %s361, %s375
      %p377 = scmp.eq.s32.totalorder %s31, 0
      %p378 = por %p376, %p377
      %s379 = ssub.s32 %s25, %s32
      %p380 = scmp.eq.s32.totalorder %s379, 0
      %s382 = sadd.s32 %s381, 1
      %s383 = scalar_select %p380, %s381, %s382
      %p386 = pneg %p380
      %p387 = scmp.eq.s32.totalorder %s25, 1
      %p388 = por %p386, %p387
      %p389 = scmp.ne.s32.totalorder %s381, %s384
      %p390 = scmp.eq.s32.totalorder %s25, 0
      %p391 = por %p389, %p390
      %p392 = scmp.ne.s32.totalorder %s381, %s384
      %p393 = scmp.eq.s32.totalorder %s30, 1
      %p394 = por %p392, %p393
      %p395 = scmp.ne.s32.totalorder %s384, %s385
      %p396 = scmp.eq.s32.totalorder %s30, 0
      %p397 = por %p395, %p396
      %p398 = scmp.ne.s32.totalorder %s384, %s385
      %p399 = scmp.eq.s32.totalorder %s31, 1
      %p400 = por %p398, %p399
      %p402 = scmp.ne.s32.totalorder %s385, %s401
      %p403 = scmp.eq.s32.totalorder %s31, 0
      %p404 = por %p402, %p403
      %p405 = scmp.le.s32.totalorder 1, %s25
      %p406 = scmp.lt.s32.totalorder %s25, 3
      %p407 = pnand %p405, %p406
      %p408 = pneg %p407
      // Predicated region
      $region9: #{text_encoder_forward.1} parent=5 // pred_check
        _
      $region10: #{text_encoder_forward.1} parent=5 // pred_check_branch
        %410 = sbr.rel (%p407) target = $region12
      $region11: #{text_encoder_forward.1} parent=5 // pred_region
        %s411 = ssub.s32 %s25, 1
        // Predicated region
        $region13: #{text_encoder_forward.1} parent=11 // pred_check
          %p412 = pneg %p98
        $region14: #{text_encoder_forward.1} parent=11 // pred_check_branch
          %414 = sbr.rel (%p412) target = $region16
        $region15: #{text_encoder_forward.1} parent=11 // pred_region
          _
        $region16: #{text_encoder_forward.1} parent=11 // pred_fallthru
          _
        // Predicated region
        $region17: #{text_encoder_forward.1} parent=11 // pred_check
          %p415 = pneg %p119
        $region18: #{text_encoder_forward.1} parent=11 // pred_check_branch
          %417 = sbr.rel (%p415) target = $region20
        $region19: #{text_encoder_forward.1} parent=11 // pred_region
          _
        $region20: #{text_encoder_forward.1} parent=11 // pred_fallthru
          _
        // Predicated region
        $region21: #{text_encoder_forward.1} parent=11 // pred_check
          %p418 = pneg %p140
        $region22: #{text_encoder_forward.1} parent=11 // pred_check_branch
          %420 = sbr.rel (%p418) target = $region24
        $region23: #{text_encoder_forward.1} parent=11 // pred_region
          _
        $region24: #{text_encoder_forward.1} parent=11 // pred_fallthru
          _
        // Predicated region
        $region25: #{text_encoder_forward.1} parent=11 // pred_check
          %p421 = pneg %p161
        $region26: #{text_encoder_forward.1} parent=11 // pred_check_branch
          %423 = sbr.rel (%p421) target = $region28
        $region27: #{text_encoder_forward.1} parent=11 // pred_region
          _
        $region28: #{text_encoder_forward.1} parent=11 // pred_fallthru
          _
        // Predicated region
        $region29: #{text_encoder_forward.1} parent=11 // pred_check
          %p424 = pneg %p182
        $region30: #{text_encoder_forward.1} parent=11 // pred_check_branch
          %426 = sbr.rel (%p424) target = $region32
        $region31: #{text_encoder_forward.1} parent=11 // pred_region
          _
        $region32: #{text_encoder_forward.1} parent=11 // pred_fallthru
          _
        // Predicated region
        $region33: #{text_encoder_forward.1} parent=11 // pred_check
          %p427 = pneg %p203
        $region34: #{text_encoder_forward.1} parent=11 // pred_check_branch
          %429 = sbr.rel (%p427) target = $region36
        $region35: #{text_encoder_forward.1} parent=11 // pred_region
          _
        $region36: #{text_encoder_forward.1} parent=11 // pred_fallthru
          _
        // Predicated region
        $region37: #{text_encoder_forward.1} parent=11 // pred_check
          %p430 = pneg %p224
        $region38: #{text_encoder_forward.1} parent=11 // pred_check_branch
          %432 = sbr.rel (%p430) target = $region40
        $region39: #{text_encoder_forward.1} parent=11 // pred_region
          _
        $region40: #{text_encoder_forward.1} parent=11 // pred_fallthru
          _
        // Predicated region
        $region41: #{text_encoder_forward.1} parent=11 // pred_check
          %p433 = pneg %p245
        $region42: #{text_encoder_forward.1} parent=11 // pred_check_branch
          %435 = sbr.rel (%p433) target = $region44
        $region43: #{text_encoder_forward.1} parent=11 // pred_region
          _
        $region44: #{text_encoder_forward.1} parent=11 // pred_fallthru
          _
        // Predicated region
        $region45: #{text_encoder_forward.1} parent=11 // pred_check
          %p436 = pneg %p266
        $region46: #{text_encoder_forward.1} parent=11 // pred_check_branch
          %438 = sbr.rel (%p436) target = $region48
        $region47: #{text_encoder_forward.1} parent=11 // pred_region
          _
        $region48: #{text_encoder_forward.1} parent=11 // pred_fallthru
          _
        // Predicated region
        $region49: #{text_encoder_forward.1} parent=11 // pred_check
          %p439 = pneg %p287
        $region50: #{text_encoder_forward.1} parent=11 // pred_check_branch
          %441 = sbr.rel (%p439) target = $region52
        $region51: #{text_encoder_forward.1} parent=11 // pred_region
          _
        $region52: #{text_encoder_forward.1} parent=11 // pred_fallthru
          _
        // Predicated region
        $region53: #{text_encoder_forward.1} parent=11 // pred_check
          %p442 = pneg %p308
        $region54: #{text_encoder_forward.1} parent=11 // pred_check_branch
          %444 = sbr.rel (%p442) target = $region56
        $region55: #{text_encoder_forward.1} parent=11 // pred_region
          _
        $region56: #{text_encoder_forward.1} parent=11 // pred_fallthru
          _
        // Predicated region
        $region57: #{text_encoder_forward.1} parent=11 // pred_check
          %p445 = pneg %p329
        $region58: #{text_encoder_forward.1} parent=11 // pred_check_branch
          %447 = sbr.rel (%p445) target = $region60
        $region59: #{text_encoder_forward.1} parent=11 // pred_region
          _
        $region60: #{text_encoder_forward.1} parent=11 // pred_fallthru
          _
        // Predicated region
        $region61: #{text_encoder_forward.1} parent=11 // pred_check
          %p448 = pneg %p350
        $region62: #{text_encoder_forward.1} parent=11 // pred_check_branch
          %450 = sbr.rel (%p448) target = $region64
        $region63: #{text_encoder_forward.1} parent=11 // pred_region
          _
        $region64: #{text_encoder_forward.1} parent=11 // pred_fallthru
          _
        // Predicated region
        $region65: #{text_encoder_forward.1} parent=11 // pred_check
          %p451 = pneg %p371
        $region66: #{text_encoder_forward.1} parent=11 // pred_check_branch
          %453 = sbr.rel (%p451) target = $region68
        $region67: #{text_encoder_forward.1} parent=11 // pred_region
          _
        $region68: #{text_encoder_forward.1} parent=11 // pred_fallthru
          _
      $region12: #{text_encoder_forward.1} parent=5 // pred_fallthru
        _
      %p454 = scmp.lt.s32.totalorder %s25, 2
      // Predicated region
      $region69: #{text_encoder_forward.1} parent=5 // pred_check
        %p455 = pneg %p454
      $region70: #{text_encoder_forward.1} parent=5 // pred_check_branch
        %457 = sbr.rel (%p455) target = $region72
      $region71: #{text_encoder_forward.1} parent=5 // pred_region
        // Predicated region
        $region73: #{text_encoder_forward.1} parent=71 // pred_check
          %p458 = pneg %p45
        $region74: #{text_encoder_forward.1} parent=71 // pred_check_branch
          %460 = sbr.rel (%p458) target = $region76
        $region75: #{text_encoder_forward.1} parent=71 // pred_region
          %p461 = scmp.lt.s32.totalorder %s25, 1
          %s462 = scalar_select %p461, %s25, 1
          %s463 = smul.addr %s462, 8
          %s464 = scalar_lea.vmem %s0, %s463
        $region76: #{text_encoder_forward.1} parent=71 // pred_fallthru
          _
        // Predicated region
        $region77: #{text_encoder_forward.1} parent=71 // pred_check
          %p465 = pneg %p71
        $region78: #{text_encoder_forward.1} parent=71 // pred_check_branch
          %467 = sbr.rel (%p465) target = $region80
        $region79: #{text_encoder_forward.1} parent=71 // pred_region
          %p468 = scmp.lt.s32.totalorder %s25, 1
          %s469 = scalar_select %p468, %s25, 1
          %s470 = scalar_lea.vmem %s1, %s469
        $region80: #{text_encoder_forward.1} parent=71 // pred_fallthru
          _
      $region72: #{text_encoder_forward.1} parent=5 // pred_fallthru
        _
      %p471 = scmp.le.s32.totalorder 1, %s25
      %p472 = scmp.lt.s32.totalorder %s25, 3
      %p473 = pnand %p471, %p472
      %p474 = pneg %p473
      // Predicated region
      $region81: #{text_encoder_forward.1} parent=5 // pred_check
        _
      $region82: #{text_encoder_forward.1} parent=5 // pred_check_branch
        %476 = sbr.rel (%p473) target = $region84
      $region83: #{text_encoder_forward.1} parent=5 // pred_region
        %s477 = ssub.s32 %s25, 1
        %p478 = scmp.lt.s32.totalorder %s30, 1
        %s479 = scalar_select %p478, %s30, 1
        %s480 = smul.addr %s479, 8
        %s481 = scalar_lea.vmem %s0, %s480
        %p482 = pneg %p51
        %p483 = pneg %p48
        %p484 = scmp.lt.s32.totalorder %s30, 1
        %s485 = scalar_select %p484, %s30, 1
        %s486 = scalar_lea.vmem %s1, %s485
        %p487 = pneg %p77
        %p488 = pneg %p74
        %p489 = pneg %p98
        %p490 = pneg %p95
        %p491 = pneg %p119
        %p492 = pneg %p116
        %p493 = pneg %p140
        %p494 = pneg %p137
        %p495 = pneg %p161
        %p496 = pneg %p158
        %p497 = pneg %p182
        %p498 = pneg %p179
        %p499 = pneg %p203
        %p500 = pneg %p200
        %p501 = pneg %p224
        %p502 = pneg %p221
        %p503 = pneg %p245
        %p504 = pneg %p242
        %p505 = pneg %p266
        %p506 = pneg %p263
        %p507 = pneg %p287
        %p508 = pneg %p284
        %p509 = pneg %p308
        %p510 = pneg %p305
        %p511 = pneg %p329
        %p512 = pneg %p326
        %p513 = pneg %p350
        %p514 = pneg %p347
        %p515 = pneg %p371
        %p516 = pneg %p368
        %p517 = pneg %p397
        %p518 = pneg %p394
        %s519 = sand.u32 %s384, 1
        %s520 = scalar_lea.sflag [#allocation3], %s519
        %s521 = sand.u32 %s384, 1
        %s522 = scalar_lea.vmem [#allocation2], %s521
        %p523 = scmp.lt.s32.totalorder %s30, 1
        %s524 = scalar_select %p523, %s30, 1
        %s525 = smul.addr %s524, 8
        %s526 = scalar_lea.vmem %s0, %s525
        %p527 = scmp.lt.s32.totalorder %s30, 1
        %s528 = scalar_select %p527, %s30, 1
        %s529 = scalar_lea.vmem %s1, %s528
        %v531 = vlaneseq
        %v532 = vand.u32 %v531, 127
        %vm533 = vcmp.lt.s32.totalorder %v532, 32
        %v534 = vsel %vm533, 1, 0
        %v535 = vcvt.s32.f32 %v534
        %v536 = vld [vmem:[%s529] sm:$0x1]
        %v537 = vld [vmem:[%s526] sm:$0xff]
        %v538 = vld [vmem:[%s2] sm:$0x1]
        %v539 = vld [vmem:[%s3] sm:$0x1]
        %v540 = vmul.f32 %v537, %v535
        %541 = vadd.xlane.f32.xlu0 %v540
        %v542 = vpop.xlane.xlu0 %541
        %v543 = vmul.f32 %v542, 0.03125
        %v544 = vsub.f32 %v537, %v543
        %v545 = vmul.f32 %v544, %v535
        %v546 = vmul.f32 %v545, %v545
        %547 = vadd.xlane.f32.xlu0 %v546
        %v548 = vpop.xlane.xlu0 %547
        %v549 = vmul.f32 %v548, 0.03125
        %v550 = vadd.f32 %v549, 1e-05
        %v551 = vrsqrt.pop %v550
        %v552 = vmul.f32 %v545, %v551
        %v554 = vlaneseq
        %v555 = vshrl.u32 %v554, 7
        %v556 = vsub.s32 0, %v555
        %v557 = vrot.slane %v538, %v556
        %v559 = vmul.f32 %v552, %v557
        %v561 = vlaneseq
        %v562 = vshrl.u32 %v561, 7
        %v563 = vsub.s32 0, %v562
        %v564 = vrot.slane %v539, %v563
        %v566 = vadd.f32 %v559, %v564
        %v567 = vpack.c.bf16 %v566, %v566
        %v568 = vld [vmem:[%s4] sm:$0xff]
        %v569 = vld [vmem:[%s4 + $0x8] sm:$0xf]
        %v570 = vld [vmem:[%s4 + $0xc] sm:$0xff]
        %v571 = vld [vmem:[%s4 + $0x14] sm:$0xf]
        %v572 = vld [vmem:[%s4 + $0x18] sm:$0xff]
        %v573 = vld [vmem:[%s4 + $0x20] sm:$0xf]
        %v574 = vld [vmem:[%s4 + $0x24] sm:$0xff]
        %v575 = vld [vmem:[%s4 + $0x2c] sm:$0xf]
        %v576 = vld [vmem:[%s4 + $0x30] sm:$0xff]
        %v577 = vld [vmem:[%s4 + $0x38] sm:$0xf]
        %v578 = vld [vmem:[%s4 + $0x3c] sm:$0xff]
        %v579 = vld [vmem:[%s4 + $0x44] sm:$0xf]
        %v580 = vld [vmem:[%s4 + $0x48] sm:$0xff]
        %v581 = vld [vmem:[%s4 + $0x50] sm:$0xf]
        %v582 = vld [vmem:[%s4 + $0x54] sm:$0xff]
        %v583 = vld [vmem:[%s4 + $0x5c] sm:$0xf]
        %v584 = vld [vmem:[%s4 + $0x60] sm:$0xff]
        %v585 = vld [vmem:[%s4 + $0x68] sm:$0xf]
        %v586 = vld [vmem:[%s4 + $0x6c] sm:$0xff]
        %v587 = vld [vmem:[%s4 + $0x74] sm:$0xf]
        %v588 = vld [vmem:[%s4 + $0x78] sm:$0xff]
        %v589 = vld [vmem:[%s4 + $0x80] sm:$0xf]
        %v590 = vld [vmem:[%s4 + $0x84] sm:$0xff]
        %v591 = vld [vmem:[%s4 + $0x8c] sm:$0xf]
        %v592 = vld [vmem:[%s4 + $0x90] sm:$0xff]
        %v593 = vld [vmem:[%s4 + $0x98] sm:$0xf]
        %v594 = vld [vmem:[%s4 + $0x9c] sm:$0xff]
        %v595 = vld [vmem:[%s4 + $0xa4] sm:$0xf]
        %v596 = vld [vmem:[%s4 + $0xa8] sm:$0xff]
        %v597 = vld [vmem:[%s4 + $0xb0] sm:$0xf]
        %v598 = vld [vmem:[%s4 + $0xb4] sm:$0xff]
        %v599 = vld [vmem:[%s4 + $0xbc] sm:$0xf]
        %v600 = vld [vmem:[%s5] sm:$0x7]
        %v602 = vlaneseq
        %v603 = vshrl.u32 %v602, 7
        %v604 = vsub.s32 0, %v603
        %v605 = vrot.slane %v600, %v604
        %v606 = vlaneseq
        %v607 = vshrl.u32 %v606, 7
        %v608 = vsub.s32 1, %v607
        %v609 = vrot.slane %v600, %v608
        %v610 = vlaneseq
        %v611 = vshrl.u32 %v610, 7
        %v612 = vsub.s32 2, %v611
        %v613 = vrot.slane %v600, %v612
        %v649 = vunpack.c.l.b16 %v568
        %v650 = vunpack.c.h.b16 %v568
        %v651 = vunpack.c.l.b16 %v569
        %v652 = vunpack.c.l.b16 %v570
        %v653 = vunpack.c.h.b16 %v570
        %v654 = vunpack.c.l.b16 %v571
        %v655 = vunpack.c.l.b16 %v572
        %v656 = vunpack.c.h.b16 %v572
        %v657 = vunpack.c.l.b16 %v573
        %v658 = vunpack.c.l.b16 %v574
        %v659 = vunpack.c.h.b16 %v574
        %v660 = vunpack.c.l.b16 %v575
        %v661 = vunpack.c.l.b16 %v576
        %v662 = vunpack.c.h.b16 %v576
        %v663 = vunpack.c.l.b16 %v577
        %v664 = vunpack.c.l.b16 %v578
        %v665 = vunpack.c.h.b16 %v578
        %v666 = vunpack.c.l.b16 %v579
        %v667 = vunpack.c.l.b16 %v580
        %v668 = vunpack.c.h.b16 %v580
        %v669 = vunpack.c.l.b16 %v581
        %v670 = vunpack.c.l.b16 %v582
        %v671 = vunpack.c.h.b16 %v582
        %v672 = vunpack.c.l.b16 %v583
        %v673 = vunpack.c.l.b16 %v584
        %v674 = vunpack.c.h.b16 %v584
        %v675 = vunpack.c.l.b16 %v585
        %v676 = vunpack.c.l.b16 %v586
        %v677 = vunpack.c.h.b16 %v586
        %v678 = vunpack.c.l.b16 %v587
        %v679 = vunpack.c.l.b16 %v588
        %v680 = vunpack.c.h.b16 %v588
        %v681 = vunpack.c.l.b16 %v589
        %v682 = vunpack.c.l.b16 %v590
        %v683 = vunpack.c.h.b16 %v590
        %v684 = vunpack.c.l.b16 %v591
        %v685 = vunpack.c.l.b16 %v592
        %v686 = vunpack.c.h.b16 %v592
        %v687 = vunpack.c.l.b16 %v593
        %v688 = vunpack.c.l.b16 %v594
        %v689 = vunpack.c.h.b16 %v594
        %v690 = vunpack.c.l.b16 %v595
        %v691 = vunpack.c.l.b16 %v596
        %v692 = vunpack.c.h.b16 %v596
        %v693 = vunpack.c.l.b16 %v597
        %v694 = vunpack.c.l.b16 %v598
        %v695 = vunpack.c.h.b16 %v598
        %v696 = vunpack.c.l.b16 %v599
        %v697 = vpack.c.b16 %v652, %v649
        %v698 = vpack.c.b16 %v653, %v650
        %v699 = vpack.c.b16 %v654, %v651
        %v700 = vpack.c.b16 %v658, %v655
        %v701 = vpack.c.b16 %v659, %v656
        %v702 = vpack.c.b16 %v660, %v657
        %v703 = vpack.c.b16 %v664, %v661
        %v704 = vpack.c.b16 %v665, %v662
        %v705 = vpack.c.b16 %v666, %v663
        %v706 = vpack.c.b16 %v670, %v667
        %v707 = vpack.c.b16 %v671, %v668
        %v708 = vpack.c.b16 %v672, %v669
        %v709 = vpack.c.b16 %v676, %v673
        %v710 = vpack.c.b16 %v677, %v674
        %v711 = vpack.c.b16 %v678, %v675
        %v712 = vpack.c.b16 %v682, %v679
        %v713 = vpack.c.b16 %v683, %v680
        %v714 = vpack.c.b16 %v684, %v681
        %v715 = vpack.c.b16 %v688, %v685
        %v716 = vpack.c.b16 %v689, %v686
        %v717 = vpack.c.b16 %v690, %v687
        %v718 = vpack.c.b16 %v694, %v691
        %v719 = vpack.c.b16 %v695, %v692
        %v720 = vpack.c.b16 %v696, %v693
        %745 = vmatprep.subr.bf16.mxu0 %v698
        %746 = vmatpush1.bf16.msra.mxu0 %v697
        %747 = vmatprep.subr.bf16.mxu0 %v701
        %748 = vmatpush1.bf16.msra.mxu0 %v700
        %749 = vmatprep.subr.bf16.mxu0 %v704
        %750 = vmatpush1.bf16.msra.mxu0 %v703
        %751 = vmatprep.subr.bf16.mxu0 %v707
        %752 = vmatpush1.bf16.msra.mxu0 %v706
        %753 = vmatprep.subr.bf16.mxu0 %v710
        %754 = vmatpush1.bf16.msra.mxu0 %v709
        %755 = vmatprep.subr.bf16.mxu0 %v713
        %756 = vmatpush1.bf16.msra.mxu0 %v712
        %757 = vmatprep.subr.bf16.mxu0 %v716
        %758 = vmatpush1.bf16.msra.mxu0 %v715
        %759 = vmatprep.subr.bf16.mxu0 %v719
        %760 = vmatpush1.bf16.msra.mxu0 %v718
        %761 = vmatprep.subr.bf16.mxu0 0
        %762 = vmatpush1.bf16.msra.mxu0 0
        %763 = vmatprep.subr.bf16.mxu0 0
        %764 = vmatpush1.bf16.msra.mxu0 0
        %765 = vmatprep.subr.bf16.mxu0 0
        %766 = vmatpush1.bf16.msra.mxu0 0
        %767 = vmatprep.subr.bf16.mxu0 0
        %768 = vmatpush1.bf16.msra.mxu0 0
        %769 = vmatprep.subr.bf16.mxu0 0
        %770 = vmatpush1.bf16.msra.mxu0 0
        %771 = vmatprep.subr.bf16.mxu0 0
        %772 = vmatpush1.bf16.msra.mxu0 0
        %773 = vmatprep.subr.bf16.mxu0 0
        %774 = vmatpush1.bf16.msra.mxu0 0
        %775 = vmatprep.subr.bf16.mxu0 0
        %776 = vmatpush1.bf16.msra.mxu0 0
        %777 = vmatprep.mubr.bf16.mxu0 0
        %778 = vmatmul.mubr.bf16.gmra.mrb[0].mxu0 %v567
        %v779 = vpop.f32.mrb[0].mxu0
        %v780 = vadd.f32 %v605, %v779
        %v781 = vpop.f32.mrb[0].mxu0
        %v782 = vadd.f32 %v609, %v781
        %v783 = vpop.f32.mrb[0].mxu0
        %v784 = vpop.f32.mrb[0].mxu0
        %785 = vdwg.mxu0
        %786 = vmatprep.subr.bf16.mxu0 0
        %787 = vmatpush1.bf16.msra.mxu0 %v699
        %788 = vmatprep.subr.bf16.mxu0 0
        %789 = vmatpush1.bf16.msra.mxu0 %v702
        %790 = vmatprep.subr.bf16.mxu0 0
        %791 = vmatpush1.bf16.msra.mxu0 %v705
        %792 = vmatprep.subr.bf16.mxu0 0
        %793 = vmatpush1.bf16.msra.mxu0 %v708
        %794 = vmatprep.subr.bf16.mxu0 0
        %795 = vmatpush1.bf16.msra.mxu0 %v711
        %796 = vmatprep.subr.bf16.mxu0 0
        %797 = vmatpush1.bf16.msra.mxu0 %v714
        %798 = vmatprep.subr.bf16.mxu0 0
        %799 = vmatpush1.bf16.msra.mxu0 %v717
        %800 = vmatprep.subr.bf16.mxu0 0
        %801 = vmatpush1.bf16.msra.mxu0 %v720
        %802 = vmatprep.subr.bf16.mxu0 0
        %803 = vmatpush1.bf16.msra.mxu0 0
        %804 = vmatprep.subr.bf16.mxu0 0
        %805 = vmatpush1.bf16.msra.mxu0 0
        %806 = vmatprep.subr.bf16.mxu0 0
        %807 = vmatpush1.bf16.msra.mxu0 0
        %808 = vmatprep.subr.bf16.mxu0 0
        %809 = vmatpush1.bf16.msra.mxu0 0
        %810 = vmatprep.subr.bf16.mxu0 0
        %811 = vmatpush1.bf16.msra.mxu0 0
        %812 = vmatprep.subr.bf16.mxu0 0
        %813 = vmatpush1.bf16.msra.mxu0 0
        %814 = vmatprep.subr.bf16.mxu0 0
        %815 = vmatpush1.bf16.msra.mxu0 0
        %816 = vmatprep.subr.bf16.mxu0 0
        %817 = vmatpush1.bf16.msra.mxu0 0
        %818 = vmatprep.mubr.bf16.mxu0 0
        %819 = vmatmul.mubr.bf16.gmra.mrb[0].mxu0 %v567
        %v820 = vpop.f32.mrb[0].mxu0
        %v821 = vadd.f32 %v613, %v820
        %v822 = vpop.f32.mrb[0].mxu0
        %v823 = vpop.f32.mrb[0].mxu0
        %v824 = vpop.f32.mrb[0].mxu0
        %825 = vdwg.mxu0
        %v826 = vpack.c.bf16 %v780, %v780
        %v827 = vpack.c.bf16 %v782, %v782
        %vm828 = vcmask 261120
        %v830 = vsel %vm828, %v826, 0
        %v833 = vsel %vm828, %v827, 0
        %835 = vmatprep.subr.bf16.mxu0 0
        %836 = vmatpush1.bf16.xpose.msra.mxu0 %v833
        %837 = vmatprep.subr.bf16.mxu0 0
        %838 = vmatpush1.bf16.xpose.msra.mxu0 0
        %839 = vmatprep.subr.bf16.mxu0 0
        %840 = vmatpush1.bf16.xpose.msra.mxu0 0
        %841 = vmatprep.subr.bf16.mxu0 0
        %842 = vmatpush1.bf16.xpose.msra.mxu0 0
        %843 = vmatprep.subr.bf16.mxu0 0
        %844 = vmatpush1.bf16.xpose.msra.mxu0 0
        %845 = vmatprep.subr.bf16.mxu0 0
        %846 = vmatpush1.bf16.xpose.msra.mxu0 0
        %847 = vmatprep.subr.bf16.mxu0 0
        %848 = vmatpush1.bf16.xpose.msra.mxu0 0
        %849 = vmatprep.subr.bf16.mxu0 0
        %850 = vmatpush1.bf16.xpose.msra.mxu0 0
        %851 = vmatprep.subr.bf16.mxu0 0
        %852 = vmatpush1.bf16.xpose.msra.mxu0 0
        %853 = vmatprep.subr.bf16.mxu0 0
        %854 = vmatpush1.bf16.xpose.msra.mxu0 0
        %855 = vmatprep.subr.bf16.mxu0 0
        %856 = vmatpush1.bf16.xpose.msra.mxu0 0
        %857 = vmatprep.subr.bf16.mxu0 0
        %858 = vmatpush1.bf16.xpose.msra.mxu0 0
        %859 = vmatprep.subr.bf16.mxu0 0
        %860 = vmatpush1.bf16.xpose.msra.mxu0 0
        %861 = vmatprep.subr.bf16.mxu0 0
        %862 = vmatpush1.bf16.xpose.msra.mxu0 0
        %863 = vmatprep.subr.bf16.mxu0 0
        %864 = vmatpush1.bf16.xpose.msra.mxu0 0
        %865 = vmatprep.subr.bf16.mxu0 0
        %866 = vmatpush1.bf16.xpose.msra.mxu0 0
        %867 = vmatprep.mubr.bf16.mxu0 0
        %868 = vmatmul.mubr.bf16.gmra.mrb[0].mxu0 %v830
        %v869 = vpop.f32.mrb[0].mxu0
        %v870 = vadd.f32 0.0, %v869
        %v871 = vpop.f32.mrb[0].mxu0
        %v872 = vpop.f32.mrb[0].mxu0
        %v873 = vpop.f32.mrb[0].mxu0
        %874 = vdwg.mxu0
        %v875 = vmul.f32 %v870, 0.35355338
        %vm876 = vcmp.gt.f32.partialorder %v536, 0.0
        %v877 = vsel %vm876, 1, 0
        %v878 = vlaneseq
        %v879 = vshrl.u32 %v878, 7
        %v880 = vsub.s32 0, %v879
        %v881 = vrot.slane %v877, %v880
        %vm882 = vcmp.eq.s32.totalorder %v881, 1
        %v883 = vsel %vm882, %v875, -1e+30
        %vm884 = vcmask 64512
        %v885 = vsel %vm884, %v883, -inf
        %886 = vmax.xlane.f32.xlu0 %v885
        %v887 = vpop.xlane.xlu0 %886
        %v888 = vsub.f32 %v883, %v887
        %v889 = vmul.f32 %v888, 1.442695
        %v890 = vpow.pop %v889
        %v891 = vsel %vm884, %v890, 0.0
        %892 = vadd.xlane.f32.xlu0 %v891
        %v893 = vpop.xlane.xlu0 %892
        %v894 = vrcp.pop %v893
        %v895 = vmul.f32 %v890, %v894
        %v896 = vpack.c.bf16 %v895, %v895
        %v897 = vpack.c.bf16 %v821, %v821
        %v899 = vsel %vm884, %v896, 0
        %vm901 = vcmask 1043456
        %v903 = vsel %vm901, %v897, 0
        %905 = vmatprep.subr.bf16.mxu0 0
        %906 = vmatpush1.bf16.msra.mxu0 %v903
        %907 = vmatprep.subr.bf16.mxu0 0
        %908 = vmatpush1.bf16.msra.mxu0 0
        %909 = vmatprep.subr.bf16.mxu0 0
        %910 = vmatpush1.bf16.msra.mxu0 0
        %911 = vmatprep.subr.bf16.mxu0 0
        %912 = vmatpush1.bf16.msra.mxu0 0
        %913 = vmatprep.subr.bf16.mxu0 0
        %914 = vmatpush1.bf16.msra.mxu0 0
        %915 = vmatprep.subr.bf16.mxu0 0
        %916 = vmatpush1.bf16.msra.mxu0 0
        %917 = vmatprep.subr.bf16.mxu0 0
        %918 = vmatpush1.bf16.msra.mxu0 0
        %919 = vmatprep.subr.bf16.mxu0 0
        %920 = vmatpush1.bf16.msra.mxu0 0
        %921 = vmatprep.subr.bf16.mxu0 0
        %922 = vmatpush1.bf16.msra.mxu0 0
        %923 = vmatprep.subr.bf16.mxu0 0
        %924 = vmatpush1.bf16.msra.mxu0 0
        %925 = vmatprep.subr.bf16.mxu0 0
        %926 = vmatpush1.bf16.msra.mxu0 0
        %927 = vmatprep.subr.bf16.mxu0 0
        %928 = vmatpush1.bf16.msra.mxu0 0
        %929 = vmatprep.subr.bf16.mxu0 0
        %930 = vmatpush1.bf16.msra.mxu0 0
        %931 = vmatprep.subr.bf16.mxu0 0
        %932 = vmatpush1.bf16.msra.mxu0 0
        %933 = vmatprep.subr.bf16.mxu0 0
        %934 = vmatpush1.bf16.msra.mxu0 0
        %935 = vmatprep.subr.bf16.mxu0 0
        %936 = vmatpush1.bf16.msra.mxu0 0
        %937 = vmatprep.mubr.bf16.mxu0 0
        %938 = vmatmul.mubr.bf16.gmra.mrb[0].mxu0 %v899
        %v939 = vpop.f32.mrb[0].mxu0
        %v940 = vadd.f32 0.0, %v939
        %v941 = vpop.f32.mrb[0].mxu0
        %v942 = vpop.f32.mrb[0].mxu0
        %v943 = vpop.f32.mrb[0].mxu0
        %944 = vdwg.mxu0
        %946 = vrot.lane.b32.xlu0 %v826, 96
        %v947 = vpop.permute.xlu0 %946
        %949 = vrot.lane.b32.xlu0 %v827, 96
        %v950 = vpop.permute.xlu0 %949
        %v952 = vsel %vm828, %v947, 0
        %v955 = vsel %vm828, %v950, 0
        %957 = vmatprep.subr.bf16.mxu0 0
        %958 = vmatpush1.bf16.xpose.msra.mxu0 %v955
        %959 = vmatprep.subr.bf16.mxu0 0
        %960 = vmatpush1.bf16.xpose.msra.mxu0 0
        %961 = vmatprep.subr.bf16.mxu0 0
        %962 = vmatpush1.bf16.xpose.msra.mxu0 0
        %963 = vmatprep.subr.bf16.mxu0 0
        %964 = vmatpush1.bf16.xpose.msra.mxu0 0
        %965 = vmatprep.subr.bf16.mxu0 0
        %966 = vmatpush1.bf16.xpose.msra.mxu0 0
        %967 = vmatprep.subr.bf16.mxu0 0
        %968 = vmatpush1.bf16.xpose.msra.mxu0 0
        %969 = vmatprep.subr.bf16.mxu0 0
        %970 = vmatpush1.bf16.xpose.msra.mxu0 0
        %971 = vmatprep.subr.bf16.mxu0 0
        %972 = vmatpush1.bf16.xpose.msra.mxu0 0
        %973 = vmatprep.subr.bf16.mxu0 0
        %974 = vmatpush1.bf16.xpose.msra.mxu0 0
        %975 = vmatprep.subr.bf16.mxu0 0
        %976 = vmatpush1.bf16.xpose.msra.mxu0 0
        %977 = vmatprep.subr.bf16.mxu0 0
        %978 = vmatpush1.bf16.xpose.msra.mxu0 0
        %979 = vmatprep.subr.bf16.mxu0 0
        %980 = vmatpush1.bf16.xpose.msra.mxu0 0
        %981 = vmatprep.subr.bf16.mxu0 0
        %982 = vmatpush1.bf16.xpose.msra.mxu0 0
        %983 = vmatprep.subr.bf16.mxu0 0
        %984 = vmatpush1.bf16.xpose.msra.mxu0 0
        %985 = vmatprep.subr.bf16.mxu0 0
        %986 = vmatpush1.bf16.xpose.msra.mxu0 0
        %987 = vmatprep.subr.bf16.mxu0 0
        %988 = vmatpush1.bf16.xpose.msra.mxu0 0
        %989 = vmatprep.mubr.bf16.mxu0 0
        %990 = vmatmul.mubr.bf16.gmra.mrb[0].mxu0 %v952
        %v991 = vpop.f32.mrb[0].mxu0
        %v992 = vadd.f32 0.0, %v991
        %v993 = vpop.f32.mrb[0].mxu0
        %v994 = vpop.f32.mrb[0].mxu0
        %v995 = vpop.f32.mrb[0].mxu0
        %996 = vdwg.mxu0
        %v997 = vmul.f32 %v992, 0.35355338
        %v998 = vsel %vm882, %v997, -1e+30
        %v999 = vsel %vm884, %v998, -inf
        %1000 = vmax.xlane.f32.xlu0 %v999
        %v1001 = vpop.xlane.xlu0 %1000
        %v1002 = vsub.f32 %v998, %v1001
        %v1003 = vmul.f32 %v1002, 1.442695
        %v1004 = vpow.pop %v1003
        %v1005 = vsel %vm884, %v1004, 0.0
        %1006 = vadd.xlane.f32.xlu0 %v1005
        %v1007 = vpop.xlane.xlu0 %1006
        %v1008 = vrcp.pop %v1007
        %v1009 = vmul.f32 %v1004, %v1008
        %v1010 = vpack.c.bf16 %v1009, %v1009
        %1012 = vrot.lane.b32.xlu0 %v897, 96
        %v1013 = vpop.permute.xlu0 %1012
        %v1015 = vsel %vm884, %v1010, 0
        %v1018 = vsel %vm901, %v1013, 0
        %1020 = vmatprep.subr.bf16.mxu0 0
        %1021 = vmatpush1.bf16.msra.mxu0 %v1018
        %1022 = vmatprep.subr.bf16.mxu0 0
        %1023 = vmatpush1.bf16.msra.mxu0 0
        %1024 = vmatprep.subr.bf16.mxu0 0
        %1025 = vmatpush1.bf16.msra.mxu0 0
        %1026 = vmatprep.subr.bf16.mxu0 0
        %1027 = vmatpush1.bf16.msra.mxu0 0
        %1028 = vmatprep.subr.bf16.mxu0 0
        %1029 = vmatpush1.bf16.msra.mxu0 0
        %1030 = vmatprep.subr.bf16.mxu0 0
        %1031 = vmatpush1.bf16.msra.mxu0 0
        %1032 = vmatprep.subr.bf16.mxu0 0
        %1033 = vmatpush1.bf16.msra.mxu0 0
        %1034 = vmatprep.subr.bf16.mxu0 0
        %1035 = vmatpush1.bf16.msra.mxu0 0
        %1036 = vmatprep.subr.bf16.mxu0 0
        %1037 = vmatpush1.bf16.msra.mxu0 0
        %1038 = vmatprep.subr.bf16.mxu0 0
        %1039 = vmatpush1.bf16.msra.mxu0 0
        %1040 = vmatprep.subr.bf16.mxu0 0
        %1041 = vmatpush1.bf16.msra.mxu0 0
        %1042 = vmatprep.subr.bf16.mxu0 0
        %1043 = vmatpush1.bf16.msra.mxu0 0
        %1044 = vmatprep.subr.bf16.mxu0 0
        %1045 = vmatpush1.bf16.msra.mxu0 0
        %1046 = vmatprep.subr.bf16.mxu0 0
        %1047 = vmatpush1.bf16.msra.mxu0 0
        %1048 = vmatprep.subr.bf16.mxu0 0
        %1049 = vmatpush1.bf16.msra.mxu0 0
        %1050 = vmatprep.subr.bf16.mxu0 0
        %1051 = vmatpush1.bf16.msra.mxu0 0
        %1052 = vmatprep.mubr.bf16.mxu0 0
        %1053 = vmatmul.mubr.bf16.gmra.mrb[0].mxu0 %v1015
        %v1054 = vpop.f32.mrb[0].mxu0
        %v1055 = vadd.f32 0.0, %v1054
        %v1056 = vpop.f32.mrb[0].mxu0
        %v1057 = vpop.f32.mrb[0].mxu0
        %v1058 = vpop.f32.mrb[0].mxu0
        %1059 = vdwg.mxu0
        %1060 = vrot.lane.b32.xlu0 %v826, 64
        %v1061 = vpop.permute.xlu0 %1060
        %1062 = vrot.lane.b32.xlu0 %v827, 64
        %v1063 = vpop.permute.xlu0 %1062
        %v1065 = vsel %vm828, %v1061, 0
        %v1068 = vsel %vm828, %v1063, 0
        %1070 = vmatprep.subr.bf16.mxu0 0
        %1071 = vmatpush1.bf16.xpose.msra.mxu0 %v1068
        %1072 = vmatprep.subr.bf16.mxu0 0
        %1073 = vmatpush1.bf16.xpose.msra.mxu0 0
        %1074 = vmatprep.subr.bf16.mxu0 0
        %1075 = vmatpush1.bf16.xpose.msra.mxu0 0
        %1076 = vmatprep.subr.bf16.mxu0 0
        %1077 = vmatpush1.bf16.xpose.msra.mxu0 0
        %1078 = vmatprep.subr.bf16.mxu0 0
        %1079 = vmatpush1.bf16.xpose.msra.mxu0 0
        %1080 = vmatprep.subr.bf16.mxu0 0
        %1081 = vmatpush1.bf16.xpose.msra.mxu0 0
        %1082 = vmatprep.subr.bf16.mxu0 0
        %1083 = vmatpush1.bf16.xpose.msra.mxu0 0
        %1084 = vmatprep.subr.bf16.mxu0 0
        %1085 = vmatpush1.bf16.xpose.msra.mxu0 0
        %1086 = vmatprep.subr.bf16.mxu0 0
        %1087 = vmatpush1.bf16.xpose.msra.mxu0 0
        %1088 = vmatprep.subr.bf16.mxu0 0
        %1089 = vmatpush1.bf16.xpose.msra.mxu0 0
        %1090 = vmatprep.subr.bf16.mxu0 0
        %1091 = vmatpush1.bf16.xpose.msra.mxu0 0
        %1092 = vmatprep.subr.bf16.mxu0 0
        %1093 = vmatpush1.bf16.xpose.msra.mxu0 0
        %1094 = vmatprep.subr.bf16.mxu0 0
        %1095 = vmatpush1.bf16.xpose.msra.mxu0 0
        %1096 = vmatprep.subr.bf16.mxu0 0
        %1097 = vmatpush1.bf16.xpose.msra.mxu0 0
        %1098 = vmatprep.subr.bf16.mxu0 0
        %1099 = vmatpush1.bf16.xpose.msra.mxu0 0
        %1100 = vmatprep.subr.bf16.mxu0 0
        %1101 = vmatpush1.bf16.xpose.msra.mxu0 0
        %1102 = vmatprep.mubr.bf16.mxu0 0
        %1103 = vmatmul.mubr.bf16.gmra.mrb[0].mxu0 %v1065
        %v1104 = vpop.f32.mrb[0].mxu0
        %v1105 = vadd.f32 0.0, %v1104
        %v1106 = vpop.f32.mrb[0].mxu0
        %v1107 = vpop.f32.mrb[0].mxu0
        %v1108 = vpop.f32.mrb[0].mxu0
        %1109 = vdwg.mxu0
        %v1110 = vmul.f32 %v1105, 0.35355338
        %v1111 = vsel %vm882, %v1110, -1e+30
        %v1112 = vsel %vm884, %v1111, -inf
        %1113 = vmax.xlane.f32.xlu0 %v1112
        %v1114 = vpop.xlane.xlu0 %1113
        %v1115 = vsub.f32 %v1111, %v1114
        %v1116 = vmul.f32 %v1115, 1.442695
        %v1117 = vpow.pop %v1116
        %v1118 = vsel %vm884, %v1117, 0.0
        %1119 = vadd.xlane.f32.xlu0 %v1118
        %v1120 = vpop.xlane.xlu0 %1119
        %v1121 = vrcp.pop %v1120
        %v1122 = vmul.f32 %v1117, %v1121
        %v1123 = vpack.c.bf16 %v1122, %v1122
        %1124 = vrot.lane.b32.xlu0 %v897, 64
        %v1125 = vpop.permute.xlu0 %1124
        %v1127 = vsel %vm884, %v1123, 0
        %v1130 = vsel %vm901, %v1125, 0
        %1132 = vmatprep.subr.bf16.mxu0 0
        %1133 = vmatpush1.bf16.msra.mxu0 %v1130
        %1134 = vmatprep.subr.bf16.mxu0 0
        %1135 = vmatpush1.bf16.msra.mxu0 0
        %1136 = vmatprep.subr.bf16.mxu0 0
        %1137 = vmatpush1.bf16.msra.mxu0 0
        %1138 = vmatprep.subr.bf16.mxu0 0
        %1139 = vmatpush1.bf16.msra.mxu0 0
        %1140 = vmatprep.subr.bf16.mxu0 0
        %1141 = vmatpush1.bf16.msra.mxu0 0
        %1142 = vmatprep.subr.bf16.mxu0 0
        %1143 = vmatpush1.bf16.msra.mxu0 0
        %1144 = vmatprep.subr.bf16.mxu0 0
        %1145 = vmatpush1.bf16.msra.mxu0 0
        %1146 = vmatprep.subr.bf16.mxu0 0
        %1147 = vmatpush1.bf16.msra.mxu0 0
        %1148 = vmatprep.subr.bf16.mxu0 0
        %1149 = vmatpush1.bf16.msra.mxu0 0
        %1150 = vmatprep.subr.bf16.mxu0 0
        %1151 = vmatpush1.bf16.msra.mxu0 0
        %1152 = vmatprep.subr.bf16.mxu0 0
        %1153 = vmatpush1.bf16.msra.mxu0 0
        %1154 = vmatprep.subr.bf16.mxu0 0
        %1155 = vmatpush1.bf16.msra.mxu0 0
        %1156 = vmatprep.subr.bf16.mxu0 0
        %1157 = vmatpush1.bf16.msra.mxu0 0
        %1158 = vmatprep.subr.bf16.mxu0 0
        %1159 = vmatpush1.bf16.msra.mxu0 0
        %1160 = vmatprep.subr.bf16.mxu0 0
        %1161 = vmatpush1.bf16.msra.mxu0 0
        %1162 = vmatprep.subr.bf16.mxu0 0
        %1163 = vmatpush1.bf16.msra.mxu0 0
        %1164 = vmatprep.mubr.bf16.mxu0 0
        %1165 = vmatmul.mubr.bf16.gmra.mrb[0].mxu0 %v1127
        %v1166 = vpop.f32.mrb[0].mxu0
        %v1167 = vadd.f32 0.0, %v1166
        %v1168 = vpop.f32.mrb[0].mxu0
        %v1169 = vpop.f32.mrb[0].mxu0
        %v1170 = vpop.f32.mrb[0].mxu0
        %1171 = vdwg.mxu0
        %1172 = vrot.lane.b32.xlu0 %v826, 32
        %v1173 = vpop.permute.xlu0 %1172
        %1174 = vrot.lane.b32.xlu0 %v827, 32
        %v1175 = vpop.permute.xlu0 %1174
        %v1177 = vsel %vm828, %v1173, 0
        %v1180 = vsel %vm828, %v1175, 0
        %1182 = vmatprep.subr.bf16.mxu0 0
        %1183 = vmatpush1.bf16.xpose.msra.mxu0 %v1180
        %1184 = vmatprep.subr.bf16.mxu0 0
        %1185 = vmatpush1.bf16.xpose.msra.mxu0 0
        %1186 = vmatprep.subr.bf16.mxu0 0
        %1187 = vmatpush1.bf16.xpose.msra.mxu0 0
        %1188 = vmatprep.subr.bf16.mxu0 0
        %1189 = vmatpush1.bf16.xpose.msra.mxu0 0
        %1190 = vmatprep.subr.bf16.mxu0 0
        %1191 = vmatpush1.bf16.xpose.msra.mxu0 0
        %1192 = vmatprep.subr.bf16.mxu0 0
        %1193 = vmatpush1.bf16.xpose.msra.mxu0 0
        %1194 = vmatprep.subr.bf16.mxu0 0
        %1195 = vmatpush1.bf16.xpose.msra.mxu0 0
        %1196 = vmatprep.subr.bf16.mxu0 0
        %1197 = vmatpush1.bf16.xpose.msra.mxu0 0
        %1198 = vmatprep.subr.bf16.mxu0 0
        %1199 = vmatpush1.bf16.xpose.msra.mxu0 0
        %1200 = vmatprep.subr.bf16.mxu0 0
        %1201 = vmatpush1.bf16.xpose.msra.mxu0 0
        %1202 = vmatprep.subr.bf16.mxu0 0
        %1203 = vmatpush1.bf16.xpose.msra.mxu0 0
        %1204 = vmatprep.subr.bf16.mxu0 0
        %1205 = vmatpush1.bf16.xpose.msra.mxu0 0
        %1206 = vmatprep.subr.bf16.mxu0 0
        %1207 = vmatpush1.bf16.xpose.msra.mxu0 0
        %1208 = vmatprep.subr.bf16.mxu0 0
        %1209 = vmatpush1.bf16.xpose.msra.mxu0 0
        %1210 = vmatprep.subr.bf16.mxu0 0
        %1211 = vmatpush1.bf16.xpose.msra.mxu0 0
        %1212 = vmatprep.subr.bf16.mxu0 0
        %1213 = vmatpush1.bf16.xpose.msra.mxu0 0
        %1214 = vmatprep.mubr.bf16.mxu0 0
        %1215 = vmatmul.mubr.bf16.gmra.mrb[0].mxu0 %v1177
        %v1216 = vpop.f32.mrb[0].mxu0
        %v1217 = vadd.f32 0.0, %v1216
        %v1218 = vpop.f32.mrb[0].mxu0
        %v1219 = vpop.f32.mrb[0].mxu0
        %v1220 = vpop.f32.mrb[0].mxu0
        %1221 = vdwg.mxu0
        %v1222 = vmul.f32 %v1217, 0.35355338
        %v1223 = vsel %vm882, %v1222, -1e+30
        %v1224 = vsel %vm884, %v1223, -inf
        %1225 = vmax.xlane.f32.xlu0 %v1224
        %v1226 = vpop.xlane.xlu0 %1225
        %v1227 = vsub.f32 %v1223, %v1226
        %v1228 = vmul.f32 %v1227, 1.442695
        %v1229 = vpow.pop %v1228
        %v1230 = vsel %vm884, %v1229, 0.0
        %1231 = vadd.xlane.f32.xlu0 %v1230
        %v1232 = vpop.xlane.xlu0 %1231
        %v1233 = vrcp.pop %v1232
        %v1234 = vmul.f32 %v1229, %v1233
        %v1235 = vpack.c.bf16 %v1234, %v1234
        %1236 = vrot.lane.b32.xlu0 %v897, 32
        %v1237 = vpop.permute.xlu0 %1236
        %v1239 = vsel %vm884, %v1235, 0
        %v1242 = vsel %vm901, %v1237, 0
        %1244 = vmatprep.subr.bf16.mxu0 0
        %1245 = vmatpush1.bf16.msra.mxu0 %v1242
        %1246 = vmatprep.subr.bf16.mxu0 0
        %1247 = vmatpush1.bf16.msra.mxu0 0
        %1248 = vmatprep.subr.bf16.mxu0 0
        %1249 = vmatpush1.bf16.msra.mxu0 0
        %1250 = vmatprep.subr.bf16.mxu0 0
        %1251 = vmatpush1.bf16.msra.mxu0 0
        %1252 = vmatprep.subr.bf16.mxu0 0
        %1253 = vmatpush1.bf16.msra.mxu0 0
        %1254 = vmatprep.subr.bf16.mxu0 0
        %1255 = vmatpush1.bf16.msra.mxu0 0
        %1256 = vmatprep.subr.bf16.mxu0 0
        %1257 = vmatpush1.bf16.msra.mxu0 0
        %1258 = vmatprep.subr.bf16.mxu0 0
        %1259 = vmatpush1.bf16.msra.mxu0 0
        %1260 = vmatprep.subr.bf16.mxu0 0
        %1261 = vmatpush1.bf16.msra.mxu0 0
        %1262 = vmatprep.subr.bf16.mxu0 0
        %1263 = vmatpush1.bf16.msra.mxu0 0
        %1264 = vmatprep.subr.bf16.mxu0 0
        %1265 = vmatpush1.bf16.msra.mxu0 0
        %1266 = vmatprep.subr.bf16.mxu0 0
        %1267 = vmatpush1.bf16.msra.mxu0 0
        %1268 = vmatprep.subr.bf16.mxu0 0
        %1269 = vmatpush1.bf16.msra.mxu0 0
        %1270 = vmatprep.subr.bf16.mxu0 0
        %1271 = vmatpush1.bf16.msra.mxu0 0
        %1272 = vmatprep.subr.bf16.mxu0 0
        %1273 = vmatpush1.bf16.msra.mxu0 0
        %1274 = vmatprep.subr.bf16.mxu0 0
        %1275 = vmatpush1.bf16.msra.mxu0 0
        %1276 = vmatprep.mubr.bf16.mxu0 0
        %1277 = vmatmul.mubr.bf16.gmra.mrb[0].mxu0 %v1239
        %v1278 = vpop.f32.mrb[0].mxu0
        %v1279 = vadd.f32 0.0, %v1278
        %v1280 = vpop.f32.mrb[0].mxu0
        %v1281 = vpop.f32.mrb[0].mxu0
        %v1282 = vpop.f32.mrb[0].mxu0
        %1283 = vdwg.mxu0
        %1285 = vrot.lane.b32.xlu0 %v1055, 32
        %v1286 = vpop.permute.xlu0 %1285
        %1289 = vrot.lane.b32.xlu0 %v1167, 64
        %v1290 = vpop.permute.xlu0 %1289
        %1293 = vrot.lane.b32.xlu0 %v1279, 96
        %v1294 = vpop.permute.xlu0 %1293
        %v1296 = vsel %vm828, %v940, %v1286
        %vm1297 = vcmask 523264
        %v1298 = vsel %vm1297, %v1296, %v1290
        %vm1299 = vcmask 785408
        %v1300 = vsel %vm1299, %v1298, %v1294
        %v1301 = vpack.c.bf16 %v1300, %v1300
        %v1302 = vld [vmem:[%s6] sm:$0xf]
        %v1303 = vld [vmem:[%s6 + $0x4] sm:$0xf]
        %v1304 = vld [vmem:[%s6 + $0x8] sm:$0xf]
        %v1305 = vld [vmem:[%s6 + $0xc] sm:$0xf]
        %v1306 = vld [vmem:[%s6 + $0x10] sm:$0xf]
        %v1307 = vld [vmem:[%s6 + $0x14] sm:$0xf]
        %v1308 = vld [vmem:[%s6 + $0x18] sm:$0xf]
        %v1309 = vld [vmem:[%s6 + $0x1c] sm:$0xf]
        %v1310 = vld [vmem:[%s6 + $0x20] sm:$0xf]
        %v1311 = vld [vmem:[%s6 + $0x24] sm:$0xf]
        %v1312 = vld [vmem:[%s6 + $0x28] sm:$0xf]
        %v1313 = vld [vmem:[%s6 + $0x2c] sm:$0xf]
        %v1314 = vld [vmem:[%s6 + $0x30] sm:$0xf]
        %v1315 = vld [vmem:[%s6 + $0x34] sm:$0xf]
        %v1316 = vld [vmem:[%s6 + $0x38] sm:$0xf]
        %v1317 = vld [vmem:[%s6 + $0x3c] sm:$0xf]
        %v1318 = vld [vmem:[%s7] sm:$0x1]
        %v1320 = vlaneseq
        %v1321 = vshrl.u32 %v1320, 7
        %v1322 = vsub.s32 0, %v1321
        %v1323 = vrot.slane %v1318, %v1322
        %v1341 = vunpack.c.l.b16 %v1302
        %v1342 = vunpack.c.l.b16 %v1303
        %v1343 = vunpack.c.l.b16 %v1304
        %v1344 = vunpack.c.l.b16 %v1305
        %v1345 = vunpack.c.l.b16 %v1306
        %v1346 = vunpack.c.l.b16 %v1307
        %v1347 = vunpack.c.l.b16 %v1308
        %v1348 = vunpack.c.l.b16 %v1309
        %v1349 = vunpack.c.l.b16 %v1310
        %v1350 = vunpack.c.l.b16 %v1311
        %v1351 = vunpack.c.l.b16 %v1312
        %v1352 = vunpack.c.l.b16 %v1313
        %v1353 = vunpack.c.l.b16 %v1314
        %v1354 = vunpack.c.l.b16 %v1315
        %v1355 = vunpack.c.l.b16 %v1316
        %v1356 = vunpack.c.l.b16 %v1317
        %v1357 = vpack.c.b16 %v1342, %v1341
        %v1358 = vpack.c.b16 %v1344, %v1343
        %v1359 = vpack.c.b16 %v1346, %v1345
        %v1360 = vpack.c.b16 %v1348, %v1347
        %v1361 = vpack.c.b16 %v1350, %v1349
        %v1362 = vpack.c.b16 %v1352, %v1351
        %v1363 = vpack.c.b16 %v1354, %v1353
        %v1364 = vpack.c.b16 %v1356, %v1355
        %1373 = vmatprep.subr.bf16.mxu0 0
        %1374 = vmatpush1.bf16.msra.mxu0 %v1357
        %1375 = vmatprep.subr.bf16.mxu0 0
        %1376 = vmatpush1.bf16.msra.mxu0 %v1358
        %1377 = vmatprep.subr.bf16.mxu0 0
        %1378 = vmatpush1.bf16.msra.mxu0 %v1359
        %1379 = vmatprep.subr.bf16.mxu0 0
        %1380 = vmatpush1.bf16.msra.mxu0 %v1360
        %1381 = vmatprep.subr.bf16.mxu0 0
        %1382 = vmatpush1.bf16.msra.mxu0 %v1361
        %1383 = vmatprep.subr.bf16.mxu0 0
        %1384 = vmatpush1.bf16.msra.mxu0 %v1362
        %1385 = vmatprep.subr.bf16.mxu0 0
        %1386 = vmatpush1.bf16.msra.mxu0 %v1363
        %1387 = vmatprep.subr.bf16.mxu0 0
        %1388 = vmatpush1.bf16.msra.mxu0 %v1364
        %1389 = vmatprep.subr.bf16.mxu0 0
        %1390 = vmatpush1.bf16.msra.mxu0 0
        %1391 = vmatprep.subr.bf16.mxu0 0
        %1392 = vmatpush1.bf16.msra.mxu0 0
        %1393 = vmatprep.subr.bf16.mxu0 0
        %1394 = vmatpush1.bf16.msra.mxu0 0
        %1395 = vmatprep.subr.bf16.mxu0 0
        %1396 = vmatpush1.bf16.msra.mxu0 0
        %1397 = vmatprep.subr.bf16.mxu0 0
        %1398 = vmatpush1.bf16.msra.mxu0 0
        %1399 = vmatprep.subr.bf16.mxu0 0
        %1400 = vmatpush1.bf16.msra.mxu0 0
        %1401 = vmatprep.subr.bf16.mxu0 0
        %1402 = vmatpush1.bf16.msra.mxu0 0
        %1403 = vmatprep.subr.bf16.mxu0 0
        %1404 = vmatpush1.bf16.msra.mxu0 0
        %1405 = vmatprep.mubr.bf16.mxu0 0
        %1406 = vmatmul.mubr.bf16.gmra.mrb[0].mxu0 %v1301
        %v1407 = vpop.f32.mrb[0].mxu0
        %v1408 = vadd.f32 %v1323, %v1407
        %v1409 = vpop.f32.mrb[0].mxu0
        %v1410 = vpop.f32.mrb[0].mxu0
        %v1411 = vpop.f32.mrb[0].mxu0
        %1412 = vdwg.mxu0
        %v1413 = vadd.f32 %v566, %v1408
        %v1414 = vld [vmem:[%s8] sm:$0x1]
        %v1415 = vld [vmem:[%s9] sm:$0x1]
        %v1416 = vmul.f32 %v1413, %v535
        %1417 = vadd.xlane.f32.xlu0 %v1416
        %v1418 = vpop.xlane.xlu0 %1417
        %v1419 = vmul.f32 %v1418, 0.03125
        %v1420 = vsub.f32 %v1413, %v1419
        %v1421 = vmul.f32 %v1420, %v535
        %v1422 = vmul.f32 %v1421, %v1421
        %1423 = vadd.xlane.f32.xlu0 %v1422
        %v1424 = vpop.xlane.xlu0 %1423
        %v1425 = vmul.f32 %v1424, 0.03125
        %v1426 = vadd.f32 %v1425, 1e-05
        %v1427 = vrsqrt.pop %v1426
        %v1428 = vmul.f32 %v1421, %v1427
        %v1430 = vlaneseq
        %v1431 = vshrl.u32 %v1430, 7
        %v1432 = vsub.s32 0, %v1431
        %v1433 = vrot.slane %v1414, %v1432
        %v1435 = vmul.f32 %v1428, %v1433
        %v1437 = vlaneseq
        %v1438 = vshrl.u32 %v1437, 7
        %v1439 = vsub.s32 0, %v1438
        %v1440 = vrot.slane %v1415, %v1439
        %v1442 = vadd.f32 %v1435, %v1440
        %v1443 = vpack.c.bf16 %v1442, %v1442
        %v1444 = vld [vmem:[%s10] sm:$0xf]
        %v1445 = vld [vmem:[%s10 + $0x4] sm:$0xf]
        %v1446 = vld [vmem:[%s10 + $0x8] sm:$0xf]
        %v1447 = vld [vmem:[%s10 + $0xc] sm:$0xf]
        %v1448 = vld [vmem:[%s10 + $0x10] sm:$0xf]
        %v1449 = vld [vmem:[%s10 + $0x14] sm:$0xf]
        %v1450 = vld [vmem:[%s10 + $0x18] sm:$0xf]
        %v1451 = vld [vmem:[%s10 + $0x1c] sm:$0xf]
        %v1452 = vld [vmem:[%s10 + $0x20] sm:$0xf]
        %v1453 = vld [vmem:[%s10 + $0x24] sm:$0xf]
        %v1454 = vld [vmem:[%s10 + $0x28] sm:$0xf]
        %v1455 = vld [vmem:[%s10 + $0x2c] sm:$0xf]
        %v1456 = vld [vmem:[%s10 + $0x30] sm:$0xf]
        %v1457 = vld [vmem:[%s10 + $0x34] sm:$0xf]
        %v1458 = vld [vmem:[%s10 + $0x38] sm:$0xf]
        %v1459 = vld [vmem:[%s10 + $0x3c] sm:$0xf]
        %v1460 = vld [vmem:[%s11] sm:$0x1]
        %v1462 = vlaneseq
        %v1463 = vshrl.u32 %v1462, 7
        %v1464 = vsub.s32 0, %v1463
        %v1465 = vrot.slane %v1460, %v1464
        %v1483 = vunpack.c.l.b16 %v1444
        %v1484 = vunpack.c.l.b16 %v1445
        %v1485 = vunpack.c.l.b16 %v1446
        %v1486 = vunpack.c.l.b16 %v1447
        %v1487 = vunpack.c.l.b16 %v1448
        %v1488 = vunpack.c.l.b16 %v1449
        %v1489 = vunpack.c.l.b16 %v1450
        %v1490 = vunpack.c.l.b16 %v1451
        %v1491 = vunpack.c.l.b16 %v1452
        %v1492 = vunpack.c.l.b16 %v1453
        %v1493 = vunpack.c.l.b16 %v1454
        %v1494 = vunpack.c.l.b16 %v1455
        %v1495 = vunpack.c.l.b16 %v1456
        %v1496 = vunpack.c.l.b16 %v1457
        %v1497 = vunpack.c.l.b16 %v1458
        %v1498 = vunpack.c.l.b16 %v1459
        %v1499 = vpack.c.b16 %v1484, %v1483
        %v1500 = vpack.c.b16 %v1486, %v1485
        %v1501 = vpack.c.b16 %v1488, %v1487
        %v1502 = vpack.c.b16 %v1490, %v1489
        %v1503 = vpack.c.b16 %v1492, %v1491
        %v1504 = vpack.c.b16 %v1494, %v1493
        %v1505 = vpack.c.b16 %v1496, %v1495
        %v1506 = vpack.c.b16 %v1498, %v1497
        %1515 = vmatprep.subr.bf16.mxu0 0
        %1516 = vmatpush1.bf16.msra.mxu0 %v1499
        %1517 = vmatprep.subr.bf16.mxu0 0
        %1518 = vmatpush1.bf16.msra.mxu0 %v1500
        %1519 = vmatprep.subr.bf16.mxu0 0
        %1520 = vmatpush1.bf16.msra.mxu0 %v1501
        %1521 = vmatprep.subr.bf16.mxu0 0
        %1522 = vmatpush1.bf16.msra.mxu0 %v1502
        %1523 = vmatprep.subr.bf16.mxu0 0
        %1524 = vmatpush1.bf16.msra.mxu0 %v1503
        %1525 = vmatprep.subr.bf16.mxu0 0
        %1526 = vmatpush1.bf16.msra.mxu0 %v1504
        %1527 = vmatprep.subr.bf16.mxu0 0
        %1528 = vmatpush1.bf16.msra.mxu0 %v1505
        %1529 = vmatprep.subr.bf16.mxu0 0
        %1530 = vmatpush1.bf16.msra.mxu0 %v1506
        %1531 = vmatprep.subr.bf16.mxu0 0
        %1532 = vmatpush1.bf16.msra.mxu0 0
        %1533 = vmatprep.subr.bf16.mxu0 0
        %1534 = vmatpush1.bf16.msra.mxu0 0
        %1535 = vmatprep.subr.bf16.mxu0 0
        %1536 = vmatpush1.bf16.msra.mxu0 0
        %1537 = vmatprep.subr.bf16.mxu0 0
        %1538 = vmatpush1.bf16.msra.mxu0 0
        %1539 = vmatprep.subr.bf16.mxu0 0
        %1540 = vmatpush1.bf16.msra.mxu0 0
        %1541 = vmatprep.subr.bf16.mxu0 0
        %1542 = vmatpush1.bf16.msra.mxu0 0
        %1543 = vmatprep.subr.bf16.mxu0 0
        %1544 = vmatpush1.bf16.msra.mxu0 0
        %1545 = vmatprep.subr.bf16.mxu0 0
        %1546 = vmatpush1.bf16.msra.mxu0 0
        %1547 = vmatprep.mubr.bf16.mxu0 0
        %1548 = vmatmul.mubr.bf16.gmra.mrb[0].mxu0 %v1443
        %v1549 = vpop.f32.mrb[0].mxu0
        %v1550 = vadd.f32 %v1465, %v1549
        %v1551 = vpop.f32.mrb[0].mxu0
        %v1552 = vpop.f32.mrb[0].mxu0
        %v1553 = vpop.f32.mrb[0].mxu0
        %1554 = vdwg.mxu0
        %v1555 = vmul.f32 %v1550, %v1550
        %v1556 = vmul.f32 %v1550, %v1555
        %v1557 = vmul.f32 %v1556, 0.044715
        %v1558 = vadd.f32 %v1550, %v1557
        %v1559 = vmul.f32 %v1558, 0.7978846
        %v1560 = vtanh.pop %v1559
        %v1561 = vadd.f32 %v1560, 1.0
        %v1562 = vmul.f32 %v1561, 0.5
        %v1563 = vmul.f32 %v1550, %v1562
        %v1564 = vpack.c.bf16 %v1563, %v1563
        %v1565 = vld [vmem:[%s12] sm:$0xf]
        %v1566 = vld [vmem:[%s12 + $0x4] sm:$0xf]
        %v1567 = vld [vmem:[%s12 + $0x8] sm:$0xf]
        %v1568 = vld [vmem:[%s12 + $0xc] sm:$0xf]
        %v1569 = vld [vmem:[%s12 + $0x10] sm:$0xf]
        %v1570 = vld [vmem:[%s12 + $0x14] sm:$0xf]
        %v1571 = vld [vmem:[%s12 + $0x18] sm:$0xf]
        %v1572 = vld [vmem:[%s12 + $0x1c] sm:$0xf]
        %v1573 = vld [vmem:[%s12 + $0x20] sm:$0xf]
        %v1574 = vld [vmem:[%s12 + $0x24] sm:$0xf]
        %v1575 = vld [vmem:[%s12 + $0x28] sm:$0xf]
        %v1576 = vld [vmem:[%s12 + $0x2c] sm:$0xf]
        %v1577 = vld [vmem:[%s12 + $0x30] sm:$0xf]
        %v1578 = vld [vmem:[%s12 + $0x34] sm:$0xf]
        %v1579 = vld [vmem:[%s12 + $0x38] sm:$0xf]
        %v1580 = vld [vmem:[%s12 + $0x3c] sm:$0xf]
        %v1581 = vld [vmem:[%s13] sm:$0x1]
        %v1583 = vlaneseq
        %v1584 = vshrl.u32 %v1583, 7
        %v1585 = vsub.s32 0, %v1584
        %v1586 = vrot.slane %v1581, %v1585
        %v1604 = vunpack.c.l.b16 %v1565
        %v1605 = vunpack.c.l.b16 %v1566
        %v1606 = vunpack.c.l.b16 %v1567
        %v1607 = vunpack.c.l.b16 %v1568
        %v1608 = vunpack.c.l.b16 %v1569
        %v1609 = vunpack.c.l.b16 %v1570
        %v1610 = vunpack.c.l.b16 %v1571
        %v1611 = vunpack.c.l.b16 %v1572
        %v1612 = vunpack.c.l.b16 %v1573
        %v1613 = vunpack.c.l.b16 %v1574
        %v1614 = vunpack.c.l.b16 %v1575
        %v1615 = vunpack.c.l.b16 %v1576
        %v1616 = vunpack.c.l.b16 %v1577
        %v1617 = vunpack.c.l.b16 %v1578
        %v1618 = vunpack.c.l.b16 %v1579
        %v1619 = vunpack.c.l.b16 %v1580
        %v1620 = vpack.c.b16 %v1605, %v1604
        %v1621 = vpack.c.b16 %v1607, %v1606
        %v1622 = vpack.c.b16 %v1609, %v1608
        %v1623 = vpack.c.b16 %v1611, %v1610
        %v1624 = vpack.c.b16 %v1613, %v1612
        %v1625 = vpack.c.b16 %v1615, %v1614
        %v1626 = vpack.c.b16 %v1617, %v1616
        %v1627 = vpack.c.b16 %v1619, %v1618
        %1636 = vmatprep.subr.bf16.mxu0 0
        %1637 = vmatpush1.bf16.msra.mxu0 %v1620
        %1638 = vmatprep.subr.bf16.mxu0 0
        %1639 = vmatpush1.bf16.msra.mxu0 %v1621
        %1640 = vmatprep.subr.bf16.mxu0 0
        %1641 = vmatpush1.bf16.msra.mxu0 %v1622
        %1642 = vmatprep.subr.bf16.mxu0 0
        %1643 = vmatpush1.bf16.msra.mxu0 %v1623
        %1644 = vmatprep.subr.bf16.mxu0 0
        %1645 = vmatpush1.bf16.msra.mxu0 %v1624
        %1646 = vmatprep.subr.bf16.mxu0 0
        %1647 = vmatpush1.bf16.msra.mxu0 %v1625
        %1648 = vmatprep.subr.bf16.mxu0 0
        %1649 = vmatpush1.bf16.msra.mxu0 %v1626
        %1650 = vmatprep.subr.bf16.mxu0 0
        %1651 = vmatpush1.bf16.msra.mxu0 %v1627
        %1652 = vmatprep.subr.bf16.mxu0 0
        %1653 = vmatpush1.bf16.msra.mxu0 0
        %1654 = vmatprep.subr.bf16.mxu0 0
        %1655 = vmatpush1.bf16.msra.mxu0 0
        %1656 = vmatprep.subr.bf16.mxu0 0
        %1657 = vmatpush1.bf16.msra.mxu0 0
        %1658 = vmatprep.subr.bf16.mxu0 0
        %1659 = vmatpush1.bf16.msra.mxu0 0
        %1660 = vmatprep.subr.bf16.mxu0 0
        %1661 = vmatpush1.bf16.msra.mxu0 0
        %1662 = vmatprep.subr.bf16.mxu0 0
        %1663 = vmatpush1.bf16.msra.mxu0 0
        %1664 = vmatprep.subr.bf16.mxu0 0
        %1665 = vmatpush1.bf16.msra.mxu0 0
        %1666 = vmatprep.subr.bf16.mxu0 0
        %1667 = vmatpush1.bf16.msra.mxu0 0
        %1668 = vmatprep.mubr.bf16.mxu0 0
        %1669 = vmatmul.mubr.bf16.gmra.mrb[0].mxu0 %v1564
        %v1670 = vpop.f32.mrb[0].mxu0
        %v1671 = vadd.f32 %v1586, %v1670
        %v1672 = vpop.f32.mrb[0].mxu0
        %v1673 = vpop.f32.mrb[0].mxu0
        %v1674 = vpop.f32.mrb[0].mxu0
        %1675 = vdwg.mxu0
        %v1676 = vadd.f32 %v1442, %v1671
        %v1677 = vld [vmem:[%s14] sm:$0x1]
        %v1678 = vld [vmem:[%s15] sm:$0x1]
        %v1679 = vmul.f32 %v1676, %v535
        %1680 = vadd.xlane.f32.xlu0 %v1679
        %v1681 = vpop.xlane.xlu0 %1680
        %v1682 = vmul.f32 %v1681, 0.03125
        %v1683 = vsub.f32 %v1676, %v1682
        %v1684 = vmul.f32 %v1683, %v535
        %v1685 = vmul.f32 %v1684, %v1684
        %1686 = vadd.xlane.f32.xlu0 %v1685
        %v1687 = vpop.xlane.xlu0 %1686
        %v1688 = vmul.f32 %v1687, 0.03125
        %v1689 = vadd.f32 %v1688, 1e-05
        %v1690 = vrsqrt.pop %v1689
        %v1691 = vmul.f32 %v1684, %v1690
        %v1693 = vlaneseq
        %v1694 = vshrl.u32 %v1693, 7
        %v1695 = vsub.s32 0, %v1694
        %v1696 = vrot.slane %v1677, %v1695
        %v1698 = vmul.f32 %v1691, %v1696
        %v1700 = vlaneseq
        %v1701 = vshrl.u32 %v1700, 7
        %v1702 = vsub.s32 0, %v1701
        %v1703 = vrot.slane %v1678, %v1702
        %v1705 = vadd.f32 %v1698, %v1703
        %v1706 = vpack.c.bf16 %v1705, %v1705
        %s1707 = scalar_lea.vmem %s4, 192
        %v1708 = vld [vmem:[%s1707] sm:$0xff]
        %v1709 = vld [vmem:[%s1707 + $0x8] sm:$0xf]
        %v1710 = vld [vmem:[%s1707 + $0xc] sm:$0xff]
        %v1711 = vld [vmem:[%s1707 + $0x14] sm:$0xf]
        %v1712 = vld [vmem:[%s1707 + $0x18] sm:$0xff]
        %v1713 = vld [vmem:[%s1707 + $0x20] sm:$0xf]
        %v1714 = vld [vmem:[%s1707 + $0x24] sm:$0xff]
        %v1715 = vld [vmem:[%s1707 + $0x2c] sm:$0xf]
        %v1716 = vld [vmem:[%s1707 + $0x30] sm:$0xff]
        %v1717 = vld [vmem:[%s1707 + $0x38] sm:$0xf]
        %v1718 = vld [vmem:[%s1707 + $0x3c] sm:$0xff]
        %v1719 = vld [vmem:[%s1707 + $0x44] sm:$0xf]
        %v1720 = vld [vmem:[%s1707 + $0x48] sm:$0xff]
        %v1721 = vld [vmem:[%s1707 + $0x50] sm:$0xf]
        %v1722 = vld [vmem:[%s1707 + $0x54] sm:$0xff]
        %v1723 = vld [vmem:[%s1707 + $0x5c] sm:$0xf]
        %v1724 = vld [vmem:[%s1707 + $0x60] sm:$0xff]
        %v1725 = vld [vmem:[%s1707 + $0x68] sm:$0xf]
        %v1726 = vld [vmem:[%s1707 + $0x6c] sm:$0xff]
        %v1727 = vld [vmem:[%s1707 + $0x74] sm:$0xf]
        %v1728 = vld [vmem:[%s1707 + $0x78] sm:$0xff]
        %v1729 = vld [vmem:[%s1707 + $0x80] sm:$0xf]
        %v1730 = vld [vmem:[%s1707 + $0x84] sm:$0xff]
        %v1731 = vld [vmem:[%s1707 + $0x8c] sm:$0xf]
        %v1732 = vld [vmem:[%s1707 + $0x90] sm:$0xff]
        %v1733 = vld [vmem:[%s1707 + $0x98] sm:$0xf]
        %v1734 = vld [vmem:[%s1707 + $0x9c] sm:$0xff]
        %v1735 = vld [vmem:[%s1707 + $0xa4] sm:$0xf]
        %v1736 = vld [vmem:[%s1707 + $0xa8] sm:$0xff]
        %v1737 = vld [vmem:[%s1707 + $0xb0] sm:$0xf]
        %v1738 = vld [vmem:[%s1707 + $0xb4] sm:$0xff]
        %v1739 = vld [vmem:[%s1707 + $0xbc] sm:$0xf]
        %s1740 = scalar_lea.vmem %s5, 3
        %v1741 = vld [vmem:[%s1740] sm:$0x7]
        %v1743 = vlaneseq
        %v1744 = vshrl.u32 %v1743, 7
        %v1745 = vsub.s32 0, %v1744
        %v1746 = vrot.slane %v1741, %v1745
        %v1747 = vlaneseq
        %v1748 = vshrl.u32 %v1747, 7
        %v1749 = vsub.s32 1, %v1748
        %v1750 = vrot.slane %v1741, %v1749
        %v1751 = vlaneseq
        %v1752 = vshrl.u32 %v1751, 7
        %v1753 = vsub.s32 2, %v1752
        %v1754 = vrot.slane %v1741, %v1753
        %v1790 = vunpack.c.l.b16 %v1708
        %v1791 = vunpack.c.h.b16 %v1708
        %v1792 = vunpack.c.l.b16 %v1709
        %v1793 = vunpack.c.l.b16 %v1710
        %v1794 = vunpack.c.h.b16 %v1710
        %v1795 = vunpack.c.l.b16 %v1711
        %v1796 = vunpack.c.l.b16 %v1712
        %v1797 = vunpack.c.h.b16 %v1712
        %v1798 = vunpack.c.l.b16 %v1713
        %v1799 = vunpack.c.l.b16 %v1714
        %v1800 = vunpack.c.h.b16 %v1714
        %v1801 = vunpack.c.l.b16 %v1715
        %v1802 = vunpack.c.l.b16 %v1716
        %v1803 = vunpack.c.h.b16 %v1716
        %v1804 = vunpack.c.l.b16 %v1717
        %v1805 = vunpack.c.l.b16 %v1718
        %v1806 = vunpack.c.h.b16 %v1718
        %v1807 = vunpack.c.l.b16 %v1719
        %v1808 = vunpack.c.l.b16 %v1720
        %v1809 = vunpack.c.h.b16 %v1720
        %v1810 = vunpack.c.l.b16 %v1721
        %v1811 = vunpack.c.l.b16 %v1722
        %v1812 = vunpack.c.h.b16 %v1722
        %v1813 = vunpack.c.l.b16 %v1723
        %v1814 = vunpack.c.l.b16 %v1724
        %v1815 = vunpack.c.h.b16 %v1724
        %v1816 = vunpack.c.l.b16 %v1725
        %v1817 = vunpack.c.l.b16 %v1726
        %v1818 = vunpack.c.h.b16 %v1726
        %v1819 = vunpack.c.l.b16 %v1727
        %v1820 = vunpack.c.l.b16 %v1728
        %v1821 = vunpack.c.h.b16 %v1728
        %v1822 = vunpack.c.l.b16 %v1729
        %v1823 = vunpack.c.l.b16 %v1730
        %v1824 = vunpack.c.h.b16 %v1730
        %v1825 = vunpack.c.l.b16 %v1731
        %v1826 = vunpack.c.l.b16 %v1732
        %v1827 = vunpack.c.h.b16 %v1732
        %v1828 = vunpack.c.l.b16 %v1733
        %v1829 = vunpack.c.l.b16 %v1734
        %v1830 = vunpack.c.h.b16 %v1734
        %v1831 = vunpack.c.l.b16 %v1735
        %v1832 = vunpack.c.l.b16 %v1736
        %v1833 = vunpack.c.h.b16 %v1736
        %v1834 = vunpack.c.l.b16 %v1737
        %v1835 = vunpack.c.l.b16 %v1738
        %v1836 = vunpack.c.h.b16 %v1738
        %v1837 = vunpack.c.l.b16 %v1739
        %v1838 = vpack.c.b16 %v1793, %v1790
        %v1839 = vpack.c.b16 %v1794, %v1791
        %v1840 = vpack.c.b16 %v1795, %v1792
        %v1841 = vpack.c.b16 %v1799, %v1796
        %v1842 = vpack.c.b16 %v1800, %v1797
        %v1843 = vpack.c.b16 %v1801, %v1798
        %v1844 = vpack.c.b16 %v1805, %v1802
        %v1845 = vpack.c.b16 %v1806, %v1803
        %v1846 = vpack.c.b16 %v1807, %v1804
        %v1847 = vpack.c.b16 %v1811, %v1808
        %v1848 = vpack.c.b16 %v1812, %v1809
        %v1849 = vpack.c.b16 %v1813, %v1810
        %v1850 = vpack.c.b16 %v1817, %v1814
        %v1851 = vpack.c.b16 %v1818, %v1815
        %v1852 = vpack.c.b16 %v1819, %v1816
        %v1853 = vpack.c.b16 %v1823, %v1820
        %v1854 = vpack.c.b16 %v1824, %v1821
        %v1855 = vpack.c.b16 %v1825, %v1822
        %v1856 = vpack.c.b16 %v1829, %v1826
        %v1857 = vpack.c.b16 %v1830, %v1827
        %v1858 = vpack.c.b16 %v1831, %v1828
        %v1859 = vpack.c.b16 %v1835, %v1832
        %v1860 = vpack.c.b16 %v1836, %v1833
        %v1861 = vpack.c.b16 %v1837, %v1834
        %1886 = vmatprep.subr.bf16.mxu0 %v1839
        %1887 = vmatpush1.bf16.msra.mxu0 %v1838
        %1888 = vmatprep.subr.bf16.mxu0 %v1842
        %1889 = vmatpush1.bf16.msra.mxu0 %v1841
        %1890 = vmatprep.subr.bf16.mxu0 %v1845
        %1891 = vmatpush1.bf16.msra.mxu0 %v1844
        %1892 = vmatprep.subr.bf16.mxu0 %v1848
        %1893 = vmatpush1.bf16.msra.mxu0 %v1847
        %1894 = vmatprep.subr.bf16.mxu0 %v1851
        %1895 = vmatpush1.bf16.msra.mxu0 %v1850
        %1896 = vmatprep.subr.bf16.mxu0 %v1854
        %1897 = vmatpush1.bf16.msra.mxu0 %v1853
        %1898 = vmatprep.subr.bf16.mxu0 %v1857
        %1899 = vmatpush1.bf16.msra.mxu0 %v1856
        %1900 = vmatprep.subr.bf16.mxu0 %v1860
        %1901 = vmatpush1.bf16.msra.mxu0 %v1859
        %1902 = vmatprep.subr.bf16.mxu0 0
        %1903 = vmatpush1.bf16.msra.mxu0 0
        %1904 = vmatprep.subr.bf16.mxu0 0
        %1905 = vmatpush1.bf16.msra.mxu0 0
        %1906 = vmatprep.subr.bf16.mxu0 0
        %1907 = vmatpush1.bf16.msra.mxu0 0
        %1908 = vmatprep.subr.bf16.mxu0 0
        %1909 = vmatpush1.bf16.msra.mxu0 0
        %1910 = vmatprep.subr.bf16.mxu0 0
        %1911 = vmatpush1.bf16.msra.mxu0 0
        %1912 = vmatprep.subr.bf16.mxu0 0
        %1913 = vmatpush1.bf16.msra.mxu0 0
        %1914 = vmatprep.subr.bf16.mxu0 0
        %1915 = vmatpush1.bf16.msra.mxu0 0
        %1916 = vmatprep.subr.bf16.mxu0 0
        %1917 = vmatpush1.bf16.msra.mxu0 0
        %1918 = vmatprep.mubr.bf16.mxu0 0
        %1919 = vmatmul.mubr.bf16.gmra.mrb[0].mxu0 %v1706
        %v1920 = vpop.f32.mrb[0].mxu0
        %v1921 = vadd.f32 %v1746, %v1920
        %v1922 = vpop.f32.mrb[0].mxu0
        %v1923 = vadd.f32 %v1750, %v1922
        %v1924 = vpop.f32.mrb[0].mxu0
        %v1925 = vpop.f32.mrb[0].mxu0
        %1926 = vdwg.mxu0
        %1927 = vmatprep.subr.bf16.mxu0 0
        %1928 = vmatpush1.bf16.msra.mxu0 %v1840
        %1929 = vmatprep.subr.bf16.mxu0 0
        %1930 = vmatpush1.bf16.msra.mxu0 %v1843
        %1931 = vmatprep.subr.bf16.mxu0 0
        %1932 = vmatpush1.bf16.msra.mxu0 %v1846
        %1933 = vmatprep.subr.bf16.mxu0 0
        %1934 = vmatpush1.bf16.msra.mxu0 %v1849
        %1935 = vmatprep.subr.bf16.mxu0 0
        %1936 = vmatpush1.bf16.msra.mxu0 %v1852
        %1937 = vmatprep.subr.bf16.mxu0 0
        %1938 = vmatpush1.bf16.msra.mxu0 %v1855
        %1939 = vmatprep.subr.bf16.mxu0 0
        %1940 = vmatpush1.bf16.msra.mxu0 %v1858
        %1941 = vmatprep.subr.bf16.mxu0 0
        %1942 = vmatpush1.bf16.msra.mxu0 %v1861
        %1943 = vmatprep.subr.bf16.mxu0 0
        %1944 = vmatpush1.bf16.msra.mxu0 0
        %1945 = vmatprep.subr.bf16.mxu0 0
        %1946 = vmatpush1.bf16.msra.mxu0 0
        %1947 = vmatprep.subr.bf16.mxu0 0
        %1948 = vmatpush1.bf16.msra.mxu0 0
        %1949 = vmatprep.subr.bf16.mxu0 0
        %1950 = vmatpush1.bf16.msra.mxu0 0
        %1951 = vmatprep.subr.bf16.mxu0 0
        %1952 = vmatpush1.bf16.msra.mxu0 0
        %1953 = vmatprep.subr.bf16.mxu0 0
        %1954 = vmatpush1.bf16.msra.mxu0 0
        %1955 = vmatprep.subr.bf16.mxu0 0
        %1956 = vmatpush1.bf16.msra.mxu0 0
        %1957 = vmatprep.subr.bf16.mxu0 0
        %1958 = vmatpush1.bf16.msra.mxu0 0
        %1959 = vmatprep.mubr.bf16.mxu0 0
        %1960 = vmatmul.mubr.bf16.gmra.mrb[0].mxu0 %v1706
        %v1961 = vpop.f32.mrb[0].mxu0
        %v1962 = vadd.f32 %v1754, %v1961
        %v1963 = vpop.f32.mrb[0].mxu0
        %v1964 = vpop.f32.mrb[0].mxu0
        %v1965 = vpop.f32.mrb[0].mxu0
        %1966 = vdwg.mxu0
        %v1967 = vpack.c.bf16 %v1921, %v1921
        %v1968 = vpack.c.bf16 %v1923, %v1923
        %v1970 = vsel %vm828, %v1967, 0
        %v1973 = vsel %vm828, %v1968, 0
        %1975 = vmatprep.subr.bf16.mxu0 0
        %1976 = vmatpush1.bf16.xpose.msra.mxu0 %v1973
        %1977 = vmatprep.subr.bf16.mxu0 0
        %1978 = vmatpush1.bf16.xpose.msra.mxu0 0
        %1979 = vmatprep.subr.bf16.mxu0 0
        %1980 = vmatpush1.bf16.xpose.msra.mxu0 0
        %1981 = vmatprep.subr.bf16.mxu0 0
        %1982 = vmatpush1.bf16.xpose.msra.mxu0 0
        %1983 = vmatprep.subr.bf16.mxu0 0
        %1984 = vmatpush1.bf16.xpose.msra.mxu0 0
        %1985 = vmatprep.subr.bf16.mxu0 0
        %1986 = vmatpush1.bf16.xpose.msra.mxu0 0
        %1987 = vmatprep.subr.bf16.mxu0 0
        %1988 = vmatpush1.bf16.xpose.msra.mxu0 0
        %1989 = vmatprep.subr.bf16.mxu0 0
        %1990 = vmatpush1.bf16.xpose.msra.mxu0 0
        %1991 = vmatprep.subr.bf16.mxu0 0
        %1992 = vmatpush1.bf16.xpose.msra.mxu0 0
        %1993 = vmatprep.subr.bf16.mxu0 0
        %1994 = vmatpush1.bf16.xpose.msra.mxu0 0
        %1995 = vmatprep.subr.bf16.mxu0 0
        %1996 = vmatpush1.bf16.xpose.msra.mxu0 0
        %1997 = vmatprep.subr.bf16.mxu0 0
        %1998 = vmatpush1.bf16.xpose.msra.mxu0 0
        %1999 = vmatprep.subr.bf16.mxu0 0
        %2000 = vmatpush1.bf16.xpose.msra.mxu0 0
        %2001 = vmatprep.subr.bf16.mxu0 0
        %2002 = vmatpush1.bf16.xpose.msra.mxu0 0
        %2003 = vmatprep.subr.bf16.mxu0 0
        %2004 = vmatpush1.bf16.xpose.msra.mxu0 0
        %2005 = vmatprep.subr.bf16.mxu0 0
        %2006 = vmatpush1.bf16.xpose.msra.mxu0 0
        %2007 = vmatprep.mubr.bf16.mxu0 0
        %2008 = vmatmul.mubr.bf16.gmra.mrb[0].mxu0 %v1970
        %v2009 = vpop.f32.mrb[0].mxu0
        %v2010 = vadd.f32 0.0, %v2009
        %v2011 = vpop.f32.mrb[0].mxu0
        %v2012 = vpop.f32.mrb[0].mxu0
        %v2013 = vpop.f32.mrb[0].mxu0
        %2014 = vdwg.mxu0
        %v2015 = vmul.f32 %v2010, 0.35355338
        %v2016 = vsel %vm882, %v2015, -1e+30
        %v2017 = vsel %vm884, %v2016, -inf
        %2018 = vmax.xlane.f32.xlu0 %v2017
        %v2019 = vpop.xlane.xlu0 %2018
        %v2020 = vsub.f32 %v2016, %v2019
        %v2021 = vmul.f32 %v2020, 1.442695
        %v2022 = vpow.pop %v2021
        %v2023 = vsel %vm884, %v2022, 0.0
        %2024 = vadd.xlane.f32.xlu0 %v2023
        %v2025 = vpop.xlane.xlu0 %2024
        %v2026 = vrcp.pop %v2025
        %v2027 = vmul.f32 %v2022, %v2026
        %v2028 = vpack.c.bf16 %v2027, %v2027
        %v2029 = vpack.c.bf16 %v1962, %v1962
        %v2031 = vsel %vm884, %v2028, 0
        %v2034 = vsel %vm901, %v2029, 0
        %2036 = vmatprep.subr.bf16.mxu0 0
        %2037 = vmatpush1.bf16.msra.mxu0 %v2034
        %2038 = vmatprep.subr.bf16.mxu0 0
        %2039 = vmatpush1.bf16.msra.mxu0 0
        %2040 = vmatprep.subr.bf16.mxu0 0
        %2041 = vmatpush1.bf16.msra.mxu0 0
        %2042 = vmatprep.subr.bf16.mxu0 0
        %2043 = vmatpush1.bf16.msra.mxu0 0
        %2044 = vmatprep.subr.bf16.mxu0 0
        %2045 = vmatpush1.bf16.msra.mxu0 0
        %2046 = vmatprep.subr.bf16.mxu0 0
        %2047 = vmatpush1.bf16.msra.mxu0 0
        %2048 = vmatprep.subr.bf16.mxu0 0
        %2049 = vmatpush1.bf16.msra.mxu0 0
        %2050 = vmatprep.subr.bf16.mxu0 0
        %2051 = vmatpush1.bf16.msra.mxu0 0
        %2052 = vmatprep.subr.bf16.mxu0 0
        %2053 = vmatpush1.bf16.msra.mxu0 0
        %2054 = vmatprep.subr.bf16.mxu0 0
        %2055 = vmatpush1.bf16.msra.mxu0 0
        %2056 = vmatprep.subr.bf16.mxu0 0
        %2057 = vmatpush1.bf16.msra.mxu0 0
        %2058 = vmatprep.subr.bf16.mxu0 0
        %2059 = vmatpush1.bf16.msra.mxu0 0
        %2060 = vmatprep.subr.bf16.mxu0 0
        %2061 = vmatpush1.bf16.msra.mxu0 0
        %2062 = vmatprep.subr.bf16.mxu0 0
        %2063 = vmatpush1.bf16.msra.mxu0 0
        %2064 = vmatprep.subr.bf16.mxu0 0
        %2065 = vmatpush1.bf16.msra.mxu0 0
        %2066 = vmatprep.subr.bf16.mxu0 0
        %2067 = vmatpush1.bf16.msra.mxu0 0
        %2068 = vmatprep.mubr.bf16.mxu0 0
        %2069 = vmatmul.mubr.bf16.gmra.mrb[0].mxu0 %v2031
        %v2070 = vpop.f32.mrb[0].mxu0
        %v2071 = vadd.f32 0.0, %v2070
        %v2072 = vpop.f32.mrb[0].mxu0
        %v2073 = vpop.f32.mrb[0].mxu0
        %v2074 = vpop.f32.mrb[0].mxu0
        %2075 = vdwg.mxu0
        %2077 = vrot.lane.b32.xlu0 %v1967, 96
        %v2078 = vpop.permute.xlu0 %2077
        %2080 = vrot.lane.b32.xlu0 %v1968, 96
        %v2081 = vpop.permute.xlu0 %2080
        %v2083 = vsel %vm828, %v2078, 0
        %v2086 = vsel %vm828, %v2081, 0
        %2088 = vmatprep.subr.bf16.mxu0 0
        %2089 = vmatpush1.bf16.xpose.msra.mxu0 %v2086
        %2090 = vmatprep.subr.bf16.mxu0 0
        %2091 = vmatpush1.bf16.xpose.msra.mxu0 0
        %2092 = vmatprep.subr.bf16.mxu0 0
        %2093 = vmatpush1.bf16.xpose.msra.mxu0 0
        %2094 = vmatprep.subr.bf16.mxu0 0
        %2095 = vmatpush1.bf16.xpose.msra.mxu0 0
        %2096 = vmatprep.subr.bf16.mxu0 0
        %2097 = vmatpush1.bf16.xpose.msra.mxu0 0
        %2098 = vmatprep.subr.bf16.mxu0 0
        %2099 = vmatpush1.bf16.xpose.msra.mxu0 0
        %2100 = vmatprep.subr.bf16.mxu0 0
        %2101 = vmatpush1.bf16.xpose.msra.mxu0 0
        %2102 = vmatprep.subr.bf16.mxu0 0
        %2103 = vmatpush1.bf16.xpose.msra.mxu0 0
        %2104 = vmatprep.subr.bf16.mxu0 0
        %2105 = vmatpush1.bf16.xpose.msra.mxu0 0
        %2106 = vmatprep.subr.bf16.mxu0 0
        %2107 = vmatpush1.bf16.xpose.msra.mxu0 0
        %2108 = vmatprep.subr.bf16.mxu0 0
        %2109 = vmatpush1.bf16.xpose.msra.mxu0 0
        %2110 = vmatprep.subr.bf16.mxu0 0
        %2111 = vmatpush1.bf16.xpose.msra.mxu0 0
        %2112 = vmatprep.subr.bf16.mxu0 0
        %2113 = vmatpush1.bf16.xpose.msra.mxu0 0
        %2114 = vmatprep.subr.bf16.mxu0 0
        %2115 = vmatpush1.bf16.xpose.msra.mxu0 0
        %2116 = vmatprep.subr.bf16.mxu0 0
        %2117 = vmatpush1.bf16.xpose.msra.mxu0 0
        %2118 = vmatprep.subr.bf16.mxu0 0
        %2119 = vmatpush1.bf16.xpose.msra.mxu0 0
        %2120 = vmatprep.mubr.bf16.mxu0 0
        %2121 = vmatmul.mubr.bf16.gmra.mrb[0].mxu0 %v2083
        %v2122 = vpop.f32.mrb[0].mxu0
        %v2123 = vadd.f32 0.0, %v2122
        %v2124 = vpop.f32.mrb[0].mxu0
        %v2125 = vpop.f32.mrb[0].mxu0
        %v2126 = vpop.f32.mrb[0].mxu0
        %2127 = vdwg.mxu0
        %v2128 = vmul.f32 %v2123, 0.35355338
        %v2129 = vsel %vm882, %v2128, -1e+30
        %v2130 = vsel %vm884, %v2129, -inf
        %2131 = vmax.xlane.f32.xlu0 %v2130
        %v2132 = vpop.xlane.xlu0 %2131
        %v2133 = vsub.f32 %v2129, %v2132
        %v2134 = vmul.f32 %v2133, 1.442695
        %v2135 = vpow.pop %v2134
        %v2136 = vsel %vm884, %v2135, 0.0
        %2137 = vadd.xlane.f32.xlu0 %v2136
        %v2138 = vpop.xlane.xlu0 %2137
        %v2139 = vrcp.pop %v2138
        %v2140 = vmul.f32 %v2135, %v2139
        %v2141 = vpack.c.bf16 %v2140, %v2140
        %2143 = vrot.lane.b32.xlu0 %v2029, 96
        %v2144 = vpop.permute.xlu0 %2143
        %v2146 = vsel %vm884, %v2141, 0
        %v2149 = vsel %vm901, %v2144, 0
        %2151 = vmatprep.subr.bf16.mxu0 0
        %2152 = vmatpush1.bf16.msra.mxu0 %v2149
        %2153 = vmatprep.subr.bf16.mxu0 0
        %2154 = vmatpush1.bf16.msra.mxu0 0
        %2155 = vmatprep.subr.bf16.mxu0 0
        %2156 = vmatpush1.bf16.msra.mxu0 0
        %2157 = vmatprep.subr.bf16.mxu0 0
        %2158 = vmatpush1.bf16.msra.mxu0 0
        %2159 = vmatprep.subr.bf16.mxu0 0
        %2160 = vmatpush1.bf16.msra.mxu0 0
        %2161 = vmatprep.subr.bf16.mxu0 0
        %2162 = vmatpush1.bf16.msra.mxu0 0
        %2163 = vmatprep.subr.bf16.mxu0 0
        %2164 = vmatpush1.bf16.msra.mxu0 0
        %2165 = vmatprep.subr.bf16.mxu0 0
        %2166 = vmatpush1.bf16.msra.mxu0 0
        %2167 = vmatprep.subr.bf16.mxu0 0
        %2168 = vmatpush1.bf16.msra.mxu0 0
        %2169 = vmatprep.subr.bf16.mxu0 0
        %2170 = vmatpush1.bf16.msra.mxu0 0
        %2171 = vmatprep.subr.bf16.mxu0 0
        %2172 = vmatpush1.bf16.msra.mxu0 0
        %2173 = vmatprep.subr.bf16.mxu0 0
        %2174 = vmatpush1.bf16.msra.mxu0 0
        %2175 = vmatprep.subr.bf16.mxu0 0
        %2176 = vmatpush1.bf16.msra.mxu0 0
        %2177 = vmatprep.subr.bf16.mxu0 0
        %2178 = vmatpush1.bf16.msra.mxu0 0
        %2179 = vmatprep.subr.bf16.mxu0 0
        %2180 = vmatpush1.bf16.msra.mxu0 0
        %2181 = vmatprep.subr.bf16.mxu0 0
        %2182 = vmatpush1.bf16.msra.mxu0 0
        %2183 = vmatprep.mubr.bf16.mxu0 0
        %2184 = vmatmul.mubr.bf16.gmra.mrb[0].mxu0 %v2146
        %v2185 = vpop.f32.mrb[0].mxu0
        %v2186 = vadd.f32 0.0, %v2185
        %v2187 = vpop.f32.mrb[0].mxu0
        %v2188 = vpop.f32.mrb[0].mxu0
        %v2189 = vpop.f32.mrb[0].mxu0
        %2190 = vdwg.mxu0
        %2191 = vrot.lane.b32.xlu0 %v1967, 64
        %v2192 = vpop.permute.xlu0 %2191
        %2193 = vrot.lane.b32.xlu0 %v1968, 64
        %v2194 = vpop.permute.xlu0 %2193
        %v2196 = vsel %vm828, %v2192, 0
        %v2199 = vsel %vm828, %v2194, 0
        %2201 = vmatprep.subr.bf16.mxu0 0
        %2202 = vmatpush1.bf16.xpose.msra.mxu0 %v2199
        %2203 = vmatprep.subr.bf16.mxu0 0
        %2204 = vmatpush1.bf16.xpose.msra.mxu0 0
        %2205 = vmatprep.subr.bf16.mxu0 0
        %2206 = vmatpush1.bf16.xpose.msra.mxu0 0
        %2207 = vmatprep.subr.bf16.mxu0 0
        %2208 = vmatpush1.bf16.xpose.msra.mxu0 0
        %2209 = vmatprep.subr.bf16.mxu0 0
        %2210 = vmatpush1.bf16.xpose.msra.mxu0 0
        %2211 = vmatprep.subr.bf16.mxu0 0
        %2212 = vmatpush1.bf16.xpose.msra.mxu0 0
        %2213 = vmatprep.subr.bf16.mxu0 0
        %2214 = vmatpush1.bf16.xpose.msra.mxu0 0
        %2215 = vmatprep.subr.bf16.mxu0 0
        %2216 = vmatpush1.bf16.xpose.msra.mxu0 0
        %2217 = vmatprep.subr.bf16.mxu0 0
        %2218 = vmatpush1.bf16.xpose.msra.mxu0 0
        %2219 = vmatprep.subr.bf16.mxu0 0
        %2220 = vmatpush1.bf16.xpose.msra.mxu0 0
        %2221 = vmatprep.subr.bf16.mxu0 0
        %2222 = vmatpush1.bf16.xpose.msra.mxu0 0
        %2223 = vmatprep.subr.bf16.mxu0 0
        %2224 = vmatpush1.bf16.xpose.msra.mxu0 0
        %2225 = vmatprep.subr.bf16.mxu0 0
        %2226 = vmatpush1.bf16.xpose.msra.mxu0 0
        %2227 = vmatprep.subr.bf16.mxu0 0
        %2228 = vmatpush1.bf16.xpose.msra.mxu0 0
        %2229 = vmatprep.subr.bf16.mxu0 0
        %2230 = vmatpush1.bf16.xpose.msra.mxu0 0
        %2231 = vmatprep.subr.bf16.mxu0 0
        %2232 = vmatpush1.bf16.xpose.msra.mxu0 0
        %2233 = vmatprep.mubr.bf16.mxu0 0
        %2234 = vmatmul.mubr.bf16.gmra.mrb[0].mxu0 %v2196
        %v2235 = vpop.f32.mrb[0].mxu0
        %v2236 = vadd.f32 0.0, %v2235
        %v2237 = vpop.f32.mrb[0].mxu0
        %v2238 = vpop.f32.mrb[0].mxu0
        %v2239 = vpop.f32.mrb[0].mxu0
        %2240 = vdwg.mxu0
        %v2241 = vmul.f32 %v2236, 0.35355338
        %v2242 = vsel %vm882, %v2241, -1e+30
        %v2243 = vsel %vm884, %v2242, -inf
        %2244 = vmax.xlane.f32.xlu0 %v2243
        %v2245 = vpop.xlane.xlu0 %2244
        %v2246 = vsub.f32 %v2242, %v2245
        %v2247 = vmul.f32 %v2246, 1.442695
        %v2248 = vpow.pop %v2247
        %v2249 = vsel %vm884, %v2248, 0.0
        %2250 = vadd.xlane.f32.xlu0 %v2249
        %v2251 = vpop.xlane.xlu0 %2250
        %v2252 = vrcp.pop %v2251
        %v2253 = vmul.f32 %v2248, %v2252
        %v2254 = vpack.c.bf16 %v2253, %v2253
        %2255 = vrot.lane.b32.xlu0 %v2029, 64
        %v2256 = vpop.permute.xlu0 %2255
        %v2258 = vsel %vm884, %v2254, 0
        %v2261 = vsel %vm901, %v2256, 0
        %2263 = vmatprep.subr.bf16.mxu0 0
        %2264 = vmatpush1.bf16.msra.mxu0 %v2261
        %2265 = vmatprep.subr.bf16.mxu0 0
        %2266 = vmatpush1.bf16.msra.mxu0 0
        %2267 = vmatprep.subr.bf16.mxu0 0
        %2268 = vmatpush1.bf16.msra.mxu0 0
        %2269 = vmatprep.subr.bf16.mxu0 0
        %2270 = vmatpush1.bf16.msra.mxu0 0
        %2271 = vmatprep.subr.bf16.mxu0 0
        %2272 = vmatpush1.bf16.msra.mxu0 0
        %2273 = vmatprep.subr.bf16.mxu0 0
        %2274 = vmatpush1.bf16.msra.mxu0 0
        %2275 = vmatprep.subr.bf16.mxu0 0
        %2276 = vmatpush1.bf16.msra.mxu0 0
        %2277 = vmatprep.subr.bf16.mxu0 0
        %2278 = vmatpush1.bf16.msra.mxu0 0
        %2279 = vmatprep.subr.bf16.mxu0 0
        %2280 = vmatpush1.bf16.msra.mxu0 0
        %2281 = vmatprep.subr.bf16.mxu0 0
        %2282 = vmatpush1.bf16.msra.mxu0 0
        %2283 = vmatprep.subr.bf16.mxu0 0
        %2284 = vmatpush1.bf16.msra.mxu0 0
        %2285 = vmatprep.subr.bf16.mxu0 0
        %2286 = vmatpush1.bf16.msra.mxu0 0
        %2287 = vmatprep.subr.bf16.mxu0 0
        %2288 = vmatpush1.bf16.msra.mxu0 0
        %2289 = vmatprep.subr.bf16.mxu0 0
        %2290 = vmatpush1.bf16.msra.mxu0 0
        %2291 = vmatprep.subr.bf16.mxu0 0
        %2292 = vmatpush1.bf16.msra.mxu0 0
        %2293 = vmatprep.subr.bf16.mxu0 0
        %2294 = vmatpush1.bf16.msra.mxu0 0
        %2295 = vmatprep.mubr.bf16.mxu0 0
        %2296 = vmatmul.mubr.bf16.gmra.mrb[0].mxu0 %v2258
        %v2297 = vpop.f32.mrb[0].mxu0
        %v2298 = vadd.f32 0.0, %v2297
        %v2299 = vpop.f32.mrb[0].mxu0
        %v2300 = vpop.f32.mrb[0].mxu0
        %v2301 = vpop.f32.mrb[0].mxu0
        %2302 = vdwg.mxu0
        %2303 = vrot.lane.b32.xlu0 %v1967, 32
        %v2304 = vpop.permute.xlu0 %2303
        %2305 = vrot.lane.b32.xlu0 %v1968, 32
        %v2306 = vpop.permute.xlu0 %2305
        %v2308 = vsel %vm828, %v2304, 0
        %v2311 = vsel %vm828, %v2306, 0
        %2313 = vmatprep.subr.bf16.mxu0 0
        %2314 = vmatpush1.bf16.xpose.msra.mxu0 %v2311
        %2315 = vmatprep.subr.bf16.mxu0 0
        %2316 = vmatpush1.bf16.xpose.msra.mxu0 0
        %2317 = vmatprep.subr.bf16.mxu0 0
        %2318 = vmatpush1.bf16.xpose.msra.mxu0 0
        %2319 = vmatprep.subr.bf16.mxu0 0
        %2320 = vmatpush1.bf16.xpose.msra.mxu0 0
        %2321 = vmatprep.subr.bf16.mxu0 0
        %2322 = vmatpush1.bf16.xpose.msra.mxu0 0
        %2323 = vmatprep.subr.bf16.mxu0 0
        %2324 = vmatpush1.bf16.xpose.msra.mxu0 0
        %2325 = vmatprep.subr.bf16.mxu0 0
        %2326 = vmatpush1.bf16.xpose.msra.mxu0 0
        %2327 = vmatprep.subr.bf16.mxu0 0
        %2328 = vmatpush1.bf16.xpose.msra.mxu0 0
        %2329 = vmatprep.subr.bf16.mxu0 0
        %2330 = vmatpush1.bf16.xpose.msra.mxu0 0
        %2331 = vmatprep.subr.bf16.mxu0 0
        %2332 = vmatpush1.bf16.xpose.msra.mxu0 0
        %2333 = vmatprep.subr.bf16.mxu0 0
        %2334 = vmatpush1.bf16.xpose.msra.mxu0 0
        %2335 = vmatprep.subr.bf16.mxu0 0
        %2336 = vmatpush1.bf16.xpose.msra.mxu0 0
        %2337 = vmatprep.subr.bf16.mxu0 0
        %2338 = vmatpush1.bf16.xpose.msra.mxu0 0
        %2339 = vmatprep.subr.bf16.mxu0 0
        %2340 = vmatpush1.bf16.xpose.msra.mxu0 0
        %2341 = vmatprep.subr.bf16.mxu0 0
        %2342 = vmatpush1.bf16.xpose.msra.mxu0 0
        %2343 = vmatprep.subr.bf16.mxu0 0
        %2344 = vmatpush1.bf16.xpose.msra.mxu0 0
        %2345 = vmatprep.mubr.bf16.mxu0 0
        %2346 = vmatmul.mubr.bf16.gmra.mrb[0].mxu0 %v2308
        %v2347 = vpop.f32.mrb[0].mxu0
        %v2348 = vadd.f32 0.0, %v2347
        %v2349 = vpop.f32.mrb[0].mxu0
        %v2350 = vpop.f32.mrb[0].mxu0
        %v2351 = vpop.f32.mrb[0].mxu0
        %2352 = vdwg.mxu0
        %v2353 = vmul.f32 %v2348, 0.35355338
        %v2354 = vsel %vm882, %v2353, -1e+30
        %v2355 = vsel %vm884, %v2354, -inf
        %2356 = vmax.xlane.f32.xlu0 %v2355
        %v2357 = vpop.xlane.xlu0 %2356
        %v2358 = vsub.f32 %v2354, %v2357
        %v2359 = vmul.f32 %v2358, 1.442695
        %v2360 = vpow.pop %v2359
        %v2361 = vsel %vm884, %v2360, 0.0
        %2362 = vadd.xlane.f32.xlu0 %v2361
        %v2363 = vpop.xlane.xlu0 %2362
        %v2364 = vrcp.pop %v2363
        %v2365 = vmul.f32 %v2360, %v2364
        %v2366 = vpack.c.bf16 %v2365, %v2365
        %2367 = vrot.lane.b32.xlu0 %v2029, 32
        %v2368 = vpop.permute.xlu0 %2367
        %v2370 = vsel %vm884, %v2366, 0
        %v2373 = vsel %vm901, %v2368, 0
        %2375 = vmatprep.subr.bf16.mxu0 0
        %2376 = vmatpush1.bf16.msra.mxu0 %v2373
        %2377 = vmatprep.subr.bf16.mxu0 0
        %2378 = vmatpush1.bf16.msra.mxu0 0
        %2379 = vmatprep.subr.bf16.mxu0 0
        %2380 = vmatpush1.bf16.msra.mxu0 0
        %2381 = vmatprep.subr.bf16.mxu0 0
        %2382 = vmatpush1.bf16.msra.mxu0 0
        %2383 = vmatprep.subr.bf16.mxu0 0
        %2384 = vmatpush1.bf16.msra.mxu0 0
        %2385 = vmatprep.subr.bf16.mxu0 0
        %2386 = vmatpush1.bf16.msra.mxu0 0
        %2387 = vmatprep.subr.bf16.mxu0 0
        %2388 = vmatpush1.bf16.msra.mxu0 0
        %2389 = vmatprep.subr.bf16.mxu0 0
        %2390 = vmatpush1.bf16.msra.mxu0 0
        %2391 = vmatprep.subr.bf16.mxu0 0
        %2392 = vmatpush1.bf16.msra.mxu0 0
        %2393 = vmatprep.subr.bf16.mxu0 0
        %2394 = vmatpush1.bf16.msra.mxu0 0
        %2395 = vmatprep.subr.bf16.mxu0 0
        %2396 = vmatpush1.bf16.msra.mxu0 0
        %2397 = vmatprep.subr.bf16.mxu0 0
        %2398 = vmatpush1.bf16.msra.mxu0 0
        %2399 = vmatprep.subr.bf16.mxu0 0
        %2400 = vmatpush1.bf16.msra.mxu0 0
        %2401 = vmatprep.subr.bf16.mxu0 0
        %2402 = vmatpush1.bf16.msra.mxu0 0
        %2403 = vmatprep.subr.bf16.mxu0 0
        %2404 = vmatpush1.bf16.msra.mxu0 0
        %2405 = vmatprep.subr.bf16.mxu0 0
        %2406 = vmatpush1.bf16.msra.mxu0 0
        %2407 = vmatprep.mubr.bf16.mxu0 0
        %2408 = vmatmul.mubr.bf16.gmra.mrb[0].mxu0 %v2370
        %v2409 = vpop.f32.mrb[0].mxu0
        %v2410 = vadd.f32 0.0, %v2409
        %v2411 = vpop.f32.mrb[0].mxu0
        %v2412 = vpop.f32.mrb[0].mxu0
        %v2413 = vpop.f32.mrb[0].mxu0
        %2414 = vdwg.mxu0
        %2416 = vrot.lane.b32.xlu0 %v2186, 32
        %v2417 = vpop.permute.xlu0 %2416
        %2420 = vrot.lane.b32.xlu0 %v2298, 64
        %v2421 = vpop.permute.xlu0 %2420
        %2424 = vrot.lane.b32.xlu0 %v2410, 96
        %v2425 = vpop.permute.xlu0 %2424
        %v2427 = vsel %vm828, %v2071, %v2417
        %v2428 = vsel %vm1297, %v2427, %v2421
        %v2429 = vsel %vm1299, %v2428, %v2425
        %v2430 = vpack.c.bf16 %v2429, %v2429
        %s2431 = scalar_lea.vmem %s6, 64
        %v2432 = vld [vmem:[%s2431] sm:$0xf]
        %v2433 = vld [vmem:[%s2431 + $0x4] sm:$0xf]
        %v2434 = vld [vmem:[%s2431 + $0x8] sm:$0xf]
        %v2435 = vld [vmem:[%s2431 + $0xc] sm:$0xf]
        %v2436 = vld [vmem:[%s2431 + $0x10] sm:$0xf]
        %v2437 = vld [vmem:[%s2431 + $0x14] sm:$0xf]
        %v2438 = vld [vmem:[%s2431 + $0x18] sm:$0xf]
        %v2439 = vld [vmem:[%s2431 + $0x1c] sm:$0xf]
        %v2440 = vld [vmem:[%s2431 + $0x20] sm:$0xf]
        %v2441 = vld [vmem:[%s2431 + $0x24] sm:$0xf]
        %v2442 = vld [vmem:[%s2431 + $0x28] sm:$0xf]
        %v2443 = vld [vmem:[%s2431 + $0x2c] sm:$0xf]
        %v2444 = vld [vmem:[%s2431 + $0x30] sm:$0xf]
        %v2445 = vld [vmem:[%s2431 + $0x34] sm:$0xf]
        %v2446 = vld [vmem:[%s2431 + $0x38] sm:$0xf]
        %v2447 = vld [vmem:[%s2431 + $0x3c] sm:$0xf]
        %s2448 = scalar_lea.vmem %s7, 1
        %v2449 = vld [vmem:[%s2448] sm:$0x1]
        %v2451 = vlaneseq
        %v2452 = vshrl.u32 %v2451, 7
        %v2453 = vsub.s32 0, %v2452
        %v2454 = vrot.slane %v2449, %v2453
        %v2472 = vunpack.c.l.b16 %v2432
        %v2473 = vunpack.c.l.b16 %v2433
        %v2474 = vunpack.c.l.b16 %v2434
        %v2475 = vunpack.c.l.b16 %v2435
        %v2476 = vunpack.c.l.b16 %v2436
        %v2477 = vunpack.c.l.b16 %v2437
        %v2478 = vunpack.c.l.b16 %v2438
        %v2479 = vunpack.c.l.b16 %v2439
        %v2480 = vunpack.c.l.b16 %v2440
        %v2481 = vunpack.c.l.b16 %v2441
        %v2482 = vunpack.c.l.b16 %v2442
        %v2483 = vunpack.c.l.b16 %v2443
        %v2484 = vunpack.c.l.b16 %v2444
        %v2485 = vunpack.c.l.b16 %v2445
        %v2486 = vunpack.c.l.b16 %v2446
        %v2487 = vunpack.c.l.b16 %v2447
        %v2488 = vpack.c.b16 %v2473, %v2472
        %v2489 = vpack.c.b16 %v2475, %v2474
        %v2490 = vpack.c.b16 %v2477, %v2476
        %v2491 = vpack.c.b16 %v2479, %v2478
        %v2492 = vpack.c.b16 %v2481, %v2480
        %v2493 = vpack.c.b16 %v2483, %v2482
        %v2494 = vpack.c.b16 %v2485, %v2484
        %v2495 = vpack.c.b16 %v2487, %v2486
        %2504 = vmatprep.subr.bf16.mxu0 0
        %2505 = vmatpush1.bf16.msra.mxu0 %v2488
        %2506 = vmatprep.subr.bf16.mxu0 0
        %2507 = vmatpush1.bf16.msra.mxu0 %v2489
        %2508 = vmatprep.subr.bf16.mxu0 0
        %2509 = vmatpush1.bf16.msra.mxu0 %v2490
        %2510 = vmatprep.subr.bf16.mxu0 0
        %2511 = vmatpush1.bf16.msra.mxu0 %v2491
        %2512 = vmatprep.subr.bf16.mxu0 0
        %2513 = vmatpush1.bf16.msra.mxu0 %v2492
        %2514 = vmatprep.subr.bf16.mxu0 0
        %2515 = vmatpush1.bf16.msra.mxu0 %v2493
        %2516 = vmatprep.subr.bf16.mxu0 0
        %2517 = vmatpush1.bf16.msra.mxu0 %v2494
        %2518 = vmatprep.subr.bf16.mxu0 0
        %2519 = vmatpush1.bf16.msra.mxu0 %v2495
        %2520 = vmatprep.subr.bf16.mxu0 0
        %2521 = vmatpush1.bf16.msra.mxu0 0
        %2522 = vmatprep.subr.bf16.mxu0 0
        %2523 = vmatpush1.bf16.msra.mxu0 0
        %2524 = vmatprep.subr.bf16.mxu0 0
        %2525 = vmatpush1.bf16.msra.mxu0 0
        %2526 = vmatprep.subr.bf16.mxu0 0
        %2527 = vmatpush1.bf16.msra.mxu0 0
        %2528 = vmatprep.subr.bf16.mxu0 0
        %2529 = vmatpush1.bf16.msra.mxu0 0
        %2530 = vmatprep.subr.bf16.mxu0 0
        %2531 = vmatpush1.bf16.msra.mxu0 0
        %2532 = vmatprep.subr.bf16.mxu0 0
        %2533 = vmatpush1.bf16.msra.mxu0 0
        %2534 = vmatprep.subr.bf16.mxu0 0
        %2535 = vmatpush1.bf16.msra.mxu0 0
        %2536 = vmatprep.mubr.bf16.mxu0 0
        %2537 = vmatmul.mubr.bf16.gmra.mrb[0].mxu0 %v2430
        %v2538 = vpop.f32.mrb[0].mxu0
        %v2539 = vadd.f32 %v2454, %v2538
        %v2540 = vpop.f32.mrb[0].mxu0
        %v2541 = vpop.f32.mrb[0].mxu0
        %v2542 = vpop.f32.mrb[0].mxu0
        %2543 = vdwg.mxu0
        %v2544 = vadd.f32 %v1705, %v2539
        %s2545 = scalar_lea.vmem %s8, 1
        %v2546 = vld [vmem:[%s2545] sm:$0x1]
        %s2547 = scalar_lea.vmem %s9, 1
        %v2548 = vld [vmem:[%s2547] sm:$0x1]
        %v2549 = vmul.f32 %v2544, %v535
        %2550 = vadd.xlane.f32.xlu0 %v2549
        %v2551 = vpop.xlane.xlu0 %2550
        %v2552 = vmul.f32 %v2551, 0.03125
        %v2553 = vsub.f32 %v2544, %v2552
        %v2554 = vmul.f32 %v2553, %v535
        %v2555 = vmul.f32 %v2554, %v2554
        %2556 = vadd.xlane.f32.xlu0 %v2555
        %v2557 = vpop.xlane.xlu0 %2556
        %v2558 = vmul.f32 %v2557, 0.03125
        %v2559 = vadd.f32 %v2558, 1e-05
        %v2560 = vrsqrt.pop %v2559
        %v2561 = vmul.f32 %v2554, %v2560
        %v2563 = vlaneseq
        %v2564 = vshrl.u32 %v2563, 7
        %v2565 = vsub.s32 0, %v2564
        %v2566 = vrot.slane %v2546, %v2565
        %v2568 = vmul.f32 %v2561, %v2566
        %v2570 = vlaneseq
        %v2571 = vshrl.u32 %v2570, 7
        %v2572 = vsub.s32 0, %v2571
        %v2573 = vrot.slane %v2548, %v2572
        %v2575 = vadd.f32 %v2568, %v2573
        %v2576 = vpack.c.bf16 %v2575, %v2575
        %s2577 = scalar_lea.vmem %s10, 64
        %v2578 = vld [vmem:[%s2577] sm:$0xf]
        %v2579 = vld [vmem:[%s2577 + $0x4] sm:$0xf]
        %v2580 = vld [vmem:[%s2577 + $0x8] sm:$0xf]
        %v2581 = vld [vmem:[%s2577 + $0xc] sm:$0xf]
        %v2582 = vld [vmem:[%s2577 + $0x10] sm:$0xf]
        %v2583 = vld [vmem:[%s2577 + $0x14] sm:$0xf]
        %v2584 = vld [vmem:[%s2577 + $0x18] sm:$0xf]
        %v2585 = vld [vmem:[%s2577 + $0x1c] sm:$0xf]
        %v2586 = vld [vmem:[%s2577 + $0x20] sm:$0xf]
        %v2587 = vld [vmem:[%s2577 + $0x24] sm:$0xf]
        %v2588 = vld [vmem:[%s2577 + $0x28] sm:$0xf]
        %v2589 = vld [vmem:[%s2577 + $0x2c] sm:$0xf]
        %v2590 = vld [vmem:[%s2577 + $0x30] sm:$0xf]
        %v2591 = vld [vmem:[%s2577 + $0x34] sm:$0xf]
        %v2592 = vld [vmem:[%s2577 + $0x38] sm:$0xf]
        %v2593 = vld [vmem:[%s2577 + $0x3c] sm:$0xf]
        %s2594 = scalar_lea.vmem %s11, 1
        %v2595 = vld [vmem:[%s2594] sm:$0x1]
        %v2597 = vlaneseq
        %v2598 = vshrl.u32 %v2597, 7
        %v2599 = vsub.s32 0, %v2598
        %v2600 = vrot.slane %v2595, %v2599
        %v2618 = vunpack.c.l.b16 %v2578
        %v2619 = vunpack.c.l.b16 %v2579
        %v2620 = vunpack.c.l.b16 %v2580
        %v2621 = vunpack.c.l.b16 %v2581
        %v2622 = vunpack.c.l.b16 %v2582
        %v2623 = vunpack.c.l.b16 %v2583
        %v2624 = vunpack.c.l.b16 %v2584
        %v2625 = vunpack.c.l.b16 %v2585
        %v2626 = vunpack.c.l.b16 %v2586
        %v2627 = vunpack.c.l.b16 %v2587
        %v2628 = vunpack.c.l.b16 %v2588
        %v2629 = vunpack.c.l.b16 %v2589
        %v2630 = vunpack.c.l.b16 %v2590
        %v2631 = vunpack.c.l.b16 %v2591
        %v2632 = vunpack.c.l.b16 %v2592
        %v2633 = vunpack.c.l.b16 %v2593
        %v2634 = vpack.c.b16 %v2619, %v2618
        %v2635 = vpack.c.b16 %v2621, %v2620
        %v2636 = vpack.c.b16 %v2623, %v2622
        %v2637 = vpack.c.b16 %v2625, %v2624
        %v2638 = vpack.c.b16 %v2627, %v2626
        %v2639 = vpack.c.b16 %v2629, %v2628
        %v2640 = vpack.c.b16 %v2631, %v2630
        %v2641 = vpack.c.b16 %v2633, %v2632
        %2650 = vmatprep.subr.bf16.mxu0 0
        %2651 = vmatpush1.bf16.msra.mxu0 %v2634
        %2652 = vmatprep.subr.bf16.mxu0 0
        %2653 = vmatpush1.bf16.msra.mxu0 %v2635
        %2654 = vmatprep.subr.bf16.mxu0 0
        %2655 = vmatpush1.bf16.msra.mxu0 %v2636
        %2656 = vmatprep.subr.bf16.mxu0 0
        %2657 = vmatpush1.bf16.msra.mxu0 %v2637
        %2658 = vmatprep.subr.bf16.mxu0 0
        %2659 = vmatpush1.bf16.msra.mxu0 %v2638
        %2660 = vmatprep.subr.bf16.mxu0 0
        %2661 = vmatpush1.bf16.msra.mxu0 %v2639
        %2662 = vmatprep.subr.bf16.mxu0 0
        %2663 = vmatpush1.bf16.msra.mxu0 %v2640
        %2664 = vmatprep.subr.bf16.mxu0 0
        %2665 = vmatpush1.bf16.msra.mxu0 %v2641
        %2666 = vmatprep.subr.bf16.mxu0 0
        %2667 = vmatpush1.bf16.msra.mxu0 0
        %2668 = vmatprep.subr.bf16.mxu0 0
        %2669 = vmatpush1.bf16.msra.mxu0 0
        %2670 = vmatprep.subr.bf16.mxu0 0
        %2671 = vmatpush1.bf16.msra.mxu0 0
        %2672 = vmatprep.subr.bf16.mxu0 0
        %2673 = vmatpush1.bf16.msra.mxu0 0
        %2674 = vmatprep.subr.bf16.mxu0 0
        %2675 = vmatpush1.bf16.msra.mxu0 0
        %2676 = vmatprep.subr.bf16.mxu0 0
        %2677 = vmatpush1.bf16.msra.mxu0 0
        %2678 = vmatprep.subr.bf16.mxu0 0
        %2679 = vmatpush1.bf16.msra.mxu0 0
        %2680 = vmatprep.subr.bf16.mxu0 0
        %2681 = vmatpush1.bf16.msra.mxu0 0
        %2682 = vmatprep.mubr.bf16.mxu0 0
        %2683 = vmatmul.mubr.bf16.gmra.mrb[0].mxu0 %v2576
        %v2684 = vpop.f32.mrb[0].mxu0
        %v2685 = vadd.f32 %v2600, %v2684
        %v2686 = vpop.f32.mrb[0].mxu0
        %v2687 = vpop.f32.mrb[0].mxu0
        %v2688 = vpop.f32.mrb[0].mxu0
        %2689 = vdwg.mxu0
        %v2690 = vmul.f32 %v2685, %v2685
        %v2691 = vmul.f32 %v2685, %v2690
        %v2692 = vmul.f32 %v2691, 0.044715
        %v2693 = vadd.f32 %v2685, %v2692
        %v2694 = vmul.f32 %v2693, 0.7978846
        %v2695 = vtanh.pop %v2694
        %v2696 = vadd.f32 %v2695, 1.0
        %v2697 = vmul.f32 %v2696, 0.5
        %v2698 = vmul.f32 %v2685, %v2697
        %v2699 = vpack.c.bf16 %v2698, %v2698
        %s2700 = scalar_lea.vmem %s12, 64
        %v2701 = vld [vmem:[%s2700] sm:$0xf]
        %v2702 = vld [vmem:[%s2700 + $0x4] sm:$0xf]
        %v2703 = vld [vmem:[%s2700 + $0x8] sm:$0xf]
        %v2704 = vld [vmem:[%s2700 + $0xc] sm:$0xf]
        %v2705 = vld [vmem:[%s2700 + $0x10] sm:$0xf]
        %v2706 = vld [vmem:[%s2700 + $0x14] sm:$0xf]
        %v2707 = vld [vmem:[%s2700 + $0x18] sm:$0xf]
        %v2708 = vld [vmem:[%s2700 + $0x1c] sm:$0xf]
        %v2709 = vld [vmem:[%s2700 + $0x20] sm:$0xf]
        %v2710 = vld [vmem:[%s2700 + $0x24] sm:$0xf]
        %v2711 = vld [vmem:[%s2700 + $0x28] sm:$0xf]
        %v2712 = vld [vmem:[%s2700 + $0x2c] sm:$0xf]
        %v2713 = vld [vmem:[%s2700 + $0x30] sm:$0xf]
        %v2714 = vld [vmem:[%s2700 + $0x34] sm:$0xf]
        %v2715 = vld [vmem:[%s2700 + $0x38] sm:$0xf]
        %v2716 = vld [vmem:[%s2700 + $0x3c] sm:$0xf]
        %s2717 = scalar_lea.vmem %s13, 1
        %v2718 = vld [vmem:[%s2717] sm:$0x1]
        %v2720 = vlaneseq
        %v2721 = vshrl.u32 %v2720, 7
        %v2722 = vsub.s32 0, %v2721
        %v2723 = vrot.slane %v2718, %v2722
        %v2741 = vunpack.c.l.b16 %v2701
        %v2742 = vunpack.c.l.b16 %v2702
        %v2743 = vunpack.c.l.b16 %v2703
        %v2744 = vunpack.c.l.b16 %v2704
        %v2745 = vunpack.c.l.b16 %v2705
        %v2746 = vunpack.c.l.b16 %v2706
        %v2747 = vunpack.c.l.b16 %v2707
        %v2748 = vunpack.c.l.b16 %v2708
        %v2749 = vunpack.c.l.b16 %v2709
        %v2750 = vunpack.c.l.b16 %v2710
        %v2751 = vunpack.c.l.b16 %v2711
        %v2752 = vunpack.c.l.b16 %v2712
        %v2753 = vunpack.c.l.b16 %v2713
        %v2754 = vunpack.c.l.b16 %v2714
        %v2755 = vunpack.c.l.b16 %v2715
        %v2756 = vunpack.c.l.b16 %v2716
        %v2757 = vpack.c.b16 %v2742, %v2741
        %v2758 = vpack.c.b16 %v2744, %v2743
        %v2759 = vpack.c.b16 %v2746, %v2745
        %v2760 = vpack.c.b16 %v2748, %v2747
        %v2761 = vpack.c.b16 %v2750, %v2749
        %v2762 = vpack.c.b16 %v2752, %v2751
        %v2763 = vpack.c.b16 %v2754, %v2753
        %v2764 = vpack.c.b16 %v2756, %v2755
        %2773 = vmatprep.subr.bf16.mxu0 0
        %2774 = vmatpush1.bf16.msra.mxu0 %v2757
        %2775 = vmatprep.subr.bf16.mxu0 0
        %2776 = vmatpush1.bf16.msra.mxu0 %v2758
        %2777 = vmatprep.subr.bf16.mxu0 0
        %2778 = vmatpush1.bf16.msra.mxu0 %v2759
        %2779 = vmatprep.subr.bf16.mxu0 0
        %2780 = vmatpush1.bf16.msra.mxu0 %v2760
        %2781 = vmatprep.subr.bf16.mxu0 0
        %2782 = vmatpush1.bf16.msra.mxu0 %v2761
        %2783 = vmatprep.subr.bf16.mxu0 0
        %2784 = vmatpush1.bf16.msra.mxu0 %v2762
        %2785 = vmatprep.subr.bf16.mxu0 0
        %2786 = vmatpush1.bf16.msra.mxu0 %v2763
        %2787 = vmatprep.subr.bf16.mxu0 0
        %2788 = vmatpush1.bf16.msra.mxu0 %v2764
        %2789 = vmatprep.subr.bf16.mxu0 0
        %2790 = vmatpush1.bf16.msra.mxu0 0
        %2791 = vmatprep.subr.bf16.mxu0 0
        %2792 = vmatpush1.bf16.msra.mxu0 0
        %2793 = vmatprep.subr.bf16.mxu0 0
        %2794 = vmatpush1.bf16.msra.mxu0 0
        %2795 = vmatprep.subr.bf16.mxu0 0
        %2796 = vmatpush1.bf16.msra.mxu0 0
        %2797 = vmatprep.subr.bf16.mxu0 0
        %2798 = vmatpush1.bf16.msra.mxu0 0
        %2799 = vmatprep.subr.bf16.mxu0 0
        %2800 = vmatpush1.bf16.msra.mxu0 0
        %2801 = vmatprep.subr.bf16.mxu0 0
        %2802 = vmatpush1.bf16.msra.mxu0 0
        %2803 = vmatprep.subr.bf16.mxu0 0
        %2804 = vmatpush1.bf16.msra.mxu0 0
        %2805 = vmatprep.mubr.bf16.mxu0 0
        %2806 = vmatmul.mubr.bf16.gmra.mrb[0].mxu0 %v2699
        %v2807 = vpop.f32.mrb[0].mxu0
        %v2808 = vadd.f32 %v2723, %v2807
        %v2809 = vpop.f32.mrb[0].mxu0
        %v2810 = vpop.f32.mrb[0].mxu0
        %v2811 = vpop.f32.mrb[0].mxu0
        %2812 = vdwg.mxu0
        %v2813 = vadd.f32 %v2575, %v2808
        %s2814 = scalar_lea.vmem %s14, 1
        %v2815 = vld [vmem:[%s2814] sm:$0x1]
        %s2816 = scalar_lea.vmem %s15, 1
        %v2817 = vld [vmem:[%s2816] sm:$0x1]
        %v2818 = vmul.f32 %v2813, %v535
        %2819 = vadd.xlane.f32.xlu0 %v2818
        %v2820 = vpop.xlane.xlu0 %2819
        %v2821 = vmul.f32 %v2820, 0.03125
        %v2822 = vsub.f32 %v2813, %v2821
        %v2823 = vmul.f32 %v2822, %v535
        %v2824 = vmul.f32 %v2823, %v2823
        %2825 = vadd.xlane.f32.xlu0 %v2824
        %v2826 = vpop.xlane.xlu0 %2825
        %v2827 = vmul.f32 %v2826, 0.03125
        %v2828 = vadd.f32 %v2827, 1e-05
        %v2829 = vrsqrt.pop %v2828
        %v2830 = vmul.f32 %v2823, %v2829
        %v2832 = vlaneseq
        %v2833 = vshrl.u32 %v2832, 7
        %v2834 = vsub.s32 0, %v2833
        %v2835 = vrot.slane %v2815, %v2834
        %v2837 = vmul.f32 %v2830, %v2835
        %v2839 = vlaneseq
        %v2840 = vshrl.u32 %v2839, 7
        %v2841 = vsub.s32 0, %v2840
        %v2842 = vrot.slane %v2817, %v2841
        %v2844 = vadd.f32 %v2837, %v2842
        %v2846 = vsel %vm884, %v536, 0
        %2848 = vmatprep.subr.mxu0 0.0
        %2849 = vmatpush1.msra.mxu0 %v2844
        %2850 = vmatprep.subr.mxu0 0.0
        %2851 = vmatpush1.msra.mxu0 0.0
        %2852 = vmatprep.subr.mxu0 0.0
        %2853 = vmatpush1.msra.mxu0 0.0
        %2854 = vmatprep.subr.mxu0 0.0
        %2855 = vmatpush1.msra.mxu0 0.0
        %2856 = vmatprep.subr.mxu0 0.0
        %2857 = vmatpush1.msra.mxu0 0.0
        %2858 = vmatprep.subr.mxu0 0.0
        %2859 = vmatpush1.msra.mxu0 0.0
        %2860 = vmatprep.subr.mxu0 0.0
        %2861 = vmatpush1.msra.mxu0 0.0
        %2862 = vmatprep.subr.mxu0 0.0
        %2863 = vmatpush1.msra.mxu0 0.0
        %2864 = vmatprep.subr.mxu0 0.0
        %2865 = vmatpush1.msra.mxu0 0.0
        %2866 = vmatprep.subr.mxu0 0.0
        %2867 = vmatpush1.msra.mxu0 0.0
        %2868 = vmatprep.subr.mxu0 0.0
        %2869 = vmatpush1.msra.mxu0 0.0
        %2870 = vmatprep.subr.mxu0 0.0
        %2871 = vmatpush1.msra.mxu0 0.0
        %2872 = vmatprep.subr.mxu0 0.0
        %2873 = vmatpush1.msra.mxu0 0.0
        %2874 = vmatprep.subr.mxu0 0.0
        %2875 = vmatpush1.msra.mxu0 0.0
        %2876 = vmatprep.subr.mxu0 0.0
        %2877 = vmatpush1.msra.mxu0 0.0
        %2878 = vmatprep.subr.mxu0 0.0
        %2879 = vmatpush1.msra.mxu0 0.0
        %2880 = vmatprep.subr.mxu0 0.0
        %2881 = vmatpush1.msra.mxu0 0.0
        %2882 = vmatprep.subr.mxu0 0.0
        %2883 = vmatpush1.msra.mxu0 0.0
        %2884 = vmatprep.subr.mxu0 0.0
        %2885 = vmatpush1.msra.mxu0 0.0
        %2886 = vmatprep.subr.mxu0 0.0
        %2887 = vmatpush1.msra.mxu0 0.0
        %2888 = vmatprep.subr.mxu0 0.0
        %2889 = vmatpush1.msra.mxu0 0.0
        %2890 = vmatprep.subr.mxu0 0.0
        %2891 = vmatpush1.msra.mxu0 0.0
        %2892 = vmatprep.subr.mxu0 0.0
        %2893 = vmatpush1.msra.mxu0 0.0
        %2894 = vmatprep.subr.mxu0 0.0
        %2895 = vmatpush1.msra.mxu0 0.0
        %2896 = vmatprep.subr.mxu0 0.0
        %2897 = vmatpush1.msra.mxu0 0.0
        %2898 = vmatprep.subr.mxu0 0.0
        %2899 = vmatpush1.msra.mxu0 0.0
        %2900 = vmatprep.subr.mxu0 0.0
        %2901 = vmatpush1.msra.mxu0 0.0
        %2902 = vmatprep.subr.mxu0 0.0
        %2903 = vmatpush1.msra.mxu0 0.0
        %2904 = vmatprep.subr.mxu0 0.0
        %2905 = vmatpush1.msra.mxu0 0.0
        %2906 = vmatprep.subr.mxu0 0.0
        %2907 = vmatpush1.msra.mxu0 0.0
        %2908 = vmatprep.subr.mxu0 0.0
        %2909 = vmatpush1.msra.mxu0 0.0
        %2910 = vmatprep.subr.mxu0 0.0
        %2911 = vmatpush1.msra.mxu0 0.0
        %2912 = vmatprep.mubr.f32.mxu0 0.0
        %2913 = vmatmul.mubr.f32.gmra.mrb[0].mxu0 %v2846
        %v2914 = vpop.f32.mrb[0].mxu0
        %v2915 = vadd.f32 0.0, %v2914
        %v2916 = vpop.f32.mrb[0].mxu0
        %2917 = vdwg.mxu0
        %v2918 = vmul.f32 %v2915, %v2915
        %vm2919 = vcmask 1040384
        %v2920 = vsel %vm2919, %v2918, 0.0
        %2921 = vadd.xlane.f32.xlu0 %v2920
        %v2922 = vpop.xlane.xlu0 %2921
        %v2923 = vrsqrt.pop %v2922
        %v2924 = vmul.f32 %v2922, %v2923
        %vm2925 = vcmp.eq.f32.partialorder %v2922, inf
        %v2926 = vsel %vm2925, %v2922, %v2924
        %vm2927 = vcmp.eq.f32.partialorder %v2922, 0.0
        %v2928 = vand.u32 %v2922, 2147483648
        %v2929 = vsel %vm2927, %v2928, %v2926
        %v2930 = vmax.f32 %v2929, 1e-12
        %v2931 = vrcp.pop %v2930
        %v2932 = vmul.f32 %v2915, %v2931
        %2933 = vst [vmem:[%s522] sm:$0x1] %v2932
        %s2934 = sand.u32 %s384, 1
        %s2935 = scalar_lea.sflag [#allocation3], %s2934
        %s2936 = sand.u32 %s384, 1
        %s2937 = scalar_lea.vmem [#allocation2], %s2936
        // Predicated region
        $region85: #{text_encoder_forward.1} parent=83 // pred_check
          %p2938 = pneg %p394
        $region86: #{text_encoder_forward.1} parent=83 // pred_check_branch
          %2940 = sbr.rel (%p2938) target = $region88
        $region87: #{text_encoder_forward.1} parent=83 // pred_region
          %s2942 = ssub.s32 16, 16
          %2943 = vsyncadd %s2935, %s2942
          %s2944 = smul.addr %s30, 16
          %s2945 = scalar_lea.hbm %s16, %s2944
          %s2947 = sshll.u32 %s2937, 4
          %s2948 = int_to_ptr.vmem [resolvable:$true] %s2947
          %2950 = dma.vmem_to_hbm [thread:$0]  %s2948, 16, %s2945, %s2935
        $region88: #{text_encoder_forward.1} parent=83 // pred_fallthru
          _
      $region84: #{text_encoder_forward.1} parent=5 // pred_fallthru
        _
      %p2951 = scmp.le.s32.totalorder 2, %s25
      // Predicated region
      $region89: #{text_encoder_forward.1} parent=5 // pred_check
        %p2952 = pneg %p2951
      $region90: #{text_encoder_forward.1} parent=5 // pred_check_branch
        %2954 = sbr.rel (%p2952) target = $region92
      $region91: #{text_encoder_forward.1} parent=5 // pred_region
        %s2955 = ssub.s32 %s25, 2
        // Predicated region
        $region93: #{text_encoder_forward.1} parent=91 // pred_check
          %p2956 = pneg %p400
        $region94: #{text_encoder_forward.1} parent=91 // pred_check_branch
          %2958 = sbr.rel (%p2956) target = $region96
        $region95: #{text_encoder_forward.1} parent=91 // pred_region
          %s2959 = sand.u32 %s385, 1
          %s2960 = scalar_lea.sflag [#allocation3], %s2959
          %s2961 = sand.u32 %s385, 1
          %s2962 = scalar_lea.vmem [#allocation2], %s2961
          %2963 = dma.done %s2960, 16
        $region96: #{text_encoder_forward.1} parent=91 // pred_fallthru
          _
      $region92: #{text_encoder_forward.1} parent=5 // pred_fallthru
        _
    $region6: #{text_encoder_forward.1} parent=1 // loop_footer
      %s29 = sadd.s32 1, %s25
    $region7: #{text_encoder_forward.1} parent=1 // loop_footer_branch
      %24 = sbr.rel target = $region3
    $region8: #{text_encoder_forward.1} parent=1 // loop_exit
      _
    %2964 = vsyncpa [#allocation3], 1
    %s2965 = scalar_lea.sflag [#allocation3], 1
    %2966 = vsyncpa %s2965, 1

</llo_original>
